<compile_context>
chip_gen: v5e
topology: v5e:2x2
jax: 0.10.0
libtpu: 0.0.40
codegen_flags: <defaults>
</compile_context>

<pallas_src>
import functools

import jax
import jax.numpy as jnp
from jax.experimental import pallas as pl
from jax.experimental.pallas import tpu as pltpu


_EPS = 1e-5
_COMPILER_PARAMS = pltpu.CompilerParams(
    dimension_semantics=("parallel",),
    vmem_limit_bytes=32 * 1024 * 1024,
)


# ---------------------------------------------------------------------------
# Fused Pallas kernels: matmul (MXU, bf16 in / f32 acc) + epilogue
# ---------------------------------------------------------------------------

def _fused_instance_norm(y, gamma_t, beta_t, *, groups, eps, relu):
    """Instance norm of y:(R, groups*C) where column g*C + c is channel c.

    Statistics are pooled over rows and groups (for the sub-pixel transposed
    conv this equals per-channel stats over the full upsampled image).
    gamma_t / beta_t are already tiled to (1, groups*C).
    """
    R, Ct = y.shape
    C = Ct // groups
    cnt = float(R * groups)
    s1 = jnp.sum(y, axis=0, keepdims=True)                         # (1, Ct)
    mean_c = sum(s1[:, i * C:(i + 1) * C] for i in range(groups)) / cnt
    mean_t = (jnp.concatenate([mean_c] * groups, axis=-1)
              if groups > 1 else mean_c)
    cen = y - mean_t
    s2 = jnp.sum(cen * cen, axis=0, keepdims=True)                 # (1, Ct)
    var_c = sum(s2[:, i * C:(i + 1) * C] for i in range(groups)) / cnt
    var_t = (jnp.concatenate([var_c] * groups, axis=-1)
             if groups > 1 else var_c)
    out = cen * jax.lax.rsqrt(var_t + eps) * gamma_t + beta_t
    if relu:
        out = jnp.maximum(out, 0.0)
    return out


def _conv_in_kernel(a_ref, w_ref, g_ref, b_ref, o_ref, *, groups, relu, eps):
    # a_ref: (1, R, K) bf16 im2col block for one sample; w_ref: (K, Ct) bf16.
    y = jnp.dot(a_ref[0], w_ref[...], preferred_element_type=jnp.float32)
    o_ref[0] = _fused_instance_norm(y, g_ref[...], b_ref[...],
                                    groups=groups, eps=eps, relu=relu)


def _conv_in_add_kernel(a_ref, w_ref, g_ref, b_ref, s_ref, o_ref, *,
                        groups, eps):
    # Residual-block tail: conv -> IN -> + skip (no ReLU), all fused.
    y = jnp.dot(a_ref[0], w_ref[...], preferred_element_type=jnp.float32)
    o_ref[0] = s_ref[0] + _fused_instance_norm(
        y, g_ref[...], b_ref[...], groups=groups, eps=eps, relu=False)


def _conv_tanh_kernel(a_ref, w_ref, o_ref):
    # Last layer: conv -> tanh, fused.
    y = jnp.dot(a_ref[0], w_ref[...], preferred_element_type=jnp.float32)
    o_ref[0] = jnp.tanh(y)


# ---------------------------------------------------------------------------
# im2col glue (bf16) + pallas_call wrappers
# ---------------------------------------------------------------------------

def _im2col(x, KH, KW, stride, padding):
    """x: (N, H, W, C) f32 -> A: (N, OH*OW, KH*KW*C) bf16 (columns kh,kw,c)."""
    N, H, W, C = x.shape
    xp = jnp.pad(x, ((0, 0), (padding, padding), (padding, padding), (0, 0)))
    xp = xp.astype(jnp.bfloat16)
    OH = (H + 2 * padding - KH) // stride + 1
    OW = (W + 2 * padding - KW) // stride + 1
    cols = []
    for kh in range(KH):
        for kw in range(KW):
            cols.append(xp[:, kh:kh + stride * OH:stride,
                           kw:kw + stride * OW:stride, :])     # (N, OH, OW, C)
    A = jnp.stack(cols, axis=3).reshape(N, OH * OW, KH * KW * C)
    return A, OH, OW


def _conv_in_pallas(A, Wm, gamma_t, beta_t, *, groups, relu, skip=None,
                    eps=_EPS):
    """Fused (im2col-matmul + InstanceNorm [+ReLU] [+skip add]) per sample."""
    N, R, K = A.shape
    Ct = Wm.shape[1]
    A = A.astype(jnp.bfloat16)
    Wm = Wm.astype(jnp.bfloat16)
    g2 = gamma_t.reshape(1, Ct).astype(jnp.float32)
    b2 = beta_t.reshape(1, Ct).astype(jnp.float32)

    a_spec = pl.BlockSpec((1, R, K), lambda n: (n, 0, 0))
    w_spec = pl.BlockSpec((K, Ct), lambda n: (0, 0))
    v_spec = pl.BlockSpec((1, Ct), lambda n: (0, 0))
    o_spec = pl.BlockSpec((1, R, Ct), lambda n: (n, 0, 0))
    out_shape = jax.ShapeDtypeStruct((N, R, Ct), jnp.float32)

    if skip is None:
        return pl.pallas_call(
            functools.partial(_conv_in_kernel, groups=groups, relu=relu,
                              eps=eps),
            out_shape=out_shape,
            grid=(N,),
            in_specs=[a_spec, w_spec, v_spec, v_spec],
            out_specs=o_spec,
            compiler_params=_COMPILER_PARAMS,
        )(A, Wm, g2, b2)

    s_spec = pl.BlockSpec((1, R, Ct), lambda n: (n, 0, 0))
    return pl.pallas_call(
        functools.partial(_conv_in_add_kernel, groups=groups, eps=eps),
        out_shape=out_shape,
        grid=(N,),
        in_specs=[a_spec, w_spec, v_spec, v_spec, s_spec],
        out_specs=o_spec,
        compiler_params=_COMPILER_PARAMS,
    )(A, Wm, g2, b2, skip.astype(jnp.float32))


def conv2d_in(x, w_oihw, gamma, beta, *, stride, padding, relu=True,
              skip=None):
    """Conv2d(no bias) -> InstanceNorm2d(affine) [-> ReLU] [+ skip], fused."""
    N, H, W, _ = x.shape
    O, I, KH, KW = w_oihw.shape
    A, OH, OW = _im2col(x, KH, KW, stride, padding)
    Wm = jnp.transpose(w_oihw, (2, 3, 1, 0)).reshape(KH * KW * I, O)
    skip3 = None if skip is None else skip.reshape(N, OH * OW, O)
    out = _conv_in_pallas(A, Wm, gamma, beta, groups=1, relu=relu, skip=skip3)
    return out.reshape(N, OH, OW, O)


def conv_transpose2d_in_relu(x, w_iohw, gamma, beta):
    """ConvTranspose2d(k=4, s=2, p=1, no bias) -> IN -> ReLU, fused.

    Sub-pixel decomposition: a single 3x3 stride-1 conv over the pad-1 input
    producing 4*O channels (one 2x2-kernel phase per output-pixel parity),
    IN with phase-pooled statistics inside the kernel, then depth-to-space.
    """
    N, H, W, Cin = x.shape
    I, O, KH, KW = w_iohw.shape                       # (in, out, 4, 4)
    wt = jnp.transpose(w_iohw, (2, 3, 0, 1))          # (4, 4, Cin, O)

    # Combined weight: (3, 3, Cin, phase=4, O); phase = 2*row_parity+col_parity
    W9 = jnp.zeros((3, 3, Cin, 4, O), dtype=w_iohw.dtype)
    for r in (0, 1):
        for s in (0, 1):
            ph = 2 * r + s
            for a in (0, 1):
                for b in (0, 1):
                    dh, dw = r + a, s + b
                    kh = 2 * (1 - a) + (1 - r)
                    kw = 2 * (1 - b) + (1 - s)
                    W9 = W9.at[dh, dw, :, ph, :].set(wt[kh, kw])
    Wm = W9.reshape(9 * Cin, 4 * O)

    A, OH, OW = _im2col(x, 3, 3, 1, 1)                # OH=H, OW=W
    gamma_t = jnp.tile(gamma, 4)                      # column g*O + c -> chan c
    beta_t = jnp.tile(beta, 4)
    out = _conv_in_pallas(A, Wm, gamma_t, beta_t, groups=4, relu=True)

    # depth-to-space: (N, H*W, 4*O) -> (N, 2H, 2W, O)
    out = out.reshape(N, H, W, 2, 2, O)
    out = jnp.transpose(out, (0, 1, 3, 2, 4, 5)).reshape(N, 2 * H, 2 * W, O)
    return out


def conv2d_tanh(x, w_oihw, *, padding):
    """Final Conv2d(no bias) -> tanh, fused."""
    N, H, W, _ = x.shape
    O, I, KH, KW = w_oihw.shape
    A, OH, OW = _im2col(x, KH, KW, 1, padding)
    K = KH * KW * I
    Wm = jnp.transpose(w_oihw, (2, 3, 1, 0)).reshape(K, O).astype(jnp.bfloat16)
    out = pl.pallas_call(
        _conv_tanh_kernel,
        out_shape=jax.ShapeDtypeStruct((N, OH * OW, O), jnp.float32),
        grid=(N,),
        in_specs=[pl.BlockSpec((1, OH * OW, K), lambda n: (n, 0, 0)),
                  pl.BlockSpec((K, O), lambda n: (0, 0))],
        out_specs=pl.BlockSpec((1, OH * OW, O), lambda n: (n, 0, 0)),
        compiler_params=_COMPILER_PARAMS,
    )(A, Wm)
    return out.reshape(N, OH, OW, O)


# ---------------------------------------------------------------------------
# Generator: parameters + forward
# ---------------------------------------------------------------------------

def init_generator_params(key, conv_dim=8, c_dim=5, repeat_num=2):
    ks = iter(jax.random.split(key, 128))

    def convw(o, i, k):
        return 0.1 * jax.random.normal(next(ks), (o, i, k, k), dtype=jnp.float32)

    def inw(c):
        g = 1.0 + 0.1 * jax.random.normal(next(ks), (c,), dtype=jnp.float32)
        b = 0.1 * jax.random.normal(next(ks), (c,), dtype=jnp.float32)
        return g, b

    p = {}
    p['conv0_w'] = convw(conv_dim, 3 + c_dim, 7)
    p['in0'] = inw(conv_dim)
    curr = conv_dim

    p['down'] = []
    for _ in range(2):
        w = convw(curr * 2, curr, 4)
        g, b = inw(curr * 2)
        p['down'].append({'w': w, 'g': g, 'b': b})
        curr *= 2

    p['res'] = []
    for _ in range(repeat_num):
        w1 = convw(curr, curr, 3)
        g1, b1 = inw(curr)
        w2 = convw(curr, curr, 3)
        g2, b2 = inw(curr)
        p['res'].append({'w1': w1, 'g1': g1, 'b1': b1,
                         'w2': w2, 'g2': g2, 'b2': b2})

    p['up'] = []
    for _ in range(2):
        # ConvTranspose2d weight layout: (in_channels, out_channels, KH, KW)
        w = 0.1 * jax.random.normal(next(ks), (curr, curr // 2, 4, 4),
                                    dtype=jnp.float32)
        g, b = inw(curr // 2)
        p['up'].append({'w': w, 'g': g, 'b': b})
        curr //= 2

    p['last_w'] = convw(3, curr, 7)
    return p


def generator_forward(params, x_nchw, c):
    N, _, H, W = x_nchw.shape
    x = jnp.transpose(x_nchw, (0, 2, 3, 1)).astype(jnp.float32)   # NCHW -> NHWC
    cmap = jnp.broadcast_to(c[:, None, None, :].astype(jnp.float32),
                            (N, H, W, c.shape[-1]))               # c.view+repeat
    h = jnp.concatenate([x, cmap], axis=-1)                       # cat along C

    h = conv2d_in(h, params['conv0_w'], *params['in0'],
                  stride=1, padding=3, relu=True)

    for lyr in params['down']:
        h = conv2d_in(h, lyr['w'], lyr['g'], lyr['b'],
                      stride=2, padding=1, relu=True)

    for lyr in params['res']:
        r = conv2d_in(h, lyr['w1'], lyr['g1'], lyr['b1'],
                      stride=1, padding=1, relu=True)
        h = conv2d_in(r, lyr['w2'], lyr['g2'], lyr['b2'],
                      stride=1, padding=1, relu=False, skip=h)    # fused skip

    for lyr in params['up']:
        h = conv_transpose2d_in_relu(h, lyr['w'], lyr['g'], lyr['b'])

    h = conv2d_tanh(h, params['last_w'], padding=3)
    return jnp.transpose(h, (0, 3, 1, 2))                         # back to NCHW


# ---------------------------------------------------------------------------

if __name__ == "__main__":
    conv_dim, c_dim, repeat_num = 8, 5, 2
    key = jax.random.PRNGKey(0)
    kp, kx, kc = jax.random.split(key, 3)

    params = init_generator_params(kp, conv_dim=conv_dim, c_dim=c_dim,
                                   repeat_num=repeat_num)
    x = jax.random.normal(kx, (2, 3, 16, 16), dtype=jnp.float32)
    c = jax.random.normal(kc, (2, c_dim), dtype=jnp.float32)

    out = jax.jit(generator_forward)(params, x, c)
    out = jax.block_until_ready(out)

    assert out.shape == (2, 3, 16, 16), out.shape
    assert bool(jnp.all(jnp.isfinite(out)))
    assert bool(jnp.all(jnp.abs(out) <= 1.0))   # tanh output range
    print("KERNEL_OK")
</pallas_src>

<mosaic_0001>
module attributes {stable_mosaic.version = 11 : i64} {
  func.func @_conv_in_kernel(%arg0: i32, %arg1: memref<1x256x392xbf16, #tpu.memory_space<vmem>>, %arg2: memref<392x8xbf16, #tpu.memory_space<vmem>>, %arg3: memref<1x8xf32, #tpu.memory_space<vmem>>, %arg4: memref<1x8xf32, #tpu.memory_space<vmem>>, %arg5: memref<1x256x8xf32, #tpu.memory_space<vmem>>) attributes {dimension_semantics = [#tpu.dimension_semantics<parallel>], iteration_bounds = array<i64: 2>, scalar_prefetch = 0 : i64, scratch_operands = 0 : i64, tpu.core_type = #tpu.core_type<tc>, window_params = [{transform_indices = @transform_0, window_bounds = array<i64: 1, 256, 392>}, {pipeline_mode = #tpu.pipeline_mode<synchronous>, transform_indices = @transform_1, window_bounds = array<i64: 392, 8>}, {pipeline_mode = #tpu.pipeline_mode<synchronous>, transform_indices = @transform_2, window_bounds = array<i64: 1, 8>}, {pipeline_mode = #tpu.pipeline_mode<synchronous>, transform_indices = @transform_3, window_bounds = array<i64: 1, 8>}, {transform_indices = @transform_4, window_bounds = array<i64: 1, 256, 8>}]} {
    %c0 = arith.constant 0 : index
    %c0_0 = arith.constant 0 : index
    %c0_1 = arith.constant 0 : index
    %0 = vector.load %arg1[%c0, %c0_0, %c0_1] : memref<1x256x392xbf16, #tpu.memory_space<vmem>>, vector<1x256x392xbf16>
    %1 = vector.shape_cast %0 : vector<1x256x392xbf16> to vector<256x392xbf16>
    %c0_2 = arith.constant 0 : index
    %c0_3 = arith.constant 0 : index
    %2 = vector.load %arg2[%c0_2, %c0_3] : memref<392x8xbf16, #tpu.memory_space<vmem>>, vector<392x8xbf16>
    %cst = arith.constant dense<0.000000e+00> : vector<256x8xf32>
    %3 = tpu.matmul %1, %2, %cst {dimension_numbers = #tpu.dot_dimension_numbers<[1], [0], [0], [1], [0, 0, 1, 1], [], []>} : vector<256x392xbf16>, vector<392x8xbf16>, vector<256x8xf32> -> vector<256x8xf32>
    %c0_4 = arith.constant 0 : index
    %c0_5 = arith.constant 0 : index
    %4 = vector.load %arg3[%c0_4, %c0_5] : memref<1x8xf32, #tpu.memory_space<vmem>>, vector<1x8xf32>
    %c0_6 = arith.constant 0 : index
    %c0_7 = arith.constant 0 : index
    %5 = vector.load %arg4[%c0_6, %c0_7] : memref<1x8xf32, #tpu.memory_space<vmem>>, vector<1x8xf32>
    %cst_8 = arith.constant dense<0.000000e+00> : vector<8xf32>
    %6 = vector.multi_reduction <add>, %3, %cst_8 [0] : vector<256x8xf32> to vector<8xf32>
    %7 = vector.shape_cast %6 : vector<8xf32> to vector<1x8xf32>
    %cst_9 = arith.constant 0.000000e+00 : f32
    %8 = vector.broadcast %cst_9 : f32 to vector<1x8xf32>
    %9 = arith.addf %8, %7 : vector<1x8xf32>
    %cst_10 = arith.constant 2.560000e+02 : f32
    %10 = vector.broadcast %cst_10 : f32 to vector<1x8xf32>
    %11 = arith.divf %9, %10 : vector<1x8xf32>
    %12 = vector.broadcast %11 : vector<1x8xf32> to vector<256x8xf32>
    %13 = arith.subf %3, %12 : vector<256x8xf32>
    %14 = arith.mulf %13, %13 : vector<256x8xf32>
    %cst_11 = arith.constant dense<0.000000e+00> : vector<8xf32>
    %15 = vector.multi_reduction <add>, %14, %cst_11 [0] : vector<256x8xf32> to vector<8xf32>
    %16 = vector.shape_cast %15 : vector<8xf32> to vector<1x8xf32>
    %cst_12 = arith.constant 0.000000e+00 : f32
    %17 = vector.broadcast %cst_12 : f32 to vector<1x8xf32>
    %18 = arith.addf %17, %16 : vector<1x8xf32>
    %cst_13 = arith.constant 2.560000e+02 : f32
    %19 = vector.broadcast %cst_13 : f32 to vector<1x8xf32>
    %20 = arith.divf %18, %19 : vector<1x8xf32>
    %cst_14 = arith.constant 9.99999974E-6 : f32
    %21 = vector.broadcast %cst_14 : f32 to vector<1x8xf32>
    %22 = arith.addf %20, %21 : vector<1x8xf32>
    %23 = math.rsqrt %22 : vector<1x8xf32>
    %24 = vector.broadcast %23 : vector<1x8xf32> to vector<256x8xf32>
    %25 = arith.mulf %13, %24 : vector<256x8xf32>
    %26 = vector.broadcast %4 : vector<1x8xf32> to vector<256x8xf32>
    %27 = arith.mulf %25, %26 : vector<256x8xf32>
    %28 = vector.broadcast %5 : vector<1x8xf32> to vector<256x8xf32>
    %29 = arith.addf %27, %28 : vector<256x8xf32>
    %cst_15 = arith.constant 0.000000e+00 : f32
    %30 = vector.broadcast %cst_15 : f32 to vector<256x8xf32>
    %31 = arith.maximumf %29, %30 : vector<256x8xf32>
    %c0_16 = arith.constant 0 : index
    %c0_17 = arith.constant 0 : index
    %c0_18 = arith.constant 0 : index
    %32 = vector.load %arg5[%c0_16, %c0_17, %c0_18] : memref<1x256x8xf32, #tpu.memory_space<vmem>>, vector<1x256x8xf32>
    %33 = vector.shape_cast %32 : vector<1x256x8xf32> to vector<256x8xf32>
    %34 = vector.shape_cast %31 : vector<256x8xf32> to vector<1x256x8xf32>
    tpu.vector_store %arg5[%c0_16, %c0_17, %c0_18], %34 {strides = array<i32>} : memref<1x256x8xf32, #tpu.memory_space<vmem>>, vector<1x256x8xf32>,
    return
  }
  func.func @transform_0(%arg0: i32) -> (i32, i32, i32) {
    %c0_i32 = arith.constant 0 : i32
    %c0_i32_0 = arith.constant 0 : i32
    %c0_i32_1 = arith.constant 0 : i32
    return %arg0, %c0_i32, %c0_i32_0 : i32, i32, i32
  }
  func.func @transform_1(%arg0: i32) -> (i32, i32) {
    %c0_i32 = arith.constant 0 : i32
    %c0_i32_0 = arith.constant 0 : i32
    %c0_i32_1 = arith.constant 0 : i32
    return %c0_i32, %c0_i32_0 : i32, i32
  }
  func.func @transform_2(%arg0: i32) -> (i32, i32) {
    %c0_i32 = arith.constant 0 : i32
    %c0_i32_0 = arith.constant 0 : i32
    %c0_i32_1 = arith.constant 0 : i32
    return %c0_i32, %c0_i32_0 : i32, i32
  }
  func.func @transform_3(%arg0: i32) -> (i32, i32) {
    %c0_i32 = arith.constant 0 : i32
    %c0_i32_0 = arith.constant 0 : i32
    %c0_i32_1 = arith.constant 0 : i32
    return %c0_i32, %c0_i32_0 : i32, i32
  }
  func.func @transform_4(%arg0: i32) -> (i32, i32, i32) {
    %c0_i32 = arith.constant 0 : i32
    %c0_i32_0 = arith.constant 0 : i32
    %c0_i32_1 = arith.constant 0 : i32
    return %arg0, %c0_i32, %c0_i32_0 : i32, i32, i32
  }
}

module attributes {stable_mosaic.version = 11 : i64} {
  func.func @_conv_in_kernel(%arg0: i32, %arg1: memref<1x64x128xbf16, #tpu.memory_space<vmem>>, %arg2: memref<128x16xbf16, #tpu.memory_space<vmem>>, %arg3: memref<1x16xf32, #tpu.memory_space<vmem>>, %arg4: memref<1x16xf32, #tpu.memory_space<vmem>>, %arg5: memref<1x64x16xf32, #tpu.memory_space<vmem>>) attributes {dimension_semantics = [#tpu.dimension_semantics<parallel>], iteration_bounds = array<i64: 2>, scalar_prefetch = 0 : i64, scratch_operands = 0 : i64, tpu.core_type = #tpu.core_type<tc>, window_params = [{transform_indices = @transform_0, window_bounds = array<i64: 1, 64, 128>}, {pipeline_mode = #tpu.pipeline_mode<synchronous>, transform_indices = @transform_1, window_bounds = array<i64: 128, 16>}, {pipeline_mode = #tpu.pipeline_mode<synchronous>, transform_indices = @transform_2, window_bounds = array<i64: 1, 16>}, {pipeline_mode = #tpu.pipeline_mode<synchronous>, transform_indices = @transform_3, window_bounds = array<i64: 1, 16>}, {transform_indices = @transform_4, window_bounds = array<i64: 1, 64, 16>}]} {
    %c0 = arith.constant 0 : index
    %c0_0 = arith.constant 0 : index
    %c0_1 = arith.constant 0 : index
    %0 = vector.load %arg1[%c0, %c0_0, %c0_1] : memref<1x64x128xbf16, #tpu.memory_space<vmem>>, vector<1x64x128xbf16>
    %1 = vector.shape_cast %0 : vector<1x64x128xbf16> to vector<64x128xbf16>
    %c0_2 = arith.constant 0 : index
    %c0_3 = arith.constant 0 : index
    %2 = vector.load %arg2[%c0_2, %c0_3] : memref<128x16xbf16, #tpu.memory_space<vmem>>, vector<128x16xbf16>
    %cst = arith.constant dense<0.000000e+00> : vector<64x16xf32>
    %3 = tpu.matmul %1, %2, %cst {dimension_numbers = #tpu.dot_dimension_numbers<[1], [0], [0], [1], [0, 0, 1, 1], [], []>} : vector<64x128xbf16>, vector<128x16xbf16>, vector<64x16xf32> -> vector<64x16xf32>
    %c0_4 = arith.constant 0 : index
    %c0_5 = arith.constant 0 : index
    %4 = vector.load %arg3[%c0_4, %c0_5] : memref<1x16xf32, #tpu.memory_space<vmem>>, vector<1x16xf32>
    %c0_6 = arith.constant 0 : index
    %c0_7 = arith.constant 0 : index
    %5 = vector.load %arg4[%c0_6, %c0_7] : memref<1x16xf32, #tpu.memory_space<vmem>>, vector<1x16xf32>
    %cst_8 = arith.constant dense<0.000000e+00> : vector<16xf32>
    %6 = vector.multi_reduction <add>, %3, %cst_8 [0] : vector<64x16xf32> to vector<16xf32>
    %7 = vector.shape_cast %6 : vector<16xf32> to vector<1x16xf32>
    %cst_9 = arith.constant 0.000000e+00 : f32
    %8 = vector.broadcast %cst_9 : f32 to vector<1x16xf32>
    %9 = arith.addf %8, %7 : vector<1x16xf32>
    %cst_10 = arith.constant 6.400000e+01 : f32
    %10 = vector.broadcast %cst_10 : f32 to vector<1x16xf32>
    %11 = arith.divf %9, %10 : vector<1x16xf32>
    %12 = vector.broadcast %11 : vector<1x16xf32> to vector<64x16xf32>
    %13 = arith.subf %3, %12 : vector<64x16xf32>
    %14 = arith.mulf %13, %13 : vector<64x16xf32>
    %cst_11 = arith.constant dense<0.000000e+00> : vector<16xf32>
    %15 = vector.multi_reduction <add>, %14, %cst_11 [0] : vector<64x16xf32> to vector<16xf32>
    %16 = vector.shape_cast %15 : vector<16xf32> to vector<1x16xf32>
    %cst_12 = arith.constant 0.000000e+00 : f32
    %17 = vector.broadcast %cst_12 : f32 to vector<1x16xf32>
    %18 = arith.addf %17, %16 : vector<1x16xf32>
    %cst_13 = arith.constant 6.400000e+01 : f32
    %19 = vector.broadcast %cst_13 : f32 to vector<1x16xf32>
    %20 = arith.divf %18, %19 : vector<1x16xf32>
    %cst_14 = arith.constant 9.99999974E-6 : f32
    %21 = vector.broadcast %cst_14 : f32 to vector<1x16xf32>
    %22 = arith.addf %20, %21 : vector<1x16xf32>
    %23 = math.rsqrt %22 : vector<1x16xf32>
    %24 = vector.broadcast %23 : vector<1x16xf32> to vector<64x16xf32>
    %25 = arith.mulf %13, %24 : vector<64x16xf32>
    %26 = vector.broadcast %4 : vector<1x16xf32> to vector<64x16xf32>
    %27 = arith.mulf %25, %26 : vector<64x16xf32>
    %28 = vector.broadcast %5 : vector<1x16xf32> to vector<64x16xf32>
    %29 = arith.addf %27, %28 : vector<64x16xf32>
    %cst_15 = arith.constant 0.000000e+00 : f32
    %30 = vector.broadcast %cst_15 : f32 to vector<64x16xf32>
    %31 = arith.maximumf %29, %30 : vector<64x16xf32>
    %c0_16 = arith.constant 0 : index
    %c0_17 = arith.constant 0 : index
    %c0_18 = arith.constant 0 : index
    %32 = vector.load %arg5[%c0_16, %c0_17, %c0_18] : memref<1x64x16xf32, #tpu.memory_space<vmem>>, vector<1x64x16xf32>
    %33 = vector.shape_cast %32 : vector<1x64x16xf32> to vector<64x16xf32>
    %34 = vector.shape_cast %31 : vector<64x16xf32> to vector<1x64x16xf32>
    tpu.vector_store %arg5[%c0_16, %c0_17, %c0_18], %34 {strides = array<i32>} : memref<1x64x16xf32, #tpu.memory_space<vmem>>, vector<1x64x16xf32>,
    return
  }
  func.func @transform_0(%arg0: i32) -> (i32, i32, i32) {
    %c0_i32 = arith.constant 0 : i32
    %c0_i32_0 = arith.constant 0 : i32
    %c0_i32_1 = arith.constant 0 : i32
    return %arg0, %c0_i32, %c0_i32_0 : i32, i32, i32
  }
  func.func @transform_1(%arg0: i32) -> (i32, i32) {
    %c0_i32 = arith.constant 0 : i32
    %c0_i32_0 = arith.constant 0 : i32
    %c0_i32_1 = arith.constant 0 : i32
    return %c0_i32, %c0_i32_0 : i32, i32
  }
  func.func @transform_2(%arg0: i32) -> (i32, i32) {
    %c0_i32 = arith.constant 0 : i32
    %c0_i32_0 = arith.constant 0 : i32
    %c0_i32_1 = arith.constant 0 : i32
    return %c0_i32, %c0_i32_0 : i32, i32
  }
  func.func @transform_3(%arg0: i32) -> (i32, i32) {
    %c0_i32 = arith.constant 0 : i32
    %c0_i32_0 = arith.constant 0 : i32
    %c0_i32_1 = arith.constant 0 : i32
    return %c0_i32, %c0_i32_0 : i32, i32
  }
  func.func @transform_4(%arg0: i32) -> (i32, i32, i32) {
    %c0_i32 = arith.constant 0 : i32
    %c0_i32_0 = arith.constant 0 : i32
    %c0_i32_1 = arith.constant 0 : i32
    return %arg0, %c0_i32, %c0_i32_0 : i32, i32, i32
  }
}

module attributes {stable_mosaic.version = 11 : i64} {
  func.func @_conv_in_kernel(%arg0: i32, %arg1: memref<1x16x256xbf16, #tpu.memory_space<vmem>>, %arg2: memref<256x32xbf16, #tpu.memory_space<vmem>>, %arg3: memref<1x32xf32, #tpu.memory_space<vmem>>, %arg4: memref<1x32xf32, #tpu.memory_space<vmem>>, %arg5: memref<1x16x32xf32, #tpu.memory_space<vmem>>) attributes {dimension_semantics = [#tpu.dimension_semantics<parallel>], iteration_bounds = array<i64: 2>, scalar_prefetch = 0 : i64, scratch_operands = 0 : i64, tpu.core_type = #tpu.core_type<tc>, window_params = [{transform_indices = @transform_0, window_bounds = array<i64: 1, 16, 256>}, {pipeline_mode = #tpu.pipeline_mode<synchronous>, transform_indices = @transform_1, window_bounds = array<i64: 256, 32>}, {pipeline_mode = #tpu.pipeline_mode<synchronous>, transform_indices = @transform_2, window_bounds = array<i64: 1, 32>}, {pipeline_mode = #tpu.pipeline_mode<synchronous>, transform_indices = @transform_3, window_bounds = array<i64: 1, 32>}, {transform_indices = @transform_4, window_bounds = array<i64: 1, 16, 32>}]} {
    %c0 = arith.constant 0 : index
    %c0_0 = arith.constant 0 : index
    %c0_1 = arith.constant 0 : index
    %0 = vector.load %arg1[%c0, %c0_0, %c0_1] : memref<1x16x256xbf16, #tpu.memory_space<vmem>>, vector<1x16x256xbf16>
    %1 = vector.shape_cast %0 : vector<1x16x256xbf16> to vector<16x256xbf16>
    %c0_2 = arith.constant 0 : index
    %c0_3 = arith.constant 0 : index
    %2 = vector.load %arg2[%c0_2, %c0_3] : memref<256x32xbf16, #tpu.memory_space<vmem>>, vector<256x32xbf16>
    %cst = arith.constant dense<0.000000e+00> : vector<16x32xf32>
    %3 = tpu.matmul %1, %2, %cst {dimension_numbers = #tpu.dot_dimension_numbers<[1], [0], [0], [1], [0, 0, 1, 1], [], []>} : vector<16x256xbf16>, vector<256x32xbf16>, vector<16x32xf32> -> vector<16x32xf32>
    %c0_4 = arith.constant 0 : index
    %c0_5 = arith.constant 0 : index
    %4 = vector.load %arg3[%c0_4, %c0_5] : memref<1x32xf32, #tpu.memory_space<vmem>>, vector<1x32xf32>
    %c0_6 = arith.constant 0 : index
    %c0_7 = arith.constant 0 : index
    %5 = vector.load %arg4[%c0_6, %c0_7] : memref<1x32xf32, #tpu.memory_space<vmem>>, vector<1x32xf32>
    %cst_8 = arith.constant dense<0.000000e+00> : vector<32xf32>
    %6 = vector.multi_reduction <add>, %3, %cst_8 [0] : vector<16x32xf32> to vector<32xf32>
    %7 = vector.shape_cast %6 : vector<32xf32> to vector<1x32xf32>
    %cst_9 = arith.constant 0.000000e+00 : f32
    %8 = vector.broadcast %cst_9 : f32 to vector<1x32xf32>
    %9 = arith.addf %8, %7 : vector<1x32xf32>
    %cst_10 = arith.constant 1.600000e+01 : f32
    %10 = vector.broadcast %cst_10 : f32 to vector<1x32xf32>
    %11 = arith.divf %9, %10 : vector<1x32xf32>
    %12 = vector.broadcast %11 : vector<1x32xf32> to vector<16x32xf32>
    %13 = arith.subf %3, %12 : vector<16x32xf32>
    %14 = arith.mulf %13, %13 : vector<16x32xf32>
    %cst_11 = arith.constant dense<0.000000e+00> : vector<32xf32>
    %15 = vector.multi_reduction <add>, %14, %cst_11 [0] : vector<16x32xf32> to vector<32xf32>
    %16 = vector.shape_cast %15 : vector<32xf32> to vector<1x32xf32>
    %cst_12 = arith.constant 0.000000e+00 : f32
    %17 = vector.broadcast %cst_12 : f32 to vector<1x32xf32>
    %18 = arith.addf %17, %16 : vector<1x32xf32>
    %cst_13 = arith.constant 1.600000e+01 : f32
    %19 = vector.broadcast %cst_13 : f32 to vector<1x32xf32>
    %20 = arith.divf %18, %19 : vector<1x32xf32>
    %cst_14 = arith.constant 9.99999974E-6 : f32
    %21 = vector.broadcast %cst_14 : f32 to vector<1x32xf32>
    %22 = arith.addf %20, %21 : vector<1x32xf32>
    %23 = math.rsqrt %22 : vector<1x32xf32>
    %24 = vector.broadcast %23 : vector<1x32xf32> to vector<16x32xf32>
    %25 = arith.mulf %13, %24 : vector<16x32xf32>
    %26 = vector.broadcast %4 : vector<1x32xf32> to vector<16x32xf32>
    %27 = arith.mulf %25, %26 : vector<16x32xf32>
    %28 = vector.broadcast %5 : vector<1x32xf32> to vector<16x32xf32>
    %29 = arith.addf %27, %28 : vector<16x32xf32>
    %cst_15 = arith.constant 0.000000e+00 : f32
    %30 = vector.broadcast %cst_15 : f32 to vector<16x32xf32>
    %31 = arith.maximumf %29, %30 : vector<16x32xf32>
    %c0_16 = arith.constant 0 : index
    %c0_17 = arith.constant 0 : index
    %c0_18 = arith.constant 0 : index
    %32 = vector.load %arg5[%c0_16, %c0_17, %c0_18] : memref<1x16x32xf32, #tpu.memory_space<vmem>>, vector<1x16x32xf32>
    %33 = vector.shape_cast %32 : vector<1x16x32xf32> to vector<16x32xf32>
    %34 = vector.shape_cast %31 : vector<16x32xf32> to vector<1x16x32xf32>
    tpu.vector_store %arg5[%c0_16, %c0_17, %c0_18], %34 {strides = array<i32>} : memref<1x16x32xf32, #tpu.memory_space<vmem>>, vector<1x16x32xf32>,
    return
  }
  func.func @transform_0(%arg0: i32) -> (i32, i32, i32) {
    %c0_i32 = arith.constant 0 : i32
    %c0_i32_0 = arith.constant 0 : i32
    %c0_i32_1 = arith.constant 0 : i32
    return %arg0, %c0_i32, %c0_i32_0 : i32, i32, i32
  }
  func.func @transform_1(%arg0: i32) -> (i32, i32) {
    %c0_i32 = arith.constant 0 : i32
    %c0_i32_0 = arith.constant 0 : i32
    %c0_i32_1 = arith.constant 0 : i32
    return %c0_i32, %c0_i32_0 : i32, i32
  }
  func.func @transform_2(%arg0: i32) -> (i32, i32) {
    %c0_i32 = arith.constant 0 : i32
    %c0_i32_0 = arith.constant 0 : i32
    %c0_i32_1 = arith.constant 0 : i32
    return %c0_i32, %c0_i32_0 : i32, i32
  }
  func.func @transform_3(%arg0: i32) -> (i32, i32) {
    %c0_i32 = arith.constant 0 : i32
    %c0_i32_0 = arith.constant 0 : i32
    %c0_i32_1 = arith.constant 0 : i32
    return %c0_i32, %c0_i32_0 : i32, i32
  }
  func.func @transform_4(%arg0: i32) -> (i32, i32, i32) {
    %c0_i32 = arith.constant 0 : i32
    %c0_i32_0 = arith.constant 0 : i32
    %c0_i32_1 = arith.constant 0 : i32
    return %arg0, %c0_i32, %c0_i32_0 : i32, i32, i32
  }
}

module attributes {stable_mosaic.version = 11 : i64} {
  func.func @_conv_in_kernel(%arg0: i32, %arg1: memref<1x16x288xbf16, #tpu.memory_space<vmem>>, %arg2: memref<288x32xbf16, #tpu.memory_space<vmem>>, %arg3: memref<1x32xf32, #tpu.memory_space<vmem>>, %arg4: memref<1x32xf32, #tpu.memory_space<vmem>>, %arg5: memref<1x16x32xf32, #tpu.memory_space<vmem>>) attributes {dimension_semantics = [#tpu.dimension_semantics<parallel>], iteration_bounds = array<i64: 2>, scalar_prefetch = 0 : i64, scratch_operands = 0 : i64, tpu.core_type = #tpu.core_type<tc>, window_params = [{transform_indices = @transform_0, window_bounds = array<i64: 1, 16, 288>}, {pipeline_mode = #tpu.pipeline_mode<synchronous>, transform_indices = @transform_1, window_bounds = array<i64: 288, 32>}, {pipeline_mode = #tpu.pipeline_mode<synchronous>, transform_indices = @transform_2, window_bounds = array<i64: 1, 32>}, {pipeline_mode = #tpu.pipeline_mode<synchronous>, transform_indices = @transform_3, window_bounds = array<i64: 1, 32>}, {transform_indices = @transform_4, window_bounds = array<i64: 1, 16, 32>}]} {
    %c0 = arith.constant 0 : index
    %c0_0 = arith.constant 0 : index
    %c0_1 = arith.constant 0 : index
    %0 = vector.load %arg1[%c0, %c0_0, %c0_1] : memref<1x16x288xbf16, #tpu.memory_space<vmem>>, vector<1x16x288xbf16>
    %1 = vector.shape_cast %0 : vector<1x16x288xbf16> to vector<16x288xbf16>
    %c0_2 = arith.constant 0 : index
    %c0_3 = arith.constant 0 : index
    %2 = vector.load %arg2[%c0_2, %c0_3] : memref<288x32xbf16, #tpu.memory_space<vmem>>, vector<288x32xbf16>
    %cst = arith.constant dense<0.000000e+00> : vector<16x32xf32>
    %3 = tpu.matmul %1, %2, %cst {dimension_numbers = #tpu.dot_dimension_numbers<[1], [0], [0], [1], [0, 0, 1, 1], [], []>} : vector<16x288xbf16>, vector<288x32xbf16>, vector<16x32xf32> -> vector<16x32xf32>
    %c0_4 = arith.constant 0 : index
    %c0_5 = arith.constant 0 : index
    %4 = vector.load %arg3[%c0_4, %c0_5] : memref<1x32xf32, #tpu.memory_space<vmem>>, vector<1x32xf32>
    %c0_6 = arith.constant 0 : index
    %c0_7 = arith.constant 0 : index
    %5 = vector.load %arg4[%c0_6, %c0_7] : memref<1x32xf32, #tpu.memory_space<vmem>>, vector<1x32xf32>
    %cst_8 = arith.constant dense<0.000000e+00> : vector<32xf32>
    %6 = vector.multi_reduction <add>, %3, %cst_8 [0] : vector<16x32xf32> to vector<32xf32>
    %7 = vector.shape_cast %6 : vector<32xf32> to vector<1x32xf32>
    %cst_9 = arith.constant 0.000000e+00 : f32
    %8 = vector.broadcast %cst_9 : f32 to vector<1x32xf32>
    %9 = arith.addf %8, %7 : vector<1x32xf32>
    %cst_10 = arith.constant 1.600000e+01 : f32
    %10 = vector.broadcast %cst_10 : f32 to vector<1x32xf32>
    %11 = arith.divf %9, %10 : vector<1x32xf32>
    %12 = vector.broadcast %11 : vector<1x32xf32> to vector<16x32xf32>
    %13 = arith.subf %3, %12 : vector<16x32xf32>
    %14 = arith.mulf %13, %13 : vector<16x32xf32>
    %cst_11 = arith.constant dense<0.000000e+00> : vector<32xf32>
    %15 = vector.multi_reduction <add>, %14, %cst_11 [0] : vector<16x32xf32> to vector<32xf32>
    %16 = vector.shape_cast %15 : vector<32xf32> to vector<1x32xf32>
    %cst_12 = arith.constant 0.000000e+00 : f32
    %17 = vector.broadcast %cst_12 : f32 to vector<1x32xf32>
    %18 = arith.addf %17, %16 : vector<1x32xf32>
    %cst_13 = arith.constant 1.600000e+01 : f32
    %19 = vector.broadcast %cst_13 : f32 to vector<1x32xf32>
    %20 = arith.divf %18, %19 : vector<1x32xf32>
    %cst_14 = arith.constant 9.99999974E-6 : f32
    %21 = vector.broadcast %cst_14 : f32 to vector<1x32xf32>
    %22 = arith.addf %20, %21 : vector<1x32xf32>
    %23 = math.rsqrt %22 : vector<1x32xf32>
    %24 = vector.broadcast %23 : vector<1x32xf32> to vector<16x32xf32>
    %25 = arith.mulf %13, %24 : vector<16x32xf32>
    %26 = vector.broadcast %4 : vector<1x32xf32> to vector<16x32xf32>
    %27 = arith.mulf %25, %26 : vector<16x32xf32>
    %28 = vector.broadcast %5 : vector<1x32xf32> to vector<16x32xf32>
    %29 = arith.addf %27, %28 : vector<16x32xf32>
    %cst_15 = arith.constant 0.000000e+00 : f32
    %30 = vector.broadcast %cst_15 : f32 to vector<16x32xf32>
    %31 = arith.maximumf %29, %30 : vector<16x32xf32>
    %c0_16 = arith.constant 0 : index
    %c0_17 = arith.constant 0 : index
    %c0_18 = arith.constant 0 : index
    %32 = vector.load %arg5[%c0_16, %c0_17, %c0_18] : memref<1x16x32xf32, #tpu.memory_space<vmem>>, vector<1x16x32xf32>
    %33 = vector.shape_cast %32 : vector<1x16x32xf32> to vector<16x32xf32>
    %34 = vector.shape_cast %31 : vector<16x32xf32> to vector<1x16x32xf32>
    tpu.vector_store %arg5[%c0_16, %c0_17, %c0_18], %34 {strides = array<i32>} : memref<1x16x32xf32, #tpu.memory_space<vmem>>, vector<1x16x32xf32>,
    return
  }
  func.func @transform_0(%arg0: i32) -> (i32, i32, i32) {
    %c0_i32 = arith.constant 0 : i32
    %c0_i32_0 = arith.constant 0 : i32
    %c0_i32_1 = arith.constant 0 : i32
    return %arg0, %c0_i32, %c0_i32_0 : i32, i32, i32
  }
  func.func @transform_1(%arg0: i32) -> (i32, i32) {
    %c0_i32 = arith.constant 0 : i32
    %c0_i32_0 = arith.constant 0 : i32
    %c0_i32_1 = arith.constant 0 : i32
    return %c0_i32, %c0_i32_0 : i32, i32
  }
  func.func @transform_2(%arg0: i32) -> (i32, i32) {
    %c0_i32 = arith.constant 0 : i32
    %c0_i32_0 = arith.constant 0 : i32
    %c0_i32_1 = arith.constant 0 : i32
    return %c0_i32, %c0_i32_0 : i32, i32
  }
  func.func @transform_3(%arg0: i32) -> (i32, i32) {
    %c0_i32 = arith.constant 0 : i32
    %c0_i32_0 = arith.constant 0 : i32
    %c0_i32_1 = arith.constant 0 : i32
    return %c0_i32, %c0_i32_0 : i32, i32
  }
  func.func @transform_4(%arg0: i32) -> (i32, i32, i32) {
    %c0_i32 = arith.constant 0 : i32
    %c0_i32_0 = arith.constant 0 : i32
    %c0_i32_1 = arith.constant 0 : i32
    return %arg0, %c0_i32, %c0_i32_0 : i32, i32, i32
  }
}

module attributes {stable_mosaic.version = 11 : i64} {
  func.func @_conv_in_add_kernel(%arg0: i32, %arg1: memref<1x16x288xbf16, #tpu.memory_space<vmem>>, %arg2: memref<288x32xbf16, #tpu.memory_space<vmem>>, %arg3: memref<1x32xf32, #tpu.memory_space<vmem>>, %arg4: memref<1x32xf32, #tpu.memory_space<vmem>>, %arg5: memref<1x16x32xf32, #tpu.memory_space<vmem>>, %arg6: memref<1x16x32xf32, #tpu.memory_space<vmem>>) attributes {dimension_semantics = [#tpu.dimension_semantics<parallel>], iteration_bounds = array<i64: 2>, scalar_prefetch = 0 : i64, scratch_operands = 0 : i64, tpu.core_type = #tpu.core_type<tc>, window_params = [{transform_indices = @transform_0, window_bounds = array<i64: 1, 16, 288>}, {pipeline_mode = #tpu.pipeline_mode<synchronous>, transform_indices = @transform_1, window_bounds = array<i64: 288, 32>}, {pipeline_mode = #tpu.pipeline_mode<synchronous>, transform_indices = @transform_2, window_bounds = array<i64: 1, 32>}, {pipeline_mode = #tpu.pipeline_mode<synchronous>, transform_indices = @transform_3, window_bounds = array<i64: 1, 32>}, {transform_indices = @transform_4, window_bounds = array<i64: 1, 16, 32>}, {transform_indices = @transform_5, window_bounds = array<i64: 1, 16, 32>}]} {
    %c0 = arith.constant 0 : index
    %c0_0 = arith.constant 0 : index
    %c0_1 = arith.constant 0 : index
    %0 = vector.load %arg1[%c0, %c0_0, %c0_1] : memref<1x16x288xbf16, #tpu.memory_space<vmem>>, vector<1x16x288xbf16>
    %1 = vector.shape_cast %0 : vector<1x16x288xbf16> to vector<16x288xbf16>
    %c0_2 = arith.constant 0 : index
    %c0_3 = arith.constant 0 : index
    %2 = vector.load %arg2[%c0_2, %c0_3] : memref<288x32xbf16, #tpu.memory_space<vmem>>, vector<288x32xbf16>
    %cst = arith.constant dense<0.000000e+00> : vector<16x32xf32>
    %3 = tpu.matmul %1, %2, %cst {dimension_numbers = #tpu.dot_dimension_numbers<[1], [0], [0], [1], [0, 0, 1, 1], [], []>} : vector<16x288xbf16>, vector<288x32xbf16>, vector<16x32xf32> -> vector<16x32xf32>
    %c0_4 = arith.constant 0 : index
    %c0_5 = arith.constant 0 : index
    %c0_6 = arith.constant 0 : index
    %4 = vector.load %arg5[%c0_4, %c0_5, %c0_6] : memref<1x16x32xf32, #tpu.memory_space<vmem>>, vector<1x16x32xf32>
    %5 = vector.shape_cast %4 : vector<1x16x32xf32> to vector<16x32xf32>
    %c0_7 = arith.constant 0 : index
    %c0_8 = arith.constant 0 : index
    %6 = vector.load %arg3[%c0_7, %c0_8] : memref<1x32xf32, #tpu.memory_space<vmem>>, vector<1x32xf32>
    %c0_9 = arith.constant 0 : index
    %c0_10 = arith.constant 0 : index
    %7 = vector.load %arg4[%c0_9, %c0_10] : memref<1x32xf32, #tpu.memory_space<vmem>>, vector<1x32xf32>
    %cst_11 = arith.constant dense<0.000000e+00> : vector<32xf32>
    %8 = vector.multi_reduction <add>, %3, %cst_11 [0] : vector<16x32xf32> to vector<32xf32>
    %9 = vector.shape_cast %8 : vector<32xf32> to vector<1x32xf32>
    %cst_12 = arith.constant 0.000000e+00 : f32
    %10 = vector.broadcast %cst_12 : f32 to vector<1x32xf32>
    %11 = arith.addf %10, %9 : vector<1x32xf32>
    %cst_13 = arith.constant 1.600000e+01 : f32
    %12 = vector.broadcast %cst_13 : f32 to vector<1x32xf32>
    %13 = arith.divf %11, %12 : vector<1x32xf32>
    %14 = vector.broadcast %13 : vector<1x32xf32> to vector<16x32xf32>
    %15 = arith.subf %3, %14 : vector<16x32xf32>
    %16 = arith.mulf %15, %15 : vector<16x32xf32>
    %cst_14 = arith.constant dense<0.000000e+00> : vector<32xf32>
    %17 = vector.multi_reduction <add>, %16, %cst_14 [0] : vector<16x32xf32> to vector<32xf32>
    %18 = vector.shape_cast %17 : vector<32xf32> to vector<1x32xf32>
    %cst_15 = arith.constant 0.000000e+00 : f32
    %19 = vector.broadcast %cst_15 : f32 to vector<1x32xf32>
    %20 = arith.addf %19, %18 : vector<1x32xf32>
    %cst_16 = arith.constant 1.600000e+01 : f32
    %21 = vector.broadcast %cst_16 : f32 to vector<1x32xf32>
    %22 = arith.divf %20, %21 : vector<1x32xf32>
    %cst_17 = arith.constant 9.99999974E-6 : f32
    %23 = vector.broadcast %cst_17 : f32 to vector<1x32xf32>
    %24 = arith.addf %22, %23 : vector<1x32xf32>
    %25 = math.rsqrt %24 : vector<1x32xf32>
    %26 = vector.broadcast %25 : vector<1x32xf32> to vector<16x32xf32>
    %27 = arith.mulf %15, %26 : vector<16x32xf32>
    %28 = vector.broadcast %6 : vector<1x32xf32> to vector<16x32xf32>
    %29 = arith.mulf %27, %28 : vector<16x32xf32>
    %30 = vector.broadcast %7 : vector<1x32xf32> to vector<16x32xf32>
    %31 = arith.addf %29, %30 : vector<16x32xf32>
    %32 = arith.addf %5, %31 : vector<16x32xf32>
    %c0_18 = arith.constant 0 : index
    %c0_19 = arith.constant 0 : index
    %c0_20 = arith.constant 0 : index
    %33 = vector.load %arg6[%c0_18, %c0_19, %c0_20] : memref<1x16x32xf32, #tpu.memory_space<vmem>>, vector<1x16x32xf32>
    %34 = vector.shape_cast %33 : vector<1x16x32xf32> to vector<16x32xf32>
    %35 = vector.shape_cast %32 : vector<16x32xf32> to vector<1x16x32xf32>
    tpu.vector_store %arg6[%c0_18, %c0_19, %c0_20], %35 {strides = array<i32>} : memref<1x16x32xf32, #tpu.memory_space<vmem>>, vector<1x16x32xf32>,
    return
  }
  func.func @transform_0(%arg0: i32) -> (i32, i32, i32) {
    %c0_i32 = arith.constant 0 : i32
    %c0_i32_0 = arith.constant 0 : i32
    %c0_i32_1 = arith.constant 0 : i32
    return %arg0, %c0_i32, %c0_i32_0 : i32, i32, i32
  }
  func.func @transform_1(%arg0: i32) -> (i32, i32) {
    %c0_i32 = arith.constant 0 : i32
    %c0_i32_0 = arith.constant 0 : i32
    %c0_i32_1 = arith.constant 0 : i32
    return %c0_i32, %c0_i32_0 : i32, i32
  }
  func.func @transform_2(%arg0: i32) -> (i32, i32) {
    %c0_i32 = arith.constant 0 : i32
    %c0_i32_0 = arith.constant 0 : i32
    %c0_i32_1 = arith.constant 0 : i32
    return %c0_i32, %c0_i32_0 : i32, i32
  }
  func.func @transform_3(%arg0: i32) -> (i32, i32) {
    %c0_i32 = arith.constant 0 : i32
    %c0_i32_0 = arith.constant 0 : i32
    %c0_i32_1 = arith.constant 0 : i32
    return %c0_i32, %c0_i32_0 : i32, i32
  }
  func.func @transform_4(%arg0: i32) -> (i32, i32, i32) {
    %c0_i32 = arith.constant 0 : i32
    %c0_i32_0 = arith.constant 0 : i32
    %c0_i32_1 = arith.constant 0 : i32
    return %arg0, %c0_i32, %c0_i32_0 : i32, i32, i32
  }
  func.func @transform_5(%arg0: i32) -> (i32, i32, i32) {
    %c0_i32 = arith.constant 0 : i32
    %c0_i32_0 = arith.constant 0 : i32
    %c0_i32_1 = arith.constant 0 : i32
    return %arg0, %c0_i32, %c0_i32_0 : i32, i32, i32
  }
}

module attributes {stable_mosaic.version = 11 : i64} {
  func.func @_conv_in_kernel(%arg0: i32, %arg1: memref<1x16x288xbf16, #tpu.memory_space<vmem>>, %arg2: memref<288x64xbf16, #tpu.memory_space<vmem>>, %arg3: memref<1x64xf32, #tpu.memory_space<vmem>>, %arg4: memref<1x64xf32, #tpu.memory_space<vmem>>, %arg5: memref<1x16x64xf32, #tpu.memory_space<vmem>>) attributes {dimension_semantics = [#tpu.dimension_semantics<parallel>], iteration_bounds = array<i64: 2>, scalar_prefetch = 0 : i64, scratch_operands = 0 : i64, tpu.core_type = #tpu.core_type<tc>, window_params = [{transform_indices = @transform_0, window_bounds = array<i64: 1, 16, 288>}, {pipeline_mode = #tpu.pipeline_mode<synchronous>, transform_indices = @transform_1, window_bounds = array<i64: 288, 64>}, {pipeline_mode = #tpu.pipeline_mode<synchronous>, transform_indices = @transform_2, window_bounds = array<i64: 1, 64>}, {pipeline_mode = #tpu.pipeline_mode<synchronous>, transform_indices = @transform_3, window_bounds = array<i64: 1, 64>}, {transform_indices = @transform_4, window_bounds = array<i64: 1, 16, 64>}]} {
    %c0 = arith.constant 0 : index
    %c0_0 = arith.constant 0 : index
    %c0_1 = arith.constant 0 : index
    %0 = vector.load %arg1[%c0, %c0_0, %c0_1] : memref<1x16x288xbf16, #tpu.memory_space<vmem>>, vector<1x16x288xbf16>
    %1 = vector.shape_cast %0 : vector<1x16x288xbf16> to vector<16x288xbf16>
    %c0_2 = arith.constant 0 : index
    %c0_3 = arith.constant 0 : index
    %2 = vector.load %arg2[%c0_2, %c0_3] : memref<288x64xbf16, #tpu.memory_space<vmem>>, vector<288x64xbf16>
    %cst = arith.constant dense<0.000000e+00> : vector<16x64xf32>
    %3 = tpu.matmul %1, %2, %cst {dimension_numbers = #tpu.dot_dimension_numbers<[1], [0], [0], [1], [0, 0, 1, 1], [], []>} : vector<16x288xbf16>, vector<288x64xbf16>, vector<16x64xf32> -> vector<16x64xf32>
    %c0_4 = arith.constant 0 : index
    %c0_5 = arith.constant 0 : index
    %4 = vector.load %arg3[%c0_4, %c0_5] : memref<1x64xf32, #tpu.memory_space<vmem>>, vector<1x64xf32>
    %c0_6 = arith.constant 0 : index
    %c0_7 = arith.constant 0 : index
    %5 = vector.load %arg4[%c0_6, %c0_7] : memref<1x64xf32, #tpu.memory_space<vmem>>, vector<1x64xf32>
    %cst_8 = arith.constant dense<0.000000e+00> : vector<64xf32>
    %6 = vector.multi_reduction <add>, %3, %cst_8 [0] : vector<16x64xf32> to vector<64xf32>
    %7 = vector.shape_cast %6 : vector<64xf32> to vector<1x64xf32>
    %8 = vector.extract_strided_slice %7 {offsets = [0, 0], sizes = [1, 16], strides = [1, 1]} : vector<1x64xf32> to vector<1x16xf32>
    %cst_9 = arith.constant 0.000000e+00 : f32
    %9 = vector.broadcast %cst_9 : f32 to vector<1x16xf32>
    %10 = arith.addf %9, %8 : vector<1x16xf32>
    %11 = vector.extract_strided_slice %7 {offsets = [0, 16], sizes = [1, 16], strides = [1, 1]} : vector<1x64xf32> to vector<1x16xf32>
    %12 = arith.addf %10, %11 : vector<1x16xf32>
    %13 = vector.extract_strided_slice %7 {offsets = [0, 32], sizes = [1, 16], strides = [1, 1]} : vector<1x64xf32> to vector<1x16xf32>
    %14 = arith.addf %12, %13 : vector<1x16xf32>
    %15 = vector.extract_strided_slice %7 {offsets = [0, 48], sizes = [1, 16], strides = [1, 1]} : vector<1x64xf32> to vector<1x16xf32>
    %16 = arith.addf %14, %15 : vector<1x16xf32>
    %cst_10 = arith.constant 6.400000e+01 : f32
    %17 = vector.broadcast %cst_10 : f32 to vector<1x16xf32>
    %18 = arith.divf %16, %17 : vector<1x16xf32>
    %19 = tpu.concatenate %18, %18, %18, %18 in 1 : vector<1x16xf32>, vector<1x16xf32>, vector<1x16xf32>, vector<1x16xf32> -> vector<1x64xf32>
    %20 = vector.broadcast %19 : vector<1x64xf32> to vector<16x64xf32>
    %21 = arith.subf %3, %20 : vector<16x64xf32>
    %22 = arith.mulf %21, %21 : vector<16x64xf32>
    %cst_11 = arith.constant dense<0.000000e+00> : vector<64xf32>
    %23 = vector.multi_reduction <add>, %22, %cst_11 [0] : vector<16x64xf32> to vector<64xf32>
    %24 = vector.shape_cast %23 : vector<64xf32> to vector<1x64xf32>
    %25 = vector.extract_strided_slice %24 {offsets = [0, 0], sizes = [1, 16], strides = [1, 1]} : vector<1x64xf32> to vector<1x16xf32>
    %cst_12 = arith.constant 0.000000e+00 : f32
    %26 = vector.broadcast %cst_12 : f32 to vector<1x16xf32>
    %27 = arith.addf %26, %25 : vector<1x16xf32>
    %28 = vector.extract_strided_slice %24 {offsets = [0, 16], sizes = [1, 16], strides = [1, 1]} : vector<1x64xf32> to vector<1x16xf32>
    %29 = arith.addf %27, %28 : vector<1x16xf32>
    %30 = vector.extract_strided_slice %24 {offsets = [0, 32], sizes = [1, 16], strides = [1, 1]} : vector<1x64xf32> to vector<1x16xf32>
    %31 = arith.addf %29, %30 : vector<1x16xf32>
    %32 = vector.extract_strided_slice %24 {offsets = [0, 48], sizes = [1, 16], strides = [1, 1]} : vector<1x64xf32> to vector<1x16xf32>
    %33 = arith.addf %31, %32 : vector<1x16xf32>
    %cst_13 = arith.constant 6.400000e+01 : f32
    %34 = vector.broadcast %cst_13 : f32 to vector<1x16xf32>
    %35 = arith.divf %33, %34 : vector<1x16xf32>
    %36 = tpu.concatenate %35, %35, %35, %35 in 1 : vector<1x16xf32>, vector<1x16xf32>, vector<1x16xf32>, vector<1x16xf32> -> vector<1x64xf32>
    %cst_14 = arith.constant 9.99999974E-6 : f32
    %37 = vector.broadcast %cst_14 : f32 to vector<1x64xf32>
    %38 = arith.addf %36, %37 : vector<1x64xf32>
    %39 = math.rsqrt %38 : vector<1x64xf32>
    %40 = vector.broadcast %39 : vector<1x64xf32> to vector<16x64xf32>
    %41 = arith.mulf %21, %40 : vector<16x64xf32>
    %42 = vector.broadcast %4 : vector<1x64xf32> to vector<16x64xf32>
    %43 = arith.mulf %41, %42 : vector<16x64xf32>
    %44 = vector.broadcast %5 : vector<1x64xf32> to vector<16x64xf32>
    %45 = arith.addf %43, %44 : vector<16x64xf32>
    %cst_15 = arith.constant 0.000000e+00 : f32
    %46 = vector.broadcast %cst_15 : f32 to vector<16x64xf32>
    %47 = arith.maximumf %45, %46 : vector<16x64xf32>
    %c0_16 = arith.constant 0 : index
    %c0_17 = arith.constant 0 : index
    %c0_18 = arith.constant 0 : index
    %48 = vector.load %arg5[%c0_16, %c0_17, %c0_18] : memref<1x16x64xf32, #tpu.memory_space<vmem>>, vector<1x16x64xf32>
    %49 = vector.shape_cast %48 : vector<1x16x64xf32> to vector<16x64xf32>
    %50 = vector.shape_cast %47 : vector<16x64xf32> to vector<1x16x64xf32>
    tpu.vector_store %arg5[%c0_16, %c0_17, %c0_18], %50 {strides = array<i32>} : memref<1x16x64xf32, #tpu.memory_space<vmem>>, vector<1x16x64xf32>,
    return
  }
  func.func @transform_0(%arg0: i32) -> (i32, i32, i32) {
    %c0_i32 = arith.constant 0 : i32
    %c0_i32_0 = arith.constant 0 : i32
    %c0_i32_1 = arith.constant 0 : i32
    return %arg0, %c0_i32, %c0_i32_0 : i32, i32, i32
  }
  func.func @transform_1(%arg0: i32) -> (i32, i32) {
    %c0_i32 = arith.constant 0 : i32
    %c0_i32_0 = arith.constant 0 : i32
    %c0_i32_1 = arith.constant 0 : i32
    return %c0_i32, %c0_i32_0 : i32, i32
  }
  func.func @transform_2(%arg0: i32) -> (i32, i32) {
    %c0_i32 = arith.constant 0 : i32
    %c0_i32_0 = arith.constant 0 : i32
    %c0_i32_1 = arith.constant 0 : i32
    return %c0_i32, %c0_i32_0 : i32, i32
  }
  func.func @transform_3(%arg0: i32) -> (i32, i32) {
    %c0_i32 = arith.constant 0 : i32
    %c0_i32_0 = arith.constant 0 : i32
    %c0_i32_1 = arith.constant 0 : i32
    return %c0_i32, %c0_i32_0 : i32, i32
  }
  func.func @transform_4(%arg0: i32) -> (i32, i32, i32) {
    %c0_i32 = arith.constant 0 : i32
    %c0_i32_0 = arith.constant 0 : i32
    %c0_i32_1 = arith.constant 0 : i32
    return %arg0, %c0_i32, %c0_i32_0 : i32, i32, i32
  }
}

module attributes {stable_mosaic.version = 11 : i64} {
  func.func @_conv_in_kernel(%arg0: i32, %arg1: memref<1x64x144xbf16, #tpu.memory_space<vmem>>, %arg2: memref<144x32xbf16, #tpu.memory_space<vmem>>, %arg3: memref<1x32xf32, #tpu.memory_space<vmem>>, %arg4: memref<1x32xf32, #tpu.memory_space<vmem>>, %arg5: memref<1x64x32xf32, #tpu.memory_space<vmem>>) attributes {dimension_semantics = [#tpu.dimension_semantics<parallel>], iteration_bounds = array<i64: 2>, scalar_prefetch = 0 : i64, scratch_operands = 0 : i64, tpu.core_type = #tpu.core_type<tc>, window_params = [{transform_indices = @transform_0, window_bounds = array<i64: 1, 64, 144>}, {pipeline_mode = #tpu.pipeline_mode<synchronous>, transform_indices = @transform_1, window_bounds = array<i64: 144, 32>}, {pipeline_mode = #tpu.pipeline_mode<synchronous>, transform_indices = @transform_2, window_bounds = array<i64: 1, 32>}, {pipeline_mode = #tpu.pipeline_mode<synchronous>, transform_indices = @transform_3, window_bounds = array<i64: 1, 32>}, {transform_indices = @transform_4, window_bounds = array<i64: 1, 64, 32>}]} {
    %c0 = arith.constant 0 : index
    %c0_0 = arith.constant 0 : index
    %c0_1 = arith.constant 0 : index
    %0 = vector.load %arg1[%c0, %c0_0, %c0_1] : memref<1x64x144xbf16, #tpu.memory_space<vmem>>, vector<1x64x144xbf16>
    %1 = vector.shape_cast %0 : vector<1x64x144xbf16> to vector<64x144xbf16>
    %c0_2 = arith.constant 0 : index
    %c0_3 = arith.constant 0 : index
    %2 = vector.load %arg2[%c0_2, %c0_3] : memref<144x32xbf16, #tpu.memory_space<vmem>>, vector<144x32xbf16>
    %cst = arith.constant dense<0.000000e+00> : vector<64x32xf32>
    %3 = tpu.matmul %1, %2, %cst {dimension_numbers = #tpu.dot_dimension_numbers<[1], [0], [0], [1], [0, 0, 1, 1], [], []>} : vector<64x144xbf16>, vector<144x32xbf16>, vector<64x32xf32> -> vector<64x32xf32>
    %c0_4 = arith.constant 0 : index
    %c0_5 = arith.constant 0 : index
    %4 = vector.load %arg3[%c0_4, %c0_5] : memref<1x32xf32, #tpu.memory_space<vmem>>, vector<1x32xf32>
    %c0_6 = arith.constant 0 : index
    %c0_7 = arith.constant 0 : index
    %5 = vector.load %arg4[%c0_6, %c0_7] : memref<1x32xf32, #tpu.memory_space<vmem>>, vector<1x32xf32>
    %cst_8 = arith.constant dense<0.000000e+00> : vector<32xf32>
    %6 = vector.multi_reduction <add>, %3, %cst_8 [0] : vector<64x32xf32> to vector<32xf32>
    %7 = vector.shape_cast %6 : vector<32xf32> to vector<1x32xf32>
    %8 = vector.extract_strided_slice %7 {offsets = [0, 0], sizes = [1, 8], strides = [1, 1]} : vector<1x32xf32> to vector<1x8xf32>
    %cst_9 = arith.constant 0.000000e+00 : f32
    %9 = vector.broadcast %cst_9 : f32 to vector<1x8xf32>
    %10 = arith.addf %9, %8 : vector<1x8xf32>
    %11 = vector.extract_strided_slice %7 {offsets = [0, 8], sizes = [1, 8], strides = [1, 1]} : vector<1x32xf32> to vector<1x8xf32>
    %12 = arith.addf %10, %11 : vector<1x8xf32>
    %13 = vector.extract_strided_slice %7 {offsets = [0, 16], sizes = [1, 8], strides = [1, 1]} : vector<1x32xf32> to vector<1x8xf32>
    %14 = arith.addf %12, %13 : vector<1x8xf32>
    %15 = vector.extract_strided_slice %7 {offsets = [0, 24], sizes = [1, 8], strides = [1, 1]} : vector<1x32xf32> to vector<1x8xf32>
    %16 = arith.addf %14, %15 : vector<1x8xf32>
    %cst_10 = arith.constant 2.560000e+02 : f32
    %17 = vector.broadcast %cst_10 : f32 to vector<1x8xf32>
    %18 = arith.divf %16, %17 : vector<1x8xf32>
    %19 = tpu.concatenate %18, %18, %18, %18 in 1 : vector<1x8xf32>, vector<1x8xf32>, vector<1x8xf32>, vector<1x8xf32> -> vector<1x32xf32>
    %20 = vector.broadcast %19 : vector<1x32xf32> to vector<64x32xf32>
    %21 = arith.subf %3, %20 : vector<64x32xf32>
    %22 = arith.mulf %21, %21 : vector<64x32xf32>
    %cst_11 = arith.constant dense<0.000000e+00> : vector<32xf32>
    %23 = vector.multi_reduction <add>, %22, %cst_11 [0] : vector<64x32xf32> to vector<32xf32>
    %24 = vector.shape_cast %23 : vector<32xf32> to vector<1x32xf32>
    %25 = vector.extract_strided_slice %24 {offsets = [0, 0], sizes = [1, 8], strides = [1, 1]} : vector<1x32xf32> to vector<1x8xf32>
    %cst_12 = arith.constant 0.000000e+00 : f32
    %26 = vector.broadcast %cst_12 : f32 to vector<1x8xf32>
    %27 = arith.addf %26, %25 : vector<1x8xf32>
    %28 = vector.extract_strided_slice %24 {offsets = [0, 8], sizes = [1, 8], strides = [1, 1]} : vector<1x32xf32> to vector<1x8xf32>
    %29 = arith.addf %27, %28 : vector<1x8xf32>
    %30 = vector.extract_strided_slice %24 {offsets = [0, 16], sizes = [1, 8], strides = [1, 1]} : vector<1x32xf32> to vector<1x8xf32>
    %31 = arith.addf %29, %30 : vector<1x8xf32>
    %32 = vector.extract_strided_slice %24 {offsets = [0, 24], sizes = [1, 8], strides = [1, 1]} : vector<1x32xf32> to vector<1x8xf32>
    %33 = arith.addf %31, %32 : vector<1x8xf32>
    %cst_13 = arith.constant 2.560000e+02 : f32
    %34 = vector.broadcast %cst_13 : f32 to vector<1x8xf32>
    %35 = arith.divf %33, %34 : vector<1x8xf32>
    %36 = tpu.concatenate %35, %35, %35, %35 in 1 : vector<1x8xf32>, vector<1x8xf32>, vector<1x8xf32>, vector<1x8xf32> -> vector<1x32xf32>
    %cst_14 = arith.constant 9.99999974E-6 : f32
    %37 = vector.broadcast %cst_14 : f32 to vector<1x32xf32>
    %38 = arith.addf %36, %37 : vector<1x32xf32>
    %39 = math.rsqrt %38 : vector<1x32xf32>
    %40 = vector.broadcast %39 : vector<1x32xf32> to vector<64x32xf32>
    %41 = arith.mulf %21, %40 : vector<64x32xf32>
    %42 = vector.broadcast %4 : vector<1x32xf32> to vector<64x32xf32>
    %43 = arith.mulf %41, %42 : vector<64x32xf32>
    %44 = vector.broadcast %5 : vector<1x32xf32> to vector<64x32xf32>
    %45 = arith.addf %43, %44 : vector<64x32xf32>
    %cst_15 = arith.constant 0.000000e+00 : f32
    %46 = vector.broadcast %cst_15 : f32 to vector<64x32xf32>
    %47 = arith.maximumf %45, %46 : vector<64x32xf32>
    %c0_16 = arith.constant 0 : index
    %c0_17 = arith.constant 0 : index
    %c0_18 = arith.constant 0 : index
    %48 = vector.load %arg5[%c0_16, %c0_17, %c0_18] : memref<1x64x32xf32, #tpu.memory_space<vmem>>, vector<1x64x32xf32>
    %49 = vector.shape_cast %48 : vector<1x64x32xf32> to vector<64x32xf32>
    %50 = vector.shape_cast %47 : vector<64x32xf32> to vector<1x64x32xf32>
    tpu.vector_store %arg5[%c0_16, %c0_17, %c0_18], %50 {strides = array<i32>} : memref<1x64x32xf32, #tpu.memory_space<vmem>>, vector<1x64x32xf32>,
    return
  }
  func.func @transform_0(%arg0: i32) -> (i32, i32, i32) {
    %c0_i32 = arith.constant 0 : i32
    %c0_i32_0 = arith.constant 0 : i32
    %c0_i32_1 = arith.constant 0 : i32
    return %arg0, %c0_i32, %c0_i32_0 : i32, i32, i32
  }
  func.func @transform_1(%arg0: i32) -> (i32, i32) {
    %c0_i32 = arith.constant 0 : i32
    %c0_i32_0 = arith.constant 0 : i32
    %c0_i32_1 = arith.constant 0 : i32
    return %c0_i32, %c0_i32_0 : i32, i32
  }
  func.func @transform_2(%arg0: i32) -> (i32, i32) {
    %c0_i32 = arith.constant 0 : i32
    %c0_i32_0 = arith.constant 0 : i32
    %c0_i32_1 = arith.constant 0 : i32
    return %c0_i32, %c0_i32_0 : i32, i32
  }
  func.func @transform_3(%arg0: i32) -> (i32, i32) {
    %c0_i32 = arith.constant 0 : i32
    %c0_i32_0 = arith.constant 0 : i32
    %c0_i32_1 = arith.constant 0 : i32
    return %c0_i32, %c0_i32_0 : i32, i32
  }
  func.func @transform_4(%arg0: i32) -> (i32, i32, i32) {
    %c0_i32 = arith.constant 0 : i32
    %c0_i32_0 = arith.constant 0 : i32
    %c0_i32_1 = arith.constant 0 : i32
    return %arg0, %c0_i32, %c0_i32_0 : i32, i32, i32
  }
}

module attributes {stable_mosaic.version = 11 : i64} {
  func.func @_conv_tanh_kernel(%arg0: i32, %arg1: memref<1x256x392xbf16, #tpu.memory_space<vmem>>, %arg2: memref<392x3xbf16, #tpu.memory_space<vmem>>, %arg3: memref<1x256x3xf32, #tpu.memory_space<vmem>>) attributes {dimension_semantics = [#tpu.dimension_semantics<parallel>], iteration_bounds = array<i64: 2>, scalar_prefetch = 0 : i64, scratch_operands = 0 : i64, tpu.core_type = #tpu.core_type<tc>, window_params = [{transform_indices = @transform_0, window_bounds = array<i64: 1, 256, 392>}, {pipeline_mode = #tpu.pipeline_mode<synchronous>, transform_indices = @transform_1, window_bounds = array<i64: 392, 3>}, {transform_indices = @transform_2, window_bounds = array<i64: 1, 256, 3>}]} {
    %c0 = arith.constant 0 : index
    %c0_0 = arith.constant 0 : index
    %c0_1 = arith.constant 0 : index
    %0 = vector.load %arg1[%c0, %c0_0, %c0_1] : memref<1x256x392xbf16, #tpu.memory_space<vmem>>, vector<1x256x392xbf16>
    %1 = vector.shape_cast %0 : vector<1x256x392xbf16> to vector<256x392xbf16>
    %c0_2 = arith.constant 0 : index
    %c0_3 = arith.constant 0 : index
    %2 = vector.load %arg2[%c0_2, %c0_3] : memref<392x3xbf16, #tpu.memory_space<vmem>>, vector<392x3xbf16>
    %cst = arith.constant dense<0.000000e+00> : vector<256x3xf32>
    %3 = tpu.matmul %1, %2, %cst {dimension_numbers = #tpu.dot_dimension_numbers<[1], [0], [0], [1], [0, 0, 1, 1], [], []>} : vector<256x392xbf16>, vector<392x3xbf16>, vector<256x3xf32> -> vector<256x3xf32>
    %4 = math.tanh %3 : vector<256x3xf32>
    %c0_4 = arith.constant 0 : index
    %c0_5 = arith.constant 0 : index
    %c0_6 = arith.constant 0 : index
    %5 = vector.load %arg3[%c0_4, %c0_5, %c0_6] : memref<1x256x3xf32, #tpu.memory_space<vmem>>, vector<1x256x3xf32>
    %6 = vector.shape_cast %5 : vector<1x256x3xf32> to vector<256x3xf32>
    %7 = vector.shape_cast %4 : vector<256x3xf32> to vector<1x256x3xf32>
    tpu.vector_store %arg3[%c0_4, %c0_5, %c0_6], %7 {strides = array<i32>} : memref<1x256x3xf32, #tpu.memory_space<vmem>>, vector<1x256x3xf32>,
    return
  }
  func.func @transform_0(%arg0: i32) -> (i32, i32, i32) {
    %c0_i32 = arith.constant 0 : i32
    %c0_i32_0 = arith.constant 0 : i32
    %c0_i32_1 = arith.constant 0 : i32
    return %arg0, %c0_i32, %c0_i32_0 : i32, i32, i32
  }
  func.func @transform_1(%arg0: i32) -> (i32, i32) {
    %c0_i32 = arith.constant 0 : i32
    %c0_i32_0 = arith.constant 0 : i32
    %c0_i32_1 = arith.constant 0 : i32
    return %c0_i32, %c0_i32_0 : i32, i32
  }
  func.func @transform_2(%arg0: i32) -> (i32, i32, i32) {
    %c0_i32 = arith.constant 0 : i32
    %c0_i32_0 = arith.constant 0 : i32
    %c0_i32_1 = arith.constant 0 : i32
    return %arg0, %c0_i32, %c0_i32_0 : i32, i32, i32
  }
}

</mosaic_0001>

<llo_original>
// kernel: generator_forward.10
$region0: #{generator_forward.10}
  #allocation0 [shape = 'u32[]', space=smem, size = 0x4, offset = 0x4, fixed_abs, tag = 'smem constant byte address 0x4 - core index']
  #allocation1 [shape = 'u32[72,128]{1,0:T(1,128)}', space=vmem, size = 0x9000, scoped, tag = 'internal scratch']
  %s0 = inlined_call_operand.vmem [shape: bf16[2,256,392], index: 0, kind: input, shape index: {}]
  %s1 = inlined_call_operand.vmem [shape: bf16[392,8], index: 1, kind: input, shape index: {}]
  %s2 = inlined_call_operand.vmem [shape: f32[1,8], index: 2, kind: input, shape index: {}]
  %s3 = inlined_call_operand.vmem [shape: f32[1,8], index: 3, kind: input, shape index: {}]
  %s4 = inlined_call_operand.vmem [shape: f32[2,256,8], index: 4, kind: output, shape index: {}]
  %s5 = sld [smem:[#allocation0]]
  $region49: #{generator_forward.10} parent=0
    _
  %s7 = ssub.s32 1, %s5
  %s8 = scalar_select 0, %s7, %s5
  loop: start=0, step=1, limit=4
  $region2: #{generator_forward.10} parent=0 // loop_pre_header
    _
  $region3: #{generator_forward.10} parent=0 // loop_header
    %s10 = sphi 0, %s14
    %p11 = scmp.ge.s32.totalorder %s10, 4
    %s20 = sphi 0, %s22
    %s23 = sphi 0, %s20
    %s24 = sphi 0, %s23
    %s40 = sphi 0, %s24
    %s44 = sphi 0, %s44
    %s46 = sphi 0, %s44
    %s47 = sphi 0, %s46
    %s61 = sphi 0, %s47
    %s65 = sphi 0, %s65
    %s67 = sphi 0, %s65
    %s68 = sphi 0, %s67
    %s82 = sphi 0, %s68
    %s86 = sphi 0, %s86
    %s88 = sphi 0, %s86
    %s89 = sphi 0, %s88
    %s103 = sphi 0, %s89
    %s109 = sphi 0, %s111
    %s112 = sphi 0, %s109
    %s113 = sphi 0, %s112
    %s129 = sphi 0, %s113
  $region4: #{generator_forward.10} parent=0 // loop_header_branch
    %13 = sbr.rel (%p11) target = $region8
  $region5: #{generator_forward.10} parent=0 // loop_body
    %s15 = ssub.s32 %s10, 1
    %s16 = ssub.s32 %s10, 2
    %s17 = sadd.s32 %s10, 1
    %s18 = ssub.s32 %s10, %s17
    %p19 = scmp.eq.s32.totalorder %s18, 0
    %s21 = sadd.s32 %s20, 1
    %s22 = scalar_select %p19, %s20, %s21
    %p25 = pneg %p19
    %p26 = scmp.eq.s32.totalorder %s10, 1
    %p27 = por %p25, %p26
    %p28 = scmp.ne.s32.totalorder %s20, %s23
    %p29 = scmp.eq.s32.totalorder %s10, 0
    %p30 = por %p28, %p29
    %p31 = scmp.ne.s32.totalorder %s20, %s23
    %p32 = scmp.eq.s32.totalorder %s15, 1
    %p33 = por %p31, %p32
    %p34 = scmp.ne.s32.totalorder %s23, %s24
    %p35 = scmp.eq.s32.totalorder %s15, 0
    %p36 = por %p34, %p35
    %p37 = scmp.ne.s32.totalorder %s23, %s24
    %p38 = scmp.eq.s32.totalorder %s16, 1
    %p39 = por %p37, %p38
    %p41 = scmp.ne.s32.totalorder %s24, %s40
    %p42 = scmp.eq.s32.totalorder %s16, 0
    %p43 = por %p41, %p42
    %s45 = sadd.s32 %s44, 1
    %p48 = scmp.eq.s32.totalorder %s10, 1
    %p49 = scmp.ne.s32.totalorder %s44, %s46
    %p50 = scmp.eq.s32.totalorder %s10, 0
    %p51 = por %p49, %p50
    %p52 = scmp.ne.s32.totalorder %s44, %s46
    %p53 = scmp.eq.s32.totalorder %s15, 1
    %p54 = por %p52, %p53
    %p55 = scmp.ne.s32.totalorder %s46, %s47
    %p56 = scmp.eq.s32.totalorder %s15, 0
    %p57 = por %p55, %p56
    %p58 = scmp.ne.s32.totalorder %s46, %s47
    %p59 = scmp.eq.s32.totalorder %s16, 1
    %p60 = por %p58, %p59
    %p62 = scmp.ne.s32.totalorder %s47, %s61
    %p63 = scmp.eq.s32.totalorder %s16, 0
    %p64 = por %p62, %p63
    %s66 = sadd.s32 %s65, 1
    %p69 = scmp.eq.s32.totalorder %s10, 1
    %p70 = scmp.ne.s32.totalorder %s65, %s67
    %p71 = scmp.eq.s32.totalorder %s10, 0
    %p72 = por %p70, %p71
    %p73 = scmp.ne.s32.totalorder %s65, %s67
    %p74 = scmp.eq.s32.totalorder %s15, 1
    %p75 = por %p73, %p74
    %p76 = scmp.ne.s32.totalorder %s67, %s68
    %p77 = scmp.eq.s32.totalorder %s15, 0
    %p78 = por %p76, %p77
    %p79 = scmp.ne.s32.totalorder %s67, %s68
    %p80 = scmp.eq.s32.totalorder %s16, 1
    %p81 = por %p79, %p80
    %p83 = scmp.ne.s32.totalorder %s68, %s82
    %p84 = scmp.eq.s32.totalorder %s16, 0
    %p85 = por %p83, %p84
    %s87 = sadd.s32 %s86, 1
    %p90 = scmp.eq.s32.totalorder %s10, 1
    %p91 = scmp.ne.s32.totalorder %s86, %s88
    %p92 = scmp.eq.s32.totalorder %s10, 0
    %p93 = por %p91, %p92
    %p94 = scmp.ne.s32.totalorder %s86, %s88
    %p95 = scmp.eq.s32.totalorder %s15, 1
    %p96 = por %p94, %p95
    %p97 = scmp.ne.s32.totalorder %s88, %s89
    %p98 = scmp.eq.s32.totalorder %s15, 0
    %p99 = por %p97, %p98
    %p100 = scmp.ne.s32.totalorder %s88, %s89
    %p101 = scmp.eq.s32.totalorder %s16, 1
    %p102 = por %p100, %p101
    %p104 = scmp.ne.s32.totalorder %s89, %s103
    %p105 = scmp.eq.s32.totalorder %s16, 0
    %p106 = por %p104, %p105
    %s107 = ssub.s32 %s10, %s17
    %p108 = scmp.eq.s32.totalorder %s107, 0
    %s110 = sadd.s32 %s109, 1
    %s111 = scalar_select %p108, %s109, %s110
    %p114 = pneg %p108
    %p115 = scmp.eq.s32.totalorder %s10, 1
    %p116 = por %p114, %p115
    %p117 = scmp.ne.s32.totalorder %s109, %s112
    %p118 = scmp.eq.s32.totalorder %s10, 0
    %p119 = por %p117, %p118
    %p120 = scmp.ne.s32.totalorder %s109, %s112
    %p121 = scmp.eq.s32.totalorder %s15, 1
    %p122 = por %p120, %p121
    %p123 = scmp.ne.s32.totalorder %s112, %s113
    %p124 = scmp.eq.s32.totalorder %s15, 0
    %p125 = por %p123, %p124
    %p126 = scmp.ne.s32.totalorder %s112, %s113
    %p127 = scmp.eq.s32.totalorder %s16, 1
    %p128 = por %p126, %p127
    %p130 = scmp.ne.s32.totalorder %s113, %s129
    %p131 = scmp.eq.s32.totalorder %s16, 0
    %p132 = por %p130, %p131
    %p133 = scmp.le.s32.totalorder 1, %s10
    %p134 = scmp.lt.s32.totalorder %s10, 3
    %p135 = pnand %p133, %p134
    %p136 = pneg %p135
    // Predicated region
    $region9: #{generator_forward.10} parent=5 // pred_check
      _
    $region10: #{generator_forward.10} parent=5 // pred_check_branch
      %138 = sbr.rel (%p135) target = $region12
    $region11: #{generator_forward.10} parent=5 // pred_region
      %s139 = ssub.s32 %s10, 1
      // Predicated region
      $region13: #{generator_forward.10} parent=11 // pred_check
        %p140 = pneg %p57
      $region14: #{generator_forward.10} parent=11 // pred_check_branch
        %142 = sbr.rel (%p140) target = $region16
      $region15: #{generator_forward.10} parent=11 // pred_region
        _
      $region16: #{generator_forward.10} parent=11 // pred_fallthru
        _
      // Predicated region
      $region17: #{generator_forward.10} parent=11 // pred_check
        %p143 = pneg %p78
      $region18: #{generator_forward.10} parent=11 // pred_check_branch
        %145 = sbr.rel (%p143) target = $region20
      $region19: #{generator_forward.10} parent=11 // pred_region
        _
      $region20: #{generator_forward.10} parent=11 // pred_fallthru
        _
      // Predicated region
      $region21: #{generator_forward.10} parent=11 // pred_check
        %p146 = pneg %p99
      $region22: #{generator_forward.10} parent=11 // pred_check_branch
        %148 = sbr.rel (%p146) target = $region24
      $region23: #{generator_forward.10} parent=11 // pred_region
        _
      $region24: #{generator_forward.10} parent=11 // pred_fallthru
        _
    $region12: #{generator_forward.10} parent=5 // pred_fallthru
      _
    %p149 = scmp.lt.s32.totalorder %s10, 2
    // Predicated region
    $region25: #{generator_forward.10} parent=5 // pred_check
      %p150 = pneg %p149
    $region26: #{generator_forward.10} parent=5 // pred_check_branch
      %152 = sbr.rel (%p150) target = $region28
    $region27: #{generator_forward.10} parent=5 // pred_region
      // Predicated region
      $region29: #{generator_forward.10} parent=27 // pred_check
        %p153 = pneg %p30
      $region30: #{generator_forward.10} parent=27 // pred_check_branch
        %155 = sbr.rel (%p153) target = $region32
      $region31: #{generator_forward.10} parent=27 // pred_region
        %p156 = scmp.lt.s32.totalorder %s10, 1
        %s157 = scalar_select %p156, %s10, 1
        %s158 = smul.addr %s157, 128
        %s159 = smul.addr %s158, 4
        %s160 = scalar_lea.vmem %s0, %s159
      $region32: #{generator_forward.10} parent=27 // pred_fallthru
        _
    $region28: #{generator_forward.10} parent=5 // pred_fallthru
      _
    %p161 = scmp.le.s32.totalorder 1, %s10
    %p162 = scmp.lt.s32.totalorder %s10, 3
    %p163 = pnand %p161, %p162
    %p164 = pneg %p163
    // Predicated region
    $region33: #{generator_forward.10} parent=5 // pred_check
      _
    $region34: #{generator_forward.10} parent=5 // pred_check_branch
      %166 = sbr.rel (%p163) target = $region36
    $region35: #{generator_forward.10} parent=5 // pred_region
      %s167 = ssub.s32 %s10, 1
      %p168 = scmp.lt.s32.totalorder %s15, 1
      %s169 = scalar_select %p168, %s15, 1
      %s170 = smul.addr %s169, 128
      %s171 = smul.addr %s170, 4
      %s172 = scalar_lea.vmem %s0, %s171
      %p173 = pneg %p36
      %p174 = pneg %p33
      %p175 = pneg %p57
      %p176 = pneg %p54
      %p177 = pneg %p78
      %p178 = pneg %p75
      %p179 = pneg %p99
      %p180 = pneg %p96
      %p181 = pneg %p125
      %p182 = pneg %p122
      %p183 = scmp.lt.s32.totalorder %s15, 1
      %s184 = scalar_select %p183, %s15, 1
      %s185 = smul.addr %s184, 32
      %s186 = smul.addr %s185, 8
      %s187 = scalar_lea.vmem %s4, %s186
      %p188 = scmp.lt.s32.totalorder %s15, 1
      %s189 = scalar_select %p188, %s15, 1
      %s190 = smul.addr %s189, 128
      %s191 = smul.addr %s190, 4
      %s192 = scalar_lea.vmem %s0, %s191
      %p193 = scmp.lt.s32.totalorder %s15, 1
      %s194 = scalar_select %p193, %s15, 1
      %s195 = smul.addr %s194, 32
      %s196 = smul.addr %s195, 8
      %s197 = scalar_lea.vmem %s4, %s196
      %v199 = vld [vmem:[%s192] sm:$0xff]
      %v200 = vld [vmem:[%s192 + $0x8] sm:$0xff]
      %v201 = vld [vmem:[%s192 + $0x10] sm:$0xff]
      %v202 = vld [vmem:[%s192 + $0x18] sm:$0xff]
      %v203 = vld [vmem:[%s192 + $0x20] sm:$0xff]
      %v204 = vld [vmem:[%s192 + $0x28] sm:$0xff]
      %v205 = vld [vmem:[%s192 + $0x30] sm:$0xff]
      %v206 = vld [vmem:[%s192 + $0x38] sm:$0xff]
      %v207 = vld [vmem:[%s192 + $0x40] sm:$0xff]
      %v208 = vld [vmem:[%s192 + $0x48] sm:$0xff]
      %v209 = vld [vmem:[%s192 + $0x50] sm:$0xff]
      %v210 = vld [vmem:[%s192 + $0x58] sm:$0xff]
      %v211 = vld [vmem:[%s192 + $0x60] sm:$0xff]
      %v212 = vld [vmem:[%s192 + $0x68] sm:$0xff]
      %v213 = vld [vmem:[%s192 + $0x70] sm:$0xff]
      %v214 = vld [vmem:[%s192 + $0x78] sm:$0xff]
      %v215 = vld [vmem:[%s192 + $0x80] sm:$0xff]
      %v216 = vld [vmem:[%s192 + $0x88] sm:$0xff]
      %v217 = vld [vmem:[%s192 + $0x90] sm:$0xff]
      %v218 = vld [vmem:[%s192 + $0x98] sm:$0xff]
      %v219 = vld [vmem:[%s192 + $0xa0] sm:$0xff]
      %v220 = vld [vmem:[%s192 + $0xa8] sm:$0xff]
      %v221 = vld [vmem:[%s192 + $0xb0] sm:$0xff]
      %v222 = vld [vmem:[%s192 + $0xb8] sm:$0xff]
      %v223 = vld [vmem:[%s192 + $0xc0] sm:$0xff]
      %v224 = vld [vmem:[%s192 + $0xc8] sm:$0xff]
      %v225 = vld [vmem:[%s192 + $0xd0] sm:$0xff]
      %v226 = vld [vmem:[%s192 + $0xd8] sm:$0xff]
      %v227 = vld [vmem:[%s192 + $0xe0] sm:$0xff]
      %v228 = vld [vmem:[%s192 + $0xe8] sm:$0xff]
      %v229 = vld [vmem:[%s192 + $0xf0] sm:$0xff]
      %v230 = vld [vmem:[%s192 + $0xf8] sm:$0xff]
      %v231 = vld [vmem:[%s192 + $0x100] sm:$0xff]
      %v232 = vld [vmem:[%s192 + $0x108] sm:$0xff]
      %v233 = vld [vmem:[%s192 + $0x110] sm:$0xff]
      %v234 = vld [vmem:[%s192 + $0x118] sm:$0xff]
      %v235 = vld [vmem:[%s192 + $0x120] sm:$0xff]
      %v236 = vld [vmem:[%s192 + $0x128] sm:$0xff]
      %v237 = vld [vmem:[%s192 + $0x130] sm:$0xff]
      %v238 = vld [vmem:[%s192 + $0x138] sm:$0xff]
      %v239 = vld [vmem:[%s192 + $0x140] sm:$0xff]
      %v240 = vld [vmem:[%s192 + $0x148] sm:$0xff]
      %v241 = vld [vmem:[%s192 + $0x150] sm:$0xff]
      %v242 = vld [vmem:[%s192 + $0x158] sm:$0xff]
      %v243 = vld [vmem:[%s192 + $0x160] sm:$0xff]
      %v244 = vld [vmem:[%s192 + $0x168] sm:$0xff]
      %v245 = vld [vmem:[%s192 + $0x170] sm:$0xff]
      %v246 = vld [vmem:[%s192 + $0x178] sm:$0xff]
      %v247 = vld [vmem:[%s192 + $0x180] sm:$0xff]
      %v248 = vld [vmem:[%s192 + $0x188] sm:$0xff]
      %v249 = vld [vmem:[%s192 + $0x190] sm:$0xff]
      %v250 = vld [vmem:[%s192 + $0x198] sm:$0xff]
      %v251 = vld [vmem:[%s192 + $0x1a0] sm:$0xff]
      %v252 = vld [vmem:[%s192 + $0x1a8] sm:$0xff]
      %v253 = vld [vmem:[%s192 + $0x1b0] sm:$0xff]
      %v254 = vld [vmem:[%s192 + $0x1b8] sm:$0xff]
      %v255 = vld [vmem:[%s192 + $0x1c0] sm:$0xff]
      %v256 = vld [vmem:[%s192 + $0x1c8] sm:$0xff]
      %v257 = vld [vmem:[%s192 + $0x1d0] sm:$0xff]
      %v258 = vld [vmem:[%s192 + $0x1d8] sm:$0xff]
      %v259 = vld [vmem:[%s192 + $0x1e0] sm:$0xff]
      %v260 = vld [vmem:[%s192 + $0x1e8] sm:$0xff]
      %v261 = vld [vmem:[%s192 + $0x1f0] sm:$0xff]
      %v262 = vld [vmem:[%s192 + $0x1f8] sm:$0xff]
      %v263 = vld [vmem:[%s1] sm:$0xf]
      %v264 = vld [vmem:[%s1 + $0x4] sm:$0xf]
      %v265 = vld [vmem:[%s1 + $0x8] sm:$0xf]
      %v266 = vld [vmem:[%s1 + $0xc] sm:$0xf]
      %v267 = vld [vmem:[%s1 + $0x10] sm:$0xf]
      %v268 = vld [vmem:[%s1 + $0x14] sm:$0xf]
      %v269 = vld [vmem:[%s1 + $0x18] sm:$0xf]
      %v270 = vld [vmem:[%s1 + $0x1c] sm:$0xf]
      %v271 = vld [vmem:[%s1 + $0x20] sm:$0xf]
      %v272 = vld [vmem:[%s1 + $0x24] sm:$0xf]
      %v273 = vld [vmem:[%s1 + $0x28] sm:$0xf]
      %v274 = vld [vmem:[%s1 + $0x2c] sm:$0xf]
      %v275 = vld [vmem:[%s1 + $0x30] sm:$0xf]
      %v276 = vld [vmem:[%s1 + $0x34] sm:$0xf]
      %v277 = vld [vmem:[%s1 + $0x38] sm:$0xf]
      %v278 = vld [vmem:[%s1 + $0x3c] sm:$0xf]
      %v279 = vld [vmem:[%s1 + $0x40] sm:$0xf]
      %v280 = vld [vmem:[%s1 + $0x44] sm:$0xf]
      %v281 = vld [vmem:[%s1 + $0x48] sm:$0xf]
      %v282 = vld [vmem:[%s1 + $0x4c] sm:$0xf]
      %v283 = vld [vmem:[%s1 + $0x50] sm:$0xf]
      %v284 = vld [vmem:[%s1 + $0x54] sm:$0xf]
      %v285 = vld [vmem:[%s1 + $0x58] sm:$0xf]
      %v286 = vld [vmem:[%s1 + $0x5c] sm:$0xf]
      %v287 = vld [vmem:[%s1 + $0x60] sm:$0xf]
      %v288 = vld [vmem:[%s1 + $0x64] sm:$0xf]
      %v289 = vld [vmem:[%s1 + $0x68] sm:$0xf]
      %v290 = vld [vmem:[%s1 + $0x6c] sm:$0xf]
      %v291 = vld [vmem:[%s1 + $0x70] sm:$0xf]
      %v292 = vld [vmem:[%s1 + $0x74] sm:$0xf]
      %v293 = vld [vmem:[%s1 + $0x78] sm:$0xf]
      %v294 = vld [vmem:[%s1 + $0x7c] sm:$0xf]
      %v295 = vld [vmem:[%s1 + $0x80] sm:$0xf]
      %v296 = vld [vmem:[%s1 + $0x84] sm:$0xf]
      %v297 = vld [vmem:[%s1 + $0x88] sm:$0xf]
      %v298 = vld [vmem:[%s1 + $0x8c] sm:$0xf]
      %v299 = vld [vmem:[%s1 + $0x90] sm:$0xf]
      %v300 = vld [vmem:[%s1 + $0x94] sm:$0xf]
      %v301 = vld [vmem:[%s1 + $0x98] sm:$0xf]
      %v302 = vld [vmem:[%s1 + $0x9c] sm:$0xf]
      %v303 = vld [vmem:[%s1 + $0xa0] sm:$0xf]
      %v304 = vld [vmem:[%s1 + $0xa4] sm:$0xf]
      %v305 = vld [vmem:[%s1 + $0xa8] sm:$0xf]
      %v306 = vld [vmem:[%s1 + $0xac] sm:$0xf]
      %v307 = vld [vmem:[%s1 + $0xb0] sm:$0xf]
      %v308 = vld [vmem:[%s1 + $0xb4] sm:$0xf]
      %v309 = vld [vmem:[%s1 + $0xb8] sm:$0xf]
      %v310 = vld [vmem:[%s1 + $0xbc] sm:$0xf]
      %v311 = vld [vmem:[%s1 + $0xc0] sm:$0xf]
      %v376 = vunpack.c.l.b16 %v199
      %v377 = vunpack.c.h.b16 %v199
      %v378 = vunpack.c.l.b16 %v200
      %v379 = vunpack.c.h.b16 %v200
      %v380 = vunpack.c.l.b16 %v201
      %v381 = vunpack.c.h.b16 %v201
      %v382 = vunpack.c.l.b16 %v202
      %v383 = vunpack.c.h.b16 %v202
      %v384 = vunpack.c.l.b16 %v203
      %v385 = vunpack.c.h.b16 %v203
      %v386 = vunpack.c.l.b16 %v204
      %v387 = vunpack.c.h.b16 %v204
      %v388 = vunpack.c.l.b16 %v205
      %v389 = vunpack.c.h.b16 %v205
      %v390 = vunpack.c.l.b16 %v206
      %v391 = vunpack.c.h.b16 %v206
      %v392 = vunpack.c.l.b16 %v207
      %v393 = vunpack.c.h.b16 %v207
      %v394 = vunpack.c.l.b16 %v208
      %v395 = vunpack.c.h.b16 %v208
      %v396 = vunpack.c.l.b16 %v209
      %v397 = vunpack.c.h.b16 %v209
      %v398 = vunpack.c.l.b16 %v210
      %v399 = vunpack.c.h.b16 %v210
      %v400 = vunpack.c.l.b16 %v211
      %v401 = vunpack.c.h.b16 %v211
      %v402 = vunpack.c.l.b16 %v212
      %v403 = vunpack.c.h.b16 %v212
      %v404 = vunpack.c.l.b16 %v213
      %v405 = vunpack.c.h.b16 %v213
      %v406 = vunpack.c.l.b16 %v214
      %v407 = vunpack.c.h.b16 %v214
      %v408 = vunpack.c.l.b16 %v215
      %v409 = vunpack.c.h.b16 %v215
      %v410 = vunpack.c.l.b16 %v216
      %v411 = vunpack.c.h.b16 %v216
      %v412 = vunpack.c.l.b16 %v217
      %v413 = vunpack.c.h.b16 %v217
      %v414 = vunpack.c.l.b16 %v218
      %v415 = vunpack.c.h.b16 %v218
      %v416 = vunpack.c.l.b16 %v219
      %v417 = vunpack.c.h.b16 %v219
      %v418 = vunpack.c.l.b16 %v220
      %v419 = vunpack.c.h.b16 %v220
      %v420 = vunpack.c.l.b16 %v221
      %v421 = vunpack.c.h.b16 %v221
      %v422 = vunpack.c.l.b16 %v222
      %v423 = vunpack.c.h.b16 %v222
      %v424 = vunpack.c.l.b16 %v223
      %v425 = vunpack.c.h.b16 %v223
      %v426 = vunpack.c.l.b16 %v224
      %v427 = vunpack.c.h.b16 %v224
      %v428 = vunpack.c.l.b16 %v225
      %v429 = vunpack.c.h.b16 %v225
      %v430 = vunpack.c.l.b16 %v226
      %v431 = vunpack.c.h.b16 %v226
      %v432 = vunpack.c.l.b16 %v227
      %v433 = vunpack.c.h.b16 %v227
      %v434 = vunpack.c.l.b16 %v228
      %v435 = vunpack.c.h.b16 %v228
      %v436 = vunpack.c.l.b16 %v229
      %v437 = vunpack.c.h.b16 %v229
      %v438 = vunpack.c.l.b16 %v230
      %v439 = vunpack.c.h.b16 %v230
      %v440 = vunpack.c.l.b16 %v231
      %v441 = vunpack.c.h.b16 %v231
      %v442 = vunpack.c.l.b16 %v232
      %v443 = vunpack.c.h.b16 %v232
      %v444 = vunpack.c.l.b16 %v233
      %v445 = vunpack.c.h.b16 %v233
      %v446 = vunpack.c.l.b16 %v234
      %v447 = vunpack.c.h.b16 %v234
      %v448 = vunpack.c.l.b16 %v235
      %v449 = vunpack.c.h.b16 %v235
      %v450 = vunpack.c.l.b16 %v236
      %v451 = vunpack.c.h.b16 %v236
      %v452 = vunpack.c.l.b16 %v237
      %v453 = vunpack.c.h.b16 %v237
      %v454 = vunpack.c.l.b16 %v238
      %v455 = vunpack.c.h.b16 %v238
      %v456 = vunpack.c.l.b16 %v239
      %v457 = vunpack.c.h.b16 %v239
      %v458 = vunpack.c.l.b16 %v240
      %v459 = vunpack.c.h.b16 %v240
      %v460 = vunpack.c.l.b16 %v241
      %v461 = vunpack.c.h.b16 %v241
      %v462 = vunpack.c.l.b16 %v242
      %v463 = vunpack.c.h.b16 %v242
      %v464 = vunpack.c.l.b16 %v243
      %v465 = vunpack.c.h.b16 %v243
      %v466 = vunpack.c.l.b16 %v244
      %v467 = vunpack.c.h.b16 %v244
      %v468 = vunpack.c.l.b16 %v245
      %v469 = vunpack.c.h.b16 %v245
      %v470 = vunpack.c.l.b16 %v246
      %v471 = vunpack.c.h.b16 %v246
      %v472 = vunpack.c.l.b16 %v247
      %v473 = vunpack.c.h.b16 %v247
      %v474 = vunpack.c.l.b16 %v248
      %v475 = vunpack.c.h.b16 %v248
      %v476 = vunpack.c.l.b16 %v249
      %v477 = vunpack.c.h.b16 %v249
      %v478 = vunpack.c.l.b16 %v250
      %v479 = vunpack.c.h.b16 %v250
      %v480 = vunpack.c.l.b16 %v251
      %v481 = vunpack.c.h.b16 %v251
      %v482 = vunpack.c.l.b16 %v252
      %v483 = vunpack.c.h.b16 %v252
      %v484 = vunpack.c.l.b16 %v253
      %v485 = vunpack.c.h.b16 %v253
      %v486 = vunpack.c.l.b16 %v254
      %v487 = vunpack.c.h.b16 %v254
      %v488 = vunpack.c.l.b16 %v255
      %v489 = vunpack.c.h.b16 %v255
      %v490 = vunpack.c.l.b16 %v256
      %v491 = vunpack.c.h.b16 %v256
      %v492 = vunpack.c.l.b16 %v257
      %v493 = vunpack.c.h.b16 %v257
      %v494 = vunpack.c.l.b16 %v258
      %v495 = vunpack.c.h.b16 %v258
      %v496 = vunpack.c.l.b16 %v259
      %v497 = vunpack.c.h.b16 %v259
      %v498 = vunpack.c.l.b16 %v260
      %v499 = vunpack.c.h.b16 %v260
      %v500 = vunpack.c.l.b16 %v261
      %v501 = vunpack.c.h.b16 %v261
      %v502 = vunpack.c.l.b16 %v262
      %v503 = vunpack.c.h.b16 %v262
      %v504 = vpack.c.b16 %v380, %v376
      %v505 = vpack.c.b16 %v381, %v377
      %v506 = vpack.c.b16 %v382, %v378
      %v507 = vpack.c.b16 %v383, %v379
      %v508 = vpack.c.b16 %v388, %v384
      %v509 = vpack.c.b16 %v389, %v385
      %v510 = vpack.c.b16 %v390, %v386
      %v511 = vpack.c.b16 %v391, %v387
      %v512 = vpack.c.b16 %v396, %v392
      %v513 = vpack.c.b16 %v397, %v393
      %v514 = vpack.c.b16 %v398, %v394
      %v515 = vpack.c.b16 %v399, %v395
      %v516 = vpack.c.b16 %v404, %v400
      %v517 = vpack.c.b16 %v405, %v401
      %v518 = vpack.c.b16 %v406, %v402
      %v519 = vpack.c.b16 %v407, %v403
      %v520 = vpack.c.b16 %v412, %v408
      %v521 = vpack.c.b16 %v413, %v409
      %v522 = vpack.c.b16 %v414, %v410
      %v523 = vpack.c.b16 %v415, %v411
      %v524 = vpack.c.b16 %v420, %v416
      %v525 = vpack.c.b16 %v421, %v417
      %v526 = vpack.c.b16 %v422, %v418
      %v527 = vpack.c.b16 %v423, %v419
      %v528 = vpack.c.b16 %v428, %v424
      %v529 = vpack.c.b16 %v429, %v425
      %v530 = vpack.c.b16 %v430, %v426
      %v531 = vpack.c.b16 %v431, %v427
      %v532 = vpack.c.b16 %v436, %v432
      %v533 = vpack.c.b16 %v437, %v433
      %v534 = vpack.c.b16 %v438, %v434
      %v535 = vpack.c.b16 %v439, %v435
      %v536 = vpack.c.b16 %v444, %v440
      %v537 = vpack.c.b16 %v445, %v441
      %v538 = vpack.c.b16 %v446, %v442
      %v539 = vpack.c.b16 %v447, %v443
      %v540 = vpack.c.b16 %v452, %v448
      %v541 = vpack.c.b16 %v453, %v449
      %v542 = vpack.c.b16 %v454, %v450
      %v543 = vpack.c.b16 %v455, %v451
      %v544 = vpack.c.b16 %v460, %v456
      %v545 = vpack.c.b16 %v461, %v457
      %v546 = vpack.c.b16 %v462, %v458
      %v547 = vpack.c.b16 %v463, %v459
      %v548 = vpack.c.b16 %v468, %v464
      %v549 = vpack.c.b16 %v469, %v465
      %v550 = vpack.c.b16 %v470, %v466
      %v551 = vpack.c.b16 %v471, %v467
      %v552 = vpack.c.b16 %v476, %v472
      %v553 = vpack.c.b16 %v477, %v473
      %v554 = vpack.c.b16 %v478, %v474
      %v555 = vpack.c.b16 %v479, %v475
      %v556 = vpack.c.b16 %v484, %v480
      %v557 = vpack.c.b16 %v485, %v481
      %v558 = vpack.c.b16 %v486, %v482
      %v559 = vpack.c.b16 %v487, %v483
      %v560 = vpack.c.b16 %v492, %v488
      %v561 = vpack.c.b16 %v493, %v489
      %v562 = vpack.c.b16 %v494, %v490
      %v563 = vpack.c.b16 %v495, %v491
      %v564 = vpack.c.b16 %v500, %v496
      %v565 = vpack.c.b16 %v501, %v497
      %v566 = vpack.c.b16 %v502, %v498
      %v567 = vpack.c.b16 %v503, %v499
      %v665 = vunpack.c.l.b16 %v263
      %v666 = vunpack.c.l.b16 %v264
      %v667 = vunpack.c.l.b16 %v265
      %v668 = vunpack.c.l.b16 %v266
      %v669 = vunpack.c.l.b16 %v267
      %v670 = vunpack.c.l.b16 %v268
      %v671 = vunpack.c.l.b16 %v269
      %v672 = vunpack.c.l.b16 %v270
      %v673 = vunpack.c.l.b16 %v271
      %v674 = vunpack.c.l.b16 %v272
      %v675 = vunpack.c.l.b16 %v273
      %v676 = vunpack.c.l.b16 %v274
      %v677 = vunpack.c.l.b16 %v275
      %v678 = vunpack.c.l.b16 %v276
      %v679 = vunpack.c.l.b16 %v277
      %v680 = vunpack.c.l.b16 %v278
      %v681 = vunpack.c.l.b16 %v279
      %v682 = vunpack.c.l.b16 %v280
      %v683 = vunpack.c.l.b16 %v281
      %v684 = vunpack.c.l.b16 %v282
      %v685 = vunpack.c.l.b16 %v283
      %v686 = vunpack.c.l.b16 %v284
      %v687 = vunpack.c.l.b16 %v285
      %v688 = vunpack.c.l.b16 %v286
      %v689 = vunpack.c.l.b16 %v287
      %v690 = vunpack.c.l.b16 %v288
      %v691 = vunpack.c.l.b16 %v289
      %v692 = vunpack.c.l.b16 %v290
      %v693 = vunpack.c.l.b16 %v291
      %v694 = vunpack.c.l.b16 %v292
      %v695 = vunpack.c.l.b16 %v293
      %v696 = vunpack.c.l.b16 %v294
      %v697 = vunpack.c.l.b16 %v295
      %v698 = vunpack.c.l.b16 %v296
      %v699 = vunpack.c.l.b16 %v297
      %v700 = vunpack.c.l.b16 %v298
      %v701 = vunpack.c.l.b16 %v299
      %v702 = vunpack.c.l.b16 %v300
      %v703 = vunpack.c.l.b16 %v301
      %v704 = vunpack.c.l.b16 %v302
      %v705 = vunpack.c.l.b16 %v303
      %v706 = vunpack.c.l.b16 %v304
      %v707 = vunpack.c.l.b16 %v305
      %v708 = vunpack.c.l.b16 %v306
      %v709 = vunpack.c.l.b16 %v307
      %v710 = vunpack.c.l.b16 %v308
      %v711 = vunpack.c.l.b16 %v309
      %v712 = vunpack.c.l.b16 %v310
      %v713 = vunpack.c.l.b16 %v311
      %v714 = vpack.c.b16 %v666, %v665
      %v715 = vpack.c.b16 %v668, %v667
      %v716 = vpack.c.b16 %v670, %v669
      %v717 = vpack.c.b16 %v672, %v671
      %v718 = vpack.c.b16 %v674, %v673
      %v719 = vpack.c.b16 %v676, %v675
      %v720 = vpack.c.b16 %v678, %v677
      %v721 = vpack.c.b16 %v680, %v679
      %v722 = vpack.c.b16 %v682, %v681
      %v723 = vpack.c.b16 %v684, %v683
      %v724 = vpack.c.b16 %v686, %v685
      %v725 = vpack.c.b16 %v688, %v687
      %v726 = vpack.c.b16 %v690, %v689
      %v727 = vpack.c.b16 %v692, %v691
      %v728 = vpack.c.b16 %v694, %v693
      %v729 = vpack.c.b16 %v696, %v695
      %v730 = vpack.c.b16 %v698, %v697
      %v731 = vpack.c.b16 %v700, %v699
      %v732 = vpack.c.b16 %v702, %v701
      %v733 = vpack.c.b16 %v704, %v703
      %v734 = vpack.c.b16 %v706, %v705
      %v735 = vpack.c.b16 %v708, %v707
      %v736 = vpack.c.b16 %v710, %v709
      %v737 = vpack.c.b16 %v712, %v711
      %v738 = vpack.c.b16 %v713, %v713
      %vm763 = vcmask 64512
      %v765 = vsel %vm763, %v507, 0
      %v768 = vsel %vm763, %v511, 0
      %v771 = vsel %vm763, %v515, 0
      %v774 = vsel %vm763, %v519, 0
      %v777 = vsel %vm763, %v523, 0
      %v780 = vsel %vm763, %v527, 0
      %v783 = vsel %vm763, %v531, 0
      %v786 = vsel %vm763, %v535, 0
      %v789 = vsel %vm763, %v539, 0
      %v792 = vsel %vm763, %v543, 0
      %v795 = vsel %vm763, %v547, 0
      %v798 = vsel %vm763, %v551, 0
      %v801 = vsel %vm763, %v555, 0
      %v804 = vsel %vm763, %v559, 0
      %v807 = vsel %vm763, %v563, 0
      %v810 = vsel %vm763, %v567, 0
      %vm812 = vcmask 1043456
      %v814 = vsel %vm812, %v738, 0
      %816 = vmatpush.bf16.msra.mxu0 %v721
      %817 = vmatpush.bf16.msra.mxu0 %v720
      %818 = vmatpush.bf16.msra.mxu0 %v719
      %819 = vmatpush.bf16.msra.mxu0 %v718
      %820 = vmatpush.bf16.msra.mxu0 %v717
      %821 = vmatpush.bf16.msra.mxu0 %v716
      %822 = vmatpush.bf16.msra.mxu0 %v715
      %823 = vmatpush.bf16.msra.mxu0 %v714
      %824 = vmatmul.bf16.gmra.mxu0 %v504
      %v825 = vpop.f32.mrf.mxu0
      %v826 = vadd.f32 0.0, %v825
      %v827 = vpop.f32.mrf.mxu0
      %v828 = vadd.f32 0.0, %v827
      %829 = vmatmul.bf16.gmra.mxu0 %v508
      %v830 = vpop.f32.mrf.mxu0
      %v831 = vadd.f32 0.0, %v830
      %v832 = vpop.f32.mrf.mxu0
      %v833 = vadd.f32 0.0, %v832
      %834 = vmatmul.bf16.gmra.mxu0 %v512
      %v835 = vpop.f32.mrf.mxu0
      %v836 = vadd.f32 0.0, %v835
      %v837 = vpop.f32.mrf.mxu0
      %v838 = vadd.f32 0.0, %v837
      %839 = vmatmul.bf16.gmra.mxu0 %v516
      %v840 = vpop.f32.mrf.mxu0
      %v841 = vadd.f32 0.0, %v840
      %v842 = vpop.f32.mrf.mxu0
      %v843 = vadd.f32 0.0, %v842
      %844 = vmatmul.bf16.gmra.mxu0 %v520
      %v845 = vpop.f32.mrf.mxu0
      %v846 = vadd.f32 0.0, %v845
      %v847 = vpop.f32.mrf.mxu0
      %v848 = vadd.f32 0.0, %v847
      %849 = vmatmul.bf16.gmra.mxu0 %v524
      %v850 = vpop.f32.mrf.mxu0
      %v851 = vadd.f32 0.0, %v850
      %v852 = vpop.f32.mrf.mxu0
      %v853 = vadd.f32 0.0, %v852
      %854 = vmatmul.bf16.gmra.mxu0 %v528
      %v855 = vpop.f32.mrf.mxu0
      %v856 = vadd.f32 0.0, %v855
      %v857 = vpop.f32.mrf.mxu0
      %v858 = vadd.f32 0.0, %v857
      %859 = vmatmul.bf16.gmra.mxu0 %v532
      %v860 = vpop.f32.mrf.mxu0
      %v861 = vadd.f32 0.0, %v860
      %v862 = vpop.f32.mrf.mxu0
      %v863 = vadd.f32 0.0, %v862
      %864 = vmatmul.bf16.gmra.mxu0 %v536
      %v865 = vpop.f32.mrf.mxu0
      %v866 = vadd.f32 0.0, %v865
      %v867 = vpop.f32.mrf.mxu0
      %v868 = vadd.f32 0.0, %v867
      %869 = vmatmul.bf16.gmra.mxu0 %v540
      %v870 = vpop.f32.mrf.mxu0
      %v871 = vadd.f32 0.0, %v870
      %v872 = vpop.f32.mrf.mxu0
      %v873 = vadd.f32 0.0, %v872
      %874 = vmatmul.bf16.gmra.mxu0 %v544
      %v875 = vpop.f32.mrf.mxu0
      %v876 = vadd.f32 0.0, %v875
      %v877 = vpop.f32.mrf.mxu0
      %v878 = vadd.f32 0.0, %v877
      %879 = vmatmul.bf16.gmra.mxu0 %v548
      %v880 = vpop.f32.mrf.mxu0
      %v881 = vadd.f32 0.0, %v880
      %v882 = vpop.f32.mrf.mxu0
      %v883 = vadd.f32 0.0, %v882
      %884 = vmatmul.bf16.gmra.mxu0 %v552
      %v885 = vpop.f32.mrf.mxu0
      %v886 = vadd.f32 0.0, %v885
      %v887 = vpop.f32.mrf.mxu0
      %v888 = vadd.f32 0.0, %v887
      %889 = vmatmul.bf16.gmra.mxu0 %v556
      %v890 = vpop.f32.mrf.mxu0
      %v891 = vadd.f32 0.0, %v890
      %v892 = vpop.f32.mrf.mxu0
      %v893 = vadd.f32 0.0, %v892
      %894 = vmatmul.bf16.gmra.mxu0 %v560
      %v895 = vpop.f32.mrf.mxu0
      %v896 = vadd.f32 0.0, %v895
      %v897 = vpop.f32.mrf.mxu0
      %v898 = vadd.f32 0.0, %v897
      %899 = vmatmul.bf16.gmra.mxu0 %v564
      %v900 = vpop.f32.mrf.mxu0
      %v901 = vadd.f32 0.0, %v900
      %v902 = vpop.f32.mrf.mxu0
      %v903 = vadd.f32 0.0, %v902
      %904 = vdwg.mxu0
      %905 = vmatpush.bf16.msra.mxu0 %v729
      %906 = vmatpush.bf16.msra.mxu0 %v728
      %907 = vmatpush.bf16.msra.mxu0 %v727
      %908 = vmatpush.bf16.msra.mxu0 %v726
      %909 = vmatpush.bf16.msra.mxu0 %v725
      %910 = vmatpush.bf16.msra.mxu0 %v724
      %911 = vmatpush.bf16.msra.mxu0 %v723
      %912 = vmatpush.bf16.msra.mxu0 %v722
      %913 = vmatmul.bf16.gmra.mxu0 %v505
      %v914 = vpop.f32.mrf.mxu0
      %v915 = vadd.f32 %v826, %v914
      %v916 = vpop.f32.mrf.mxu0
      %v917 = vadd.f32 %v828, %v916
      %918 = vmatmul.bf16.gmra.mxu0 %v509
      %v919 = vpop.f32.mrf.mxu0
      %v920 = vadd.f32 %v831, %v919
      %v921 = vpop.f32.mrf.mxu0
      %v922 = vadd.f32 %v833, %v921
      %923 = vmatmul.bf16.gmra.mxu0 %v513
      %v924 = vpop.f32.mrf.mxu0
      %v925 = vadd.f32 %v836, %v924
      %v926 = vpop.f32.mrf.mxu0
      %v927 = vadd.f32 %v838, %v926
      %928 = vmatmul.bf16.gmra.mxu0 %v517
      %v929 = vpop.f32.mrf.mxu0
      %v930 = vadd.f32 %v841, %v929
      %v931 = vpop.f32.mrf.mxu0
      %v932 = vadd.f32 %v843, %v931
      %933 = vmatmul.bf16.gmra.mxu0 %v521
      %v934 = vpop.f32.mrf.mxu0
      %v935 = vadd.f32 %v846, %v934
      %v936 = vpop.f32.mrf.mxu0
      %v937 = vadd.f32 %v848, %v936
      %938 = vmatmul.bf16.gmra.mxu0 %v525
      %v939 = vpop.f32.mrf.mxu0
      %v940 = vadd.f32 %v851, %v939
      %v941 = vpop.f32.mrf.mxu0
      %v942 = vadd.f32 %v853, %v941
      %943 = vmatmul.bf16.gmra.mxu0 %v529
      %v944 = vpop.f32.mrf.mxu0
      %v945 = vadd.f32 %v856, %v944
      %v946 = vpop.f32.mrf.mxu0
      %v947 = vadd.f32 %v858, %v946
      %948 = vmatmul.bf16.gmra.mxu0 %v533
      %v949 = vpop.f32.mrf.mxu0
      %v950 = vadd.f32 %v861, %v949
      %v951 = vpop.f32.mrf.mxu0
      %v952 = vadd.f32 %v863, %v951
      %953 = vmatmul.bf16.gmra.mxu0 %v537
      %v954 = vpop.f32.mrf.mxu0
      %v955 = vadd.f32 %v866, %v954
      %v956 = vpop.f32.mrf.mxu0
      %v957 = vadd.f32 %v868, %v956
      %958 = vmatmul.bf16.gmra.mxu0 %v541
      %v959 = vpop.f32.mrf.mxu0
      %v960 = vadd.f32 %v871, %v959
      %v961 = vpop.f32.mrf.mxu0
      %v962 = vadd.f32 %v873, %v961
      %963 = vmatmul.bf16.gmra.mxu0 %v545
      %v964 = vpop.f32.mrf.mxu0
      %v965 = vadd.f32 %v876, %v964
      %v966 = vpop.f32.mrf.mxu0
      %v967 = vadd.f32 %v878, %v966
      %968 = vmatmul.bf16.gmra.mxu0 %v549
      %v969 = vpop.f32.mrf.mxu0
      %v970 = vadd.f32 %v881, %v969
      %v971 = vpop.f32.mrf.mxu0
      %v972 = vadd.f32 %v883, %v971
      %973 = vmatmul.bf16.gmra.mxu0 %v553
      %v974 = vpop.f32.mrf.mxu0
      %v975 = vadd.f32 %v886, %v974
      %v976 = vpop.f32.mrf.mxu0
      %v977 = vadd.f32 %v888, %v976
      %978 = vmatmul.bf16.gmra.mxu0 %v557
      %v979 = vpop.f32.mrf.mxu0
      %v980 = vadd.f32 %v891, %v979
      %v981 = vpop.f32.mrf.mxu0
      %v982 = vadd.f32 %v893, %v981
      %983 = vmatmul.bf16.gmra.mxu0 %v561
      %v984 = vpop.f32.mrf.mxu0
      %v985 = vadd.f32 %v896, %v984
      %v986 = vpop.f32.mrf.mxu0
      %v987 = vadd.f32 %v898, %v986
      %988 = vmatmul.bf16.gmra.mxu0 %v565
      %v989 = vpop.f32.mrf.mxu0
      %v990 = vadd.f32 %v901, %v989
      %v991 = vpop.f32.mrf.mxu0
      %v992 = vadd.f32 %v903, %v991
      %993 = vdwg.mxu0
      %994 = vmatpush.bf16.msra.mxu0 %v737
      %995 = vmatpush.bf16.msra.mxu0 %v736
      %996 = vmatpush.bf16.msra.mxu0 %v735
      %997 = vmatpush.bf16.msra.mxu0 %v734
      %998 = vmatpush.bf16.msra.mxu0 %v733
      %999 = vmatpush.bf16.msra.mxu0 %v732
      %1000 = vmatpush.bf16.msra.mxu0 %v731
      %1001 = vmatpush.bf16.msra.mxu0 %v730
      %1002 = vmatmul.bf16.gmra.mxu0 %v506
      %v1003 = vpop.f32.mrf.mxu0
      %v1004 = vadd.f32 %v915, %v1003
      %v1005 = vpop.f32.mrf.mxu0
      %v1006 = vadd.f32 %v917, %v1005
      %1007 = vmatmul.bf16.gmra.mxu0 %v510
      %v1008 = vpop.f32.mrf.mxu0
      %v1009 = vadd.f32 %v920, %v1008
      %v1010 = vpop.f32.mrf.mxu0
      %v1011 = vadd.f32 %v922, %v1010
      %1012 = vmatmul.bf16.gmra.mxu0 %v514
      %v1013 = vpop.f32.mrf.mxu0
      %v1014 = vadd.f32 %v925, %v1013
      %v1015 = vpop.f32.mrf.mxu0
      %v1016 = vadd.f32 %v927, %v1015
      %1017 = vmatmul.bf16.gmra.mxu0 %v518
      %v1018 = vpop.f32.mrf.mxu0
      %v1019 = vadd.f32 %v930, %v1018
      %v1020 = vpop.f32.mrf.mxu0
      %v1021 = vadd.f32 %v932, %v1020
      %1022 = vmatmul.bf16.gmra.mxu0 %v522
      %v1023 = vpop.f32.mrf.mxu0
      %v1024 = vadd.f32 %v935, %v1023
      %v1025 = vpop.f32.mrf.mxu0
      %v1026 = vadd.f32 %v937, %v1025
      %1027 = vmatmul.bf16.gmra.mxu0 %v526
      %v1028 = vpop.f32.mrf.mxu0
      %v1029 = vadd.f32 %v940, %v1028
      %v1030 = vpop.f32.mrf.mxu0
      %v1031 = vadd.f32 %v942, %v1030
      %1032 = vmatmul.bf16.gmra.mxu0 %v530
      %v1033 = vpop.f32.mrf.mxu0
      %v1034 = vadd.f32 %v945, %v1033
      %v1035 = vpop.f32.mrf.mxu0
      %v1036 = vadd.f32 %v947, %v1035
      %1037 = vmatmul.bf16.gmra.mxu0 %v534
      %v1038 = vpop.f32.mrf.mxu0
      %v1039 = vadd.f32 %v950, %v1038
      %v1040 = vpop.f32.mrf.mxu0
      %v1041 = vadd.f32 %v952, %v1040
      %1042 = vmatmul.bf16.gmra.mxu0 %v538
      %v1043 = vpop.f32.mrf.mxu0
      %v1044 = vadd.f32 %v955, %v1043
      %v1045 = vpop.f32.mrf.mxu0
      %v1046 = vadd.f32 %v957, %v1045
      %1047 = vmatmul.bf16.gmra.mxu0 %v542
      %v1048 = vpop.f32.mrf.mxu0
      %v1049 = vadd.f32 %v960, %v1048
      %v1050 = vpop.f32.mrf.mxu0
      %v1051 = vadd.f32 %v962, %v1050
      %1052 = vmatmul.bf16.gmra.mxu0 %v546
      %v1053 = vpop.f32.mrf.mxu0
      %v1054 = vadd.f32 %v965, %v1053
      %v1055 = vpop.f32.mrf.mxu0
      %v1056 = vadd.f32 %v967, %v1055
      %1057 = vmatmul.bf16.gmra.mxu0 %v550
      %v1058 = vpop.f32.mrf.mxu0
      %v1059 = vadd.f32 %v970, %v1058
      %v1060 = vpop.f32.mrf.mxu0
      %v1061 = vadd.f32 %v972, %v1060
      %1062 = vmatmul.bf16.gmra.mxu0 %v554
      %v1063 = vpop.f32.mrf.mxu0
      %v1064 = vadd.f32 %v975, %v1063
      %v1065 = vpop.f32.mrf.mxu0
      %v1066 = vadd.f32 %v977, %v1065
      %1067 = vmatmul.bf16.gmra.mxu0 %v558
      %v1068 = vpop.f32.mrf.mxu0
      %v1069 = vadd.f32 %v980, %v1068
      %v1070 = vpop.f32.mrf.mxu0
      %v1071 = vadd.f32 %v982, %v1070
      %1072 = vmatmul.bf16.gmra.mxu0 %v562
      %v1073 = vpop.f32.mrf.mxu0
      %v1074 = vadd.f32 %v985, %v1073
      %v1075 = vpop.f32.mrf.mxu0
      %v1076 = vadd.f32 %v987, %v1075
      %1077 = vmatmul.bf16.gmra.mxu0 %v566
      %v1078 = vpop.f32.mrf.mxu0
      %v1079 = vadd.f32 %v990, %v1078
      %v1080 = vpop.f32.mrf.mxu0
      %v1081 = vadd.f32 %v992, %v1080
      %1082 = vdwg.mxu0
      %1083 = vmatpush.bf16.msra.mxu0 0
      %1084 = vmatpush.bf16.msra.mxu0 0
      %1085 = vmatpush.bf16.msra.mxu0 0
      %1086 = vmatpush.bf16.msra.mxu0 0
      %1087 = vmatpush.bf16.msra.mxu0 0
      %1088 = vmatpush.bf16.msra.mxu0 0
      %1089 = vmatpush.bf16.msra.mxu0 0
      %1090 = vmatpush.bf16.msra.mxu0 %v814
      %1091 = vmatmul.bf16.gmra.mxu0 %v765
      %v1092 = vpop.f32.mrf.mxu0
      %v1093 = vadd.f32 %v1004, %v1092
      %v1094 = vpop.f32.mrf.mxu0
      %v1095 = vadd.f32 %v1006, %v1094
      %1096 = vmatmul.bf16.gmra.mxu0 %v768
      %v1097 = vpop.f32.mrf.mxu0
      %v1098 = vadd.f32 %v1009, %v1097
      %v1099 = vpop.f32.mrf.mxu0
      %v1100 = vadd.f32 %v1011, %v1099
      %1101 = vmatmul.bf16.gmra.mxu0 %v771
      %v1102 = vpop.f32.mrf.mxu0
      %v1103 = vadd.f32 %v1014, %v1102
      %v1104 = vpop.f32.mrf.mxu0
      %v1105 = vadd.f32 %v1016, %v1104
      %1106 = vmatmul.bf16.gmra.mxu0 %v774
      %v1107 = vpop.f32.mrf.mxu0
      %v1108 = vadd.f32 %v1019, %v1107
      %v1109 = vpop.f32.mrf.mxu0
      %v1110 = vadd.f32 %v1021, %v1109
      %1111 = vmatmul.bf16.gmra.mxu0 %v777
      %v1112 = vpop.f32.mrf.mxu0
      %v1113 = vadd.f32 %v1024, %v1112
      %v1114 = vpop.f32.mrf.mxu0
      %v1115 = vadd.f32 %v1026, %v1114
      %1116 = vmatmul.bf16.gmra.mxu0 %v780
      %v1117 = vpop.f32.mrf.mxu0
      %v1118 = vadd.f32 %v1029, %v1117
      %v1119 = vpop.f32.mrf.mxu0
      %v1120 = vadd.f32 %v1031, %v1119
      %1121 = vmatmul.bf16.gmra.mxu0 %v783
      %v1122 = vpop.f32.mrf.mxu0
      %v1123 = vadd.f32 %v1034, %v1122
      %v1124 = vpop.f32.mrf.mxu0
      %v1125 = vadd.f32 %v1036, %v1124
      %1126 = vmatmul.bf16.gmra.mxu0 %v786
      %v1127 = vpop.f32.mrf.mxu0
      %v1128 = vadd.f32 %v1039, %v1127
      %v1129 = vpop.f32.mrf.mxu0
      %v1130 = vadd.f32 %v1041, %v1129
      %1131 = vmatmul.bf16.gmra.mxu0 %v789
      %v1132 = vpop.f32.mrf.mxu0
      %v1133 = vadd.f32 %v1044, %v1132
      %v1134 = vpop.f32.mrf.mxu0
      %v1135 = vadd.f32 %v1046, %v1134
      %1136 = vmatmul.bf16.gmra.mxu0 %v792
      %v1137 = vpop.f32.mrf.mxu0
      %v1138 = vadd.f32 %v1049, %v1137
      %v1139 = vpop.f32.mrf.mxu0
      %v1140 = vadd.f32 %v1051, %v1139
      %1141 = vmatmul.bf16.gmra.mxu0 %v795
      %v1142 = vpop.f32.mrf.mxu0
      %v1143 = vadd.f32 %v1054, %v1142
      %v1144 = vpop.f32.mrf.mxu0
      %v1145 = vadd.f32 %v1056, %v1144
      %1146 = vmatmul.bf16.gmra.mxu0 %v798
      %v1147 = vpop.f32.mrf.mxu0
      %v1148 = vadd.f32 %v1059, %v1147
      %v1149 = vpop.f32.mrf.mxu0
      %v1150 = vadd.f32 %v1061, %v1149
      %1151 = vmatmul.bf16.gmra.mxu0 %v801
      %v1152 = vpop.f32.mrf.mxu0
      %v1153 = vadd.f32 %v1064, %v1152
      %v1154 = vpop.f32.mrf.mxu0
      %v1155 = vadd.f32 %v1066, %v1154
      %1156 = vmatmul.bf16.gmra.mxu0 %v804
      %v1157 = vpop.f32.mrf.mxu0
      %v1158 = vadd.f32 %v1069, %v1157
      %v1159 = vpop.f32.mrf.mxu0
      %v1160 = vadd.f32 %v1071, %v1159
      %1161 = vmatmul.bf16.gmra.mxu0 %v807
      %v1162 = vpop.f32.mrf.mxu0
      %v1163 = vadd.f32 %v1074, %v1162
      %v1164 = vpop.f32.mrf.mxu0
      %v1165 = vadd.f32 %v1076, %v1164
      %1166 = vmatmul.bf16.gmra.mxu0 %v810
      %v1167 = vpop.f32.mrf.mxu0
      %v1168 = vadd.f32 %v1079, %v1167
      %v1169 = vpop.f32.mrf.mxu0
      %v1170 = vadd.f32 %v1081, %v1169
      %1171 = vdwg.mxu0
      %v1172 = vld [vmem:[%s2] sm:$0x1]
      %v1173 = vld [vmem:[%s3] sm:$0x1]
      %v1174 = vsel %vm763, %v1093, 0.0
      %v1175 = vsel %vm763, %v1095, 0.0
      %v1176 = vadd.f32 %v1174, %v1175
      %v1177 = vsel %vm763, %v1098, 0.0
      %v1178 = vadd.f32 %v1176, %v1177
      %v1179 = vsel %vm763, %v1100, 0.0
      %v1180 = vadd.f32 %v1178, %v1179
      %v1181 = vsel %vm763, %v1103, 0.0
      %v1182 = vadd.f32 %v1180, %v1181
      %v1183 = vsel %vm763, %v1105, 0.0
      %v1184 = vadd.f32 %v1182, %v1183
      %v1185 = vsel %vm763, %v1108, 0.0
      %v1186 = vadd.f32 %v1184, %v1185
      %v1187 = vsel %vm763, %v1110, 0.0
      %v1188 = vadd.f32 %v1186, %v1187
      %v1189 = vsel %vm763, %v1113, 0.0
      %v1190 = vadd.f32 %v1188, %v1189
      %v1191 = vsel %vm763, %v1115, 0.0
      %v1192 = vadd.f32 %v1190, %v1191
      %v1193 = vsel %vm763, %v1118, 0.0
      %v1194 = vadd.f32 %v1192, %v1193
      %v1195 = vsel %vm763, %v1120, 0.0
      %v1196 = vadd.f32 %v1194, %v1195
      %v1197 = vsel %vm763, %v1123, 0.0
      %v1198 = vadd.f32 %v1196, %v1197
      %v1199 = vsel %vm763, %v1125, 0.0
      %v1200 = vadd.f32 %v1198, %v1199
      %v1201 = vsel %vm763, %v1128, 0.0
      %v1202 = vadd.f32 %v1200, %v1201
      %v1203 = vsel %vm763, %v1130, 0.0
      %v1204 = vadd.f32 %v1202, %v1203
      %v1205 = vsel %vm763, %v1133, 0.0
      %v1206 = vadd.f32 %v1204, %v1205
      %v1207 = vsel %vm763, %v1135, 0.0
      %v1208 = vadd.f32 %v1206, %v1207
      %v1209 = vsel %vm763, %v1138, 0.0
      %v1210 = vadd.f32 %v1208, %v1209
      %v1211 = vsel %vm763, %v1140, 0.0
      %v1212 = vadd.f32 %v1210, %v1211
      %v1213 = vsel %vm763, %v1143, 0.0
      %v1214 = vadd.f32 %v1212, %v1213
      %v1215 = vsel %vm763, %v1145, 0.0
      %v1216 = vadd.f32 %v1214, %v1215
      %v1217 = vsel %vm763, %v1148, 0.0
      %v1218 = vadd.f32 %v1216, %v1217
      %v1219 = vsel %vm763, %v1150, 0.0
      %v1220 = vadd.f32 %v1218, %v1219
      %v1221 = vsel %vm763, %v1153, 0.0
      %v1222 = vadd.f32 %v1220, %v1221
      %v1223 = vsel %vm763, %v1155, 0.0
      %v1224 = vadd.f32 %v1222, %v1223
      %v1225 = vsel %vm763, %v1158, 0.0
      %v1226 = vadd.f32 %v1224, %v1225
      %v1227 = vsel %vm763, %v1160, 0.0
      %v1228 = vadd.f32 %v1226, %v1227
      %v1229 = vsel %vm763, %v1163, 0.0
      %v1230 = vadd.f32 %v1228, %v1229
      %v1231 = vsel %vm763, %v1165, 0.0
      %v1232 = vadd.f32 %v1230, %v1231
      %v1233 = vsel %vm763, %v1168, 0.0
      %v1234 = vadd.f32 %v1232, %v1233
      %v1235 = vsel %vm763, %v1170, 0.0
      %v1236 = vadd.f32 %v1234, %v1235
      %v1237 = vrot.slane %v1236, 4
      %v1238 = vadd.f32 %v1236, %v1237
      %v1239 = vrot.slane %v1238, 2
      %v1240 = vadd.f32 %v1238, %v1239
      %v1241 = vrot.slane %v1240, 1
      %v1242 = vadd.f32 %v1240, %v1241
      %v1243 = vadd.f32 %v1242, 0.0
      %v1244 = vrcp.pop 256.0
      %v1245 = vmul.f32 256.0, %v1244
      %v1246 = vsub.f32 1.0, %v1245
      %v1247 = vmul.f32 %v1244, %v1246
      %v1248 = vadd.f32 %v1244, %v1247
      %vm1249 = vweird.f32 %v1244
      %v1250 = vsel %vm1249, %v1244, %v1248
      %v1251 = vmul.f32 %v1243, %v1250
      %v1252 = vsub.f32 %v1093, %v1251
      %v1253 = vsub.f32 %v1095, %v1251
      %v1254 = vsub.f32 %v1098, %v1251
      %v1255 = vsub.f32 %v1100, %v1251
      %v1256 = vsub.f32 %v1103, %v1251
      %v1257 = vsub.f32 %v1105, %v1251
      %v1258 = vsub.f32 %v1108, %v1251
      %v1259 = vsub.f32 %v1110, %v1251
      %v1260 = vsub.f32 %v1113, %v1251
      %v1261 = vsub.f32 %v1115, %v1251
      %v1262 = vsub.f32 %v1118, %v1251
      %v1263 = vsub.f32 %v1120, %v1251
      %v1264 = vsub.f32 %v1123, %v1251
      %v1265 = vsub.f32 %v1125, %v1251
      %v1266 = vsub.f32 %v1128, %v1251
      %v1267 = vsub.f32 %v1130, %v1251
      %v1268 = vsub.f32 %v1133, %v1251
      %v1269 = vsub.f32 %v1135, %v1251
      %v1270 = vsub.f32 %v1138, %v1251
      %v1271 = vsub.f32 %v1140, %v1251
      %v1272 = vsub.f32 %v1143, %v1251
      %v1273 = vsub.f32 %v1145, %v1251
      %v1274 = vsub.f32 %v1148, %v1251
      %v1275 = vsub.f32 %v1150, %v1251
      %v1276 = vsub.f32 %v1153, %v1251
      %v1277 = vsub.f32 %v1155, %v1251
      %v1278 = vsub.f32 %v1158, %v1251
      %v1279 = vsub.f32 %v1160, %v1251
      %v1280 = vsub.f32 %v1163, %v1251
      %v1281 = vsub.f32 %v1165, %v1251
      %v1282 = vsub.f32 %v1168, %v1251
      %v1283 = vsub.f32 %v1170, %v1251
      %v1284 = vmul.f32 %v1252, %v1252
      %v1285 = vmul.f32 %v1253, %v1253
      %v1286 = vmul.f32 %v1254, %v1254
      %v1287 = vmul.f32 %v1255, %v1255
      %v1288 = vmul.f32 %v1256, %v1256
      %v1289 = vmul.f32 %v1257, %v1257
      %v1290 = vmul.f32 %v1258, %v1258
      %v1291 = vmul.f32 %v1259, %v1259
      %v1292 = vmul.f32 %v1260, %v1260
      %v1293 = vmul.f32 %v1261, %v1261
      %v1294 = vmul.f32 %v1262, %v1262
      %v1295 = vmul.f32 %v1263, %v1263
      %v1296 = vmul.f32 %v1264, %v1264
      %v1297 = vmul.f32 %v1265, %v1265
      %v1298 = vmul.f32 %v1266, %v1266
      %v1299 = vmul.f32 %v1267, %v1267
      %v1300 = vmul.f32 %v1268, %v1268
      %v1301 = vmul.f32 %v1269, %v1269
      %v1302 = vmul.f32 %v1270, %v1270
      %v1303 = vmul.f32 %v1271, %v1271
      %v1304 = vmul.f32 %v1272, %v1272
      %v1305 = vmul.f32 %v1273, %v1273
      %v1306 = vmul.f32 %v1274, %v1274
      %v1307 = vmul.f32 %v1275, %v1275
      %v1308 = vmul.f32 %v1276, %v1276
      %v1309 = vmul.f32 %v1277, %v1277
      %v1310 = vmul.f32 %v1278, %v1278
      %v1311 = vmul.f32 %v1279, %v1279
      %v1312 = vmul.f32 %v1280, %v1280
      %v1313 = vmul.f32 %v1281, %v1281
      %v1314 = vmul.f32 %v1282, %v1282
      %v1315 = vmul.f32 %v1283, %v1283
      %v1316 = vsel %vm763, %v1284, 0.0
      %v1317 = vsel %vm763, %v1285, 0.0
      %v1318 = vadd.f32 %v1316, %v1317
      %v1319 = vsel %vm763, %v1286, 0.0
      %v1320 = vadd.f32 %v1318, %v1319
      %v1321 = vsel %vm763, %v1287, 0.0
      %v1322 = vadd.f32 %v1320, %v1321
      %v1323 = vsel %vm763, %v1288, 0.0
      %v1324 = vadd.f32 %v1322, %v1323
      %v1325 = vsel %vm763, %v1289, 0.0
      %v1326 = vadd.f32 %v1324, %v1325
      %v1327 = vsel %vm763, %v1290, 0.0
      %v1328 = vadd.f32 %v1326, %v1327
      %v1329 = vsel %vm763, %v1291, 0.0
      %v1330 = vadd.f32 %v1328, %v1329
      %v1331 = vsel %vm763, %v1292, 0.0
      %v1332 = vadd.f32 %v1330, %v1331
      %v1333 = vsel %vm763, %v1293, 0.0
      %v1334 = vadd.f32 %v1332, %v1333
      %v1335 = vsel %vm763, %v1294, 0.0
      %v1336 = vadd.f32 %v1334, %v1335
      %v1337 = vsel %vm763, %v1295, 0.0
      %v1338 = vadd.f32 %v1336, %v1337
      %v1339 = vsel %vm763, %v1296, 0.0
      %v1340 = vadd.f32 %v1338, %v1339
      %v1341 = vsel %vm763, %v1297, 0.0
      %v1342 = vadd.f32 %v1340, %v1341
      %v1343 = vsel %vm763, %v1298, 0.0
      %v1344 = vadd.f32 %v1342, %v1343
      %v1345 = vsel %vm763, %v1299, 0.0
      %v1346 = vadd.f32 %v1344, %v1345
      %v1347 = vsel %vm763, %v1300, 0.0
      %v1348 = vadd.f32 %v1346, %v1347
      %v1349 = vsel %vm763, %v1301, 0.0
      %v1350 = vadd.f32 %v1348, %v1349
      %v1351 = vsel %vm763, %v1302, 0.0
      %v1352 = vadd.f32 %v1350, %v1351
      %v1353 = vsel %vm763, %v1303, 0.0
      %v1354 = vadd.f32 %v1352, %v1353
      %v1355 = vsel %vm763, %v1304, 0.0
      %v1356 = vadd.f32 %v1354, %v1355
      %v1357 = vsel %vm763, %v1305, 0.0
      %v1358 = vadd.f32 %v1356, %v1357
      %v1359 = vsel %vm763, %v1306, 0.0
      %v1360 = vadd.f32 %v1358, %v1359
      %v1361 = vsel %vm763, %v1307, 0.0
      %v1362 = vadd.f32 %v1360, %v1361
      %v1363 = vsel %vm763, %v1308, 0.0
      %v1364 = vadd.f32 %v1362, %v1363
      %v1365 = vsel %vm763, %v1309, 0.0
      %v1366 = vadd.f32 %v1364, %v1365
      %v1367 = vsel %vm763, %v1310, 0.0
      %v1368 = vadd.f32 %v1366, %v1367
      %v1369 = vsel %vm763, %v1311, 0.0
      %v1370 = vadd.f32 %v1368, %v1369
      %v1371 = vsel %vm763, %v1312, 0.0
      %v1372 = vadd.f32 %v1370, %v1371
      %v1373 = vsel %vm763, %v1313, 0.0
      %v1374 = vadd.f32 %v1372, %v1373
      %v1375 = vsel %vm763, %v1314, 0.0
      %v1376 = vadd.f32 %v1374, %v1375
      %v1377 = vsel %vm763, %v1315, 0.0
      %v1378 = vadd.f32 %v1376, %v1377
      %v1379 = vrot.slane %v1378, 4
      %v1380 = vadd.f32 %v1378, %v1379
      %v1381 = vrot.slane %v1380, 2
      %v1382 = vadd.f32 %v1380, %v1381
      %v1383 = vrot.slane %v1382, 1
      %v1384 = vadd.f32 %v1382, %v1383
      %v1385 = vadd.f32 %v1384, 0.0
      %v1386 = vmul.f32 %v1385, %v1250
      %v1387 = vadd.f32 %v1386, 1e-05
      %v1388 = vrsqrt.pop %v1387
      %v1389 = vmul.f32 %v1388, %v1387
      %v1390 = vmul.f32 %v1389, %v1388
      %v1391 = vmul.f32 0.5, %v1390
      %v1392 = vsub.f32 1.5, %v1391
      %v1393 = vmul.f32 %v1388, %v1392
      %vm1394 = vweird.f32 %v1387
      %vm1395 = vweird.f32 %v1388
      %vm1396 = vmor %vm1394, %vm1395
      %v1397 = vsel %vm1396, %v1388, %v1393
      %v1398 = vmul.f32 %v1252, %v1397
      %v1399 = vmul.f32 %v1253, %v1397
      %v1400 = vmul.f32 %v1254, %v1397
      %v1401 = vmul.f32 %v1255, %v1397
      %v1402 = vmul.f32 %v1256, %v1397
      %v1403 = vmul.f32 %v1257, %v1397
      %v1404 = vmul.f32 %v1258, %v1397
      %v1405 = vmul.f32 %v1259, %v1397
      %v1406 = vmul.f32 %v1260, %v1397
      %v1407 = vmul.f32 %v1261, %v1397
      %v1408 = vmul.f32 %v1262, %v1397
      %v1409 = vmul.f32 %v1263, %v1397
      %v1410 = vmul.f32 %v1264, %v1397
      %v1411 = vmul.f32 %v1265, %v1397
      %v1412 = vmul.f32 %v1266, %v1397
      %v1413 = vmul.f32 %v1267, %v1397
      %v1414 = vmul.f32 %v1268, %v1397
      %v1415 = vmul.f32 %v1269, %v1397
      %v1416 = vmul.f32 %v1270, %v1397
      %v1417 = vmul.f32 %v1271, %v1397
      %v1418 = vmul.f32 %v1272, %v1397
      %v1419 = vmul.f32 %v1273, %v1397
      %v1420 = vmul.f32 %v1274, %v1397
      %v1421 = vmul.f32 %v1275, %v1397
      %v1422 = vmul.f32 %v1276, %v1397
      %v1423 = vmul.f32 %v1277, %v1397
      %v1424 = vmul.f32 %v1278, %v1397
      %v1425 = vmul.f32 %v1279, %v1397
      %v1426 = vmul.f32 %v1280, %v1397
      %v1427 = vmul.f32 %v1281, %v1397
      %v1428 = vmul.f32 %v1282, %v1397
      %v1429 = vmul.f32 %v1283, %v1397
      %v1431 = vperm.slane %v1172, 0
      %v1433 = vmul.f32 %v1398, %v1431
      %v1434 = vmul.f32 %v1399, %v1431
      %v1435 = vmul.f32 %v1400, %v1431
      %v1436 = vmul.f32 %v1401, %v1431
      %v1437 = vmul.f32 %v1402, %v1431
      %v1438 = vmul.f32 %v1403, %v1431
      %v1439 = vmul.f32 %v1404, %v1431
      %v1440 = vmul.f32 %v1405, %v1431
      %v1441 = vmul.f32 %v1406, %v1431
      %v1442 = vmul.f32 %v1407, %v1431
      %v1443 = vmul.f32 %v1408, %v1431
      %v1444 = vmul.f32 %v1409, %v1431
      %v1445 = vmul.f32 %v1410, %v1431
      %v1446 = vmul.f32 %v1411, %v1431
      %v1447 = vmul.f32 %v1412, %v1431
      %v1448 = vmul.f32 %v1413, %v1431
      %v1449 = vmul.f32 %v1414, %v1431
      %v1450 = vmul.f32 %v1415, %v1431
      %v1451 = vmul.f32 %v1416, %v1431
      %v1452 = vmul.f32 %v1417, %v1431
      %v1453 = vmul.f32 %v1418, %v1431
      %v1454 = vmul.f32 %v1419, %v1431
      %v1455 = vmul.f32 %v1420, %v1431
      %v1456 = vmul.f32 %v1421, %v1431
      %v1457 = vmul.f32 %v1422, %v1431
      %v1458 = vmul.f32 %v1423, %v1431
      %v1459 = vmul.f32 %v1424, %v1431
      %v1460 = vmul.f32 %v1425, %v1431
      %v1461 = vmul.f32 %v1426, %v1431
      %v1462 = vmul.f32 %v1427, %v1431
      %v1463 = vmul.f32 %v1428, %v1431
      %v1464 = vmul.f32 %v1429, %v1431
      %v1466 = vperm.slane %v1173, 0
      %v1468 = vadd.f32 %v1433, %v1466
      %v1469 = vadd.f32 %v1434, %v1466
      %v1470 = vadd.f32 %v1435, %v1466
      %v1471 = vadd.f32 %v1436, %v1466
      %v1472 = vadd.f32 %v1437, %v1466
      %v1473 = vadd.f32 %v1438, %v1466
      %v1474 = vadd.f32 %v1439, %v1466
      %v1475 = vadd.f32 %v1440, %v1466
      %v1476 = vadd.f32 %v1441, %v1466
      %v1477 = vadd.f32 %v1442, %v1466
      %v1478 = vadd.f32 %v1443, %v1466
      %v1479 = vadd.f32 %v1444, %v1466
      %v1480 = vadd.f32 %v1445, %v1466
      %v1481 = vadd.f32 %v1446, %v1466
      %v1482 = vadd.f32 %v1447, %v1466
      %v1483 = vadd.f32 %v1448, %v1466
      %v1484 = vadd.f32 %v1449, %v1466
      %v1485 = vadd.f32 %v1450, %v1466
      %v1486 = vadd.f32 %v1451, %v1466
      %v1487 = vadd.f32 %v1452, %v1466
      %v1488 = vadd.f32 %v1453, %v1466
      %v1489 = vadd.f32 %v1454, %v1466
      %v1490 = vadd.f32 %v1455, %v1466
      %v1491 = vadd.f32 %v1456, %v1466
      %v1492 = vadd.f32 %v1457, %v1466
      %v1493 = vadd.f32 %v1458, %v1466
      %v1494 = vadd.f32 %v1459, %v1466
      %v1495 = vadd.f32 %v1460, %v1466
      %v1496 = vadd.f32 %v1461, %v1466
      %v1497 = vadd.f32 %v1462, %v1466
      %v1498 = vadd.f32 %v1463, %v1466
      %v1499 = vadd.f32 %v1464, %v1466
      %v1500 = vmax.f32 %v1468, 0.0
      %v1501 = vmax.f32 %v1469, 0.0
      %v1502 = vmax.f32 %v1470, 0.0
      %v1503 = vmax.f32 %v1471, 0.0
      %v1504 = vmax.f32 %v1472, 0.0
      %v1505 = vmax.f32 %v1473, 0.0
      %v1506 = vmax.f32 %v1474, 0.0
      %v1507 = vmax.f32 %v1475, 0.0
      %v1508 = vmax.f32 %v1476, 0.0
      %v1509 = vmax.f32 %v1477, 0.0
      %v1510 = vmax.f32 %v1478, 0.0
      %v1511 = vmax.f32 %v1479, 0.0
      %v1512 = vmax.f32 %v1480, 0.0
      %v1513 = vmax.f32 %v1481, 0.0
      %v1514 = vmax.f32 %v1482, 0.0
      %v1515 = vmax.f32 %v1483, 0.0
      %v1516 = vmax.f32 %v1484, 0.0
      %v1517 = vmax.f32 %v1485, 0.0
      %v1518 = vmax.f32 %v1486, 0.0
      %v1519 = vmax.f32 %v1487, 0.0
      %v1520 = vmax.f32 %v1488, 0.0
      %v1521 = vmax.f32 %v1489, 0.0
      %v1522 = vmax.f32 %v1490, 0.0
      %v1523 = vmax.f32 %v1491, 0.0
      %v1524 = vmax.f32 %v1492, 0.0
      %v1525 = vmax.f32 %v1493, 0.0
      %v1526 = vmax.f32 %v1494, 0.0
      %v1527 = vmax.f32 %v1495, 0.0
      %v1528 = vmax.f32 %v1496, 0.0
      %v1529 = vmax.f32 %v1497, 0.0
      %v1530 = vmax.f32 %v1498, 0.0
      %v1531 = vmax.f32 %v1499, 0.0
      %1532 = vst.msk [vmem:[%s197] sm:$0xff] %vm763, %v1500
      %1533 = vst.msk [vmem:[%s197 + $0x8] sm:$0xff] %vm763, %v1501
      %1534 = vst.msk [vmem:[%s197 + $0x10] sm:$0xff] %vm763, %v1502
      %1535 = vst.msk [vmem:[%s197 + $0x18] sm:$0xff] %vm763, %v1503
      %1536 = vst.msk [vmem:[%s197 + $0x20] sm:$0xff] %vm763, %v1504
      %1537 = vst.msk [vmem:[%s197 + $0x28] sm:$0xff] %vm763, %v1505
      %1538 = vst.msk [vmem:[%s197 + $0x30] sm:$0xff] %vm763, %v1506
      %1539 = vst.msk [vmem:[%s197 + $0x38] sm:$0xff] %vm763, %v1507
      %1540 = vst.msk [vmem:[%s197 + $0x40] sm:$0xff] %vm763, %v1508
      %1541 = vst.msk [vmem:[%s197 + $0x48] sm:$0xff] %vm763, %v1509
      %1542 = vst.msk [vmem:[%s197 + $0x50] sm:$0xff] %vm763, %v1510
      %1543 = vst.msk [vmem:[%s197 + $0x58] sm:$0xff] %vm763, %v1511
      %1544 = vst.msk [vmem:[%s197 + $0x60] sm:$0xff] %vm763, %v1512
      %1545 = vst.msk [vmem:[%s197 + $0x68] sm:$0xff] %vm763, %v1513
      %1546 = vst.msk [vmem:[%s197 + $0x70] sm:$0xff] %vm763, %v1514
      %1547 = vst.msk [vmem:[%s197 + $0x78] sm:$0xff] %vm763, %v1515
      %1548 = vst.msk [vmem:[%s197 + $0x80] sm:$0xff] %vm763, %v1516
      %1549 = vst.msk [vmem:[%s197 + $0x88] sm:$0xff] %vm763, %v1517
      %1550 = vst.msk [vmem:[%s197 + $0x90] sm:$0xff] %vm763, %v1518
      %1551 = vst.msk [vmem:[%s197 + $0x98] sm:$0xff] %vm763, %v1519
      %1552 = vst.msk [vmem:[%s197 + $0xa0] sm:$0xff] %vm763, %v1520
      %1553 = vst.msk [vmem:[%s197 + $0xa8] sm:$0xff] %vm763, %v1521
      %1554 = vst.msk [vmem:[%s197 + $0xb0] sm:$0xff] %vm763, %v1522
      %1555 = vst.msk [vmem:[%s197 + $0xb8] sm:$0xff] %vm763, %v1523
      %1556 = vst.msk [vmem:[%s197 + $0xc0] sm:$0xff] %vm763, %v1524
      %1557 = vst.msk [vmem:[%s197 + $0xc8] sm:$0xff] %vm763, %v1525
      %1558 = vst.msk [vmem:[%s197 + $0xd0] sm:$0xff] %vm763, %v1526
      %1559 = vst.msk [vmem:[%s197 + $0xd8] sm:$0xff] %vm763, %v1527
      %1560 = vst.msk [vmem:[%s197 + $0xe0] sm:$0xff] %vm763, %v1528
      %1561 = vst.msk [vmem:[%s197 + $0xe8] sm:$0xff] %vm763, %v1529
      %1562 = vst.msk [vmem:[%s197 + $0xf0] sm:$0xff] %vm763, %v1530
      %1563 = vst.msk [vmem:[%s197 + $0xf8] sm:$0xff] %vm763, %v1531
      %p1564 = scmp.lt.s32.totalorder %s15, 1
      %s1565 = scalar_select %p1564, %s15, 1
      %s1566 = smul.addr %s1565, 32
      %s1567 = smul.addr %s1566, 8
      %s1568 = scalar_lea.vmem %s4, %s1567
      // Predicated region
      $region37: #{generator_forward.10} parent=35 // pred_check
        %p1569 = pneg %p122
      $region38: #{generator_forward.10} parent=35 // pred_check_branch
        %1571 = sbr.rel (%p1569) target = $region40
      $region39: #{generator_forward.10} parent=35 // pred_region
        _
      $region40: #{generator_forward.10} parent=35 // pred_fallthru
        _
    $region36: #{generator_forward.10} parent=5 // pred_fallthru
      _
    %p1572 = scmp.le.s32.totalorder 2, %s10
    // Predicated region
    $region41: #{generator_forward.10} parent=5 // pred_check
      %p1573 = pneg %p1572
    $region42: #{generator_forward.10} parent=5 // pred_check_branch
      %1575 = sbr.rel (%p1573) target = $region44
    $region43: #{generator_forward.10} parent=5 // pred_region
      %s1576 = ssub.s32 %s10, 2
      // Predicated region
      $region45: #{generator_forward.10} parent=43 // pred_check
        %p1577 = pneg %p128
      $region46: #{generator_forward.10} parent=43 // pred_check_branch
        %1579 = sbr.rel (%p1577) target = $region48
      $region47: #{generator_forward.10} parent=43 // pred_region
        %p1580 = scmp.lt.s32.totalorder %s16, 1
        %s1581 = scalar_select %p1580, %s16, 1
        %s1582 = smul.addr %s1581, 32
        %s1583 = smul.addr %s1582, 8
        %s1584 = scalar_lea.vmem %s4, %s1583
      $region48: #{generator_forward.10} parent=43 // pred_fallthru
        _
    $region44: #{generator_forward.10} parent=5 // pred_fallthru
      _
  $region6: #{generator_forward.10} parent=0 // loop_footer
    %s14 = sadd.s32 1, %s10
  $region7: #{generator_forward.10} parent=0 // loop_footer_branch
    %9 = sbr.rel target = $region3
  $region8: #{generator_forward.10} parent=0 // loop_exit
    _

// kernel: generator_forward.11
$region0: #{generator_forward.11}
  #allocation0 [shape = 'u32[]', space=smem, size = 0x4, offset = 0x4, fixed_abs, tag = 'smem constant byte address 0x4 - core index']
  #allocation1 [shape = 'u32[72,128]{1,0:T(1,128)}', space=vmem, size = 0x9000, scoped, tag = 'internal scratch']
  %s0 = inlined_call_operand.vmem [shape: bf16[2,64,128], index: 0, kind: input, shape index: {}]
  %s1 = inlined_call_operand.vmem [shape: bf16[128,16], index: 1, kind: input, shape index: {}]
  %s2 = inlined_call_operand.vmem [shape: f32[1,16], index: 2, kind: input, shape index: {}]
  %s3 = inlined_call_operand.vmem [shape: f32[1,16], index: 3, kind: input, shape index: {}]
  %s4 = inlined_call_operand.vmem [shape: f32[2,64,16], index: 4, kind: output, shape index: {}]
  %s5 = sld [smem:[#allocation0]]
  $region49: #{generator_forward.11} parent=0
    _
  %s7 = ssub.s32 1, %s5
  %s8 = scalar_select 0, %s7, %s5
  loop: start=0, step=1, limit=4
  $region2: #{generator_forward.11} parent=0 // loop_pre_header
    _
  $region3: #{generator_forward.11} parent=0 // loop_header
    %s10 = sphi 0, %s14
    %p11 = scmp.ge.s32.totalorder %s10, 4
    %s20 = sphi 0, %s22
    %s23 = sphi 0, %s20
    %s24 = sphi 0, %s23
    %s40 = sphi 0, %s24
    %s44 = sphi 0, %s44
    %s46 = sphi 0, %s44
    %s47 = sphi 0, %s46
    %s61 = sphi 0, %s47
    %s65 = sphi 0, %s65
    %s67 = sphi 0, %s65
    %s68 = sphi 0, %s67
    %s82 = sphi 0, %s68
    %s86 = sphi 0, %s86
    %s88 = sphi 0, %s86
    %s89 = sphi 0, %s88
    %s103 = sphi 0, %s89
    %s109 = sphi 0, %s111
    %s112 = sphi 0, %s109
    %s113 = sphi 0, %s112
    %s129 = sphi 0, %s113
  $region4: #{generator_forward.11} parent=0 // loop_header_branch
    %13 = sbr.rel (%p11) target = $region8
  $region5: #{generator_forward.11} parent=0 // loop_body
    %s15 = ssub.s32 %s10, 1
    %s16 = ssub.s32 %s10, 2
    %s17 = sadd.s32 %s10, 1
    %s18 = ssub.s32 %s10, %s17
    %p19 = scmp.eq.s32.totalorder %s18, 0
    %s21 = sadd.s32 %s20, 1
    %s22 = scalar_select %p19, %s20, %s21
    %p25 = pneg %p19
    %p26 = scmp.eq.s32.totalorder %s10, 1
    %p27 = por %p25, %p26
    %p28 = scmp.ne.s32.totalorder %s20, %s23
    %p29 = scmp.eq.s32.totalorder %s10, 0
    %p30 = por %p28, %p29
    %p31 = scmp.ne.s32.totalorder %s20, %s23
    %p32 = scmp.eq.s32.totalorder %s15, 1
    %p33 = por %p31, %p32
    %p34 = scmp.ne.s32.totalorder %s23, %s24
    %p35 = scmp.eq.s32.totalorder %s15, 0
    %p36 = por %p34, %p35
    %p37 = scmp.ne.s32.totalorder %s23, %s24
    %p38 = scmp.eq.s32.totalorder %s16, 1
    %p39 = por %p37, %p38
    %p41 = scmp.ne.s32.totalorder %s24, %s40
    %p42 = scmp.eq.s32.totalorder %s16, 0
    %p43 = por %p41, %p42
    %s45 = sadd.s32 %s44, 1
    %p48 = scmp.eq.s32.totalorder %s10, 1
    %p49 = scmp.ne.s32.totalorder %s44, %s46
    %p50 = scmp.eq.s32.totalorder %s10, 0
    %p51 = por %p49, %p50
    %p52 = scmp.ne.s32.totalorder %s44, %s46
    %p53 = scmp.eq.s32.totalorder %s15, 1
    %p54 = por %p52, %p53
    %p55 = scmp.ne.s32.totalorder %s46, %s47
    %p56 = scmp.eq.s32.totalorder %s15, 0
    %p57 = por %p55, %p56
    %p58 = scmp.ne.s32.totalorder %s46, %s47
    %p59 = scmp.eq.s32.totalorder %s16, 1
    %p60 = por %p58, %p59
    %p62 = scmp.ne.s32.totalorder %s47, %s61
    %p63 = scmp.eq.s32.totalorder %s16, 0
    %p64 = por %p62, %p63
    %s66 = sadd.s32 %s65, 1
    %p69 = scmp.eq.s32.totalorder %s10, 1
    %p70 = scmp.ne.s32.totalorder %s65, %s67
    %p71 = scmp.eq.s32.totalorder %s10, 0
    %p72 = por %p70, %p71
    %p73 = scmp.ne.s32.totalorder %s65, %s67
    %p74 = scmp.eq.s32.totalorder %s15, 1
    %p75 = por %p73, %p74
    %p76 = scmp.ne.s32.totalorder %s67, %s68
    %p77 = scmp.eq.s32.totalorder %s15, 0
    %p78 = por %p76, %p77
    %p79 = scmp.ne.s32.totalorder %s67, %s68
    %p80 = scmp.eq.s32.totalorder %s16, 1
    %p81 = por %p79, %p80
    %p83 = scmp.ne.s32.totalorder %s68, %s82
    %p84 = scmp.eq.s32.totalorder %s16, 0
    %p85 = por %p83, %p84
    %s87 = sadd.s32 %s86, 1
    %p90 = scmp.eq.s32.totalorder %s10, 1
    %p91 = scmp.ne.s32.totalorder %s86, %s88
    %p92 = scmp.eq.s32.totalorder %s10, 0
    %p93 = por %p91, %p92
    %p94 = scmp.ne.s32.totalorder %s86, %s88
    %p95 = scmp.eq.s32.totalorder %s15, 1
    %p96 = por %p94, %p95
    %p97 = scmp.ne.s32.totalorder %s88, %s89
    %p98 = scmp.eq.s32.totalorder %s15, 0
    %p99 = por %p97, %p98
    %p100 = scmp.ne.s32.totalorder %s88, %s89
    %p101 = scmp.eq.s32.totalorder %s16, 1
    %p102 = por %p100, %p101
    %p104 = scmp.ne.s32.totalorder %s89, %s103
    %p105 = scmp.eq.s32.totalorder %s16, 0
    %p106 = por %p104, %p105
    %s107 = ssub.s32 %s10, %s17
    %p108 = scmp.eq.s32.totalorder %s107, 0
    %s110 = sadd.s32 %s109, 1
    %s111 = scalar_select %p108, %s109, %s110
    %p114 = pneg %p108
    %p115 = scmp.eq.s32.totalorder %s10, 1
    %p116 = por %p114, %p115
    %p117 = scmp.ne.s32.totalorder %s109, %s112
    %p118 = scmp.eq.s32.totalorder %s10, 0
    %p119 = por %p117, %p118
    %p120 = scmp.ne.s32.totalorder %s109, %s112
    %p121 = scmp.eq.s32.totalorder %s15, 1
    %p122 = por %p120, %p121
    %p123 = scmp.ne.s32.totalorder %s112, %s113
    %p124 = scmp.eq.s32.totalorder %s15, 0
    %p125 = por %p123, %p124
    %p126 = scmp.ne.s32.totalorder %s112, %s113
    %p127 = scmp.eq.s32.totalorder %s16, 1
    %p128 = por %p126, %p127
    %p130 = scmp.ne.s32.totalorder %s113, %s129
    %p131 = scmp.eq.s32.totalorder %s16, 0
    %p132 = por %p130, %p131
    %p133 = scmp.le.s32.totalorder 1, %s10
    %p134 = scmp.lt.s32.totalorder %s10, 3
    %p135 = pnand %p133, %p134
    %p136 = pneg %p135
    // Predicated region
    $region9: #{generator_forward.11} parent=5 // pred_check
      _
    $region10: #{generator_forward.11} parent=5 // pred_check_branch
      %138 = sbr.rel (%p135) target = $region12
    $region11: #{generator_forward.11} parent=5 // pred_region
      %s139 = ssub.s32 %s10, 1
      // Predicated region
      $region13: #{generator_forward.11} parent=11 // pred_check
        %p140 = pneg %p57
      $region14: #{generator_forward.11} parent=11 // pred_check_branch
        %142 = sbr.rel (%p140) target = $region16
      $region15: #{generator_forward.11} parent=11 // pred_region
        _
      $region16: #{generator_forward.11} parent=11 // pred_fallthru
        _
      // Predicated region
      $region17: #{generator_forward.11} parent=11 // pred_check
        %p143 = pneg %p78
      $region18: #{generator_forward.11} parent=11 // pred_check_branch
        %145 = sbr.rel (%p143) target = $region20
      $region19: #{generator_forward.11} parent=11 // pred_region
        _
      $region20: #{generator_forward.11} parent=11 // pred_fallthru
        _
      // Predicated region
      $region21: #{generator_forward.11} parent=11 // pred_check
        %p146 = pneg %p99
      $region22: #{generator_forward.11} parent=11 // pred_check_branch
        %148 = sbr.rel (%p146) target = $region24
      $region23: #{generator_forward.11} parent=11 // pred_region
        _
      $region24: #{generator_forward.11} parent=11 // pred_fallthru
        _
    $region12: #{generator_forward.11} parent=5 // pred_fallthru
      _
    %p149 = scmp.lt.s32.totalorder %s10, 2
    // Predicated region
    $region25: #{generator_forward.11} parent=5 // pred_check
      %p150 = pneg %p149
    $region26: #{generator_forward.11} parent=5 // pred_check_branch
      %152 = sbr.rel (%p150) target = $region28
    $region27: #{generator_forward.11} parent=5 // pred_region
      // Predicated region
      $region29: #{generator_forward.11} parent=27 // pred_check
        %p153 = pneg %p30
      $region30: #{generator_forward.11} parent=27 // pred_check_branch
        %155 = sbr.rel (%p153) target = $region32
      $region31: #{generator_forward.11} parent=27 // pred_region
        %p156 = scmp.lt.s32.totalorder %s10, 1
        %s157 = scalar_select %p156, %s10, 1
        %s158 = smul.addr %s157, 8
        %s159 = smul.addr %s158, 4
        %s160 = scalar_lea.vmem %s0, %s159
      $region32: #{generator_forward.11} parent=27 // pred_fallthru
        _
    $region28: #{generator_forward.11} parent=5 // pred_fallthru
      _
    %p161 = scmp.le.s32.totalorder 1, %s10
    %p162 = scmp.lt.s32.totalorder %s10, 3
    %p163 = pnand %p161, %p162
    %p164 = pneg %p163
    // Predicated region
    $region33: #{generator_forward.11} parent=5 // pred_check
      _
    $region34: #{generator_forward.11} parent=5 // pred_check_branch
      %166 = sbr.rel (%p163) target = $region36
    $region35: #{generator_forward.11} parent=5 // pred_region
      %s167 = ssub.s32 %s10, 1
      %p168 = scmp.lt.s32.totalorder %s15, 1
      %s169 = scalar_select %p168, %s15, 1
      %s170 = smul.addr %s169, 8
      %s171 = smul.addr %s170, 4
      %s172 = scalar_lea.vmem %s0, %s171
      %p173 = pneg %p36
      %p174 = pneg %p33
      %p175 = pneg %p57
      %p176 = pneg %p54
      %p177 = pneg %p78
      %p178 = pneg %p75
      %p179 = pneg %p99
      %p180 = pneg %p96
      %p181 = pneg %p125
      %p182 = pneg %p122
      %p183 = scmp.lt.s32.totalorder %s15, 1
      %s184 = scalar_select %p183, %s15, 1
      %s185 = smul.addr %s184, 8
      %s186 = smul.addr %s185, 8
      %s187 = scalar_lea.vmem %s4, %s186
      %p188 = scmp.lt.s32.totalorder %s15, 1
      %s189 = scalar_select %p188, %s15, 1
      %s190 = smul.addr %s189, 8
      %s191 = smul.addr %s190, 4
      %s192 = scalar_lea.vmem %s0, %s191
      %p193 = scmp.lt.s32.totalorder %s15, 1
      %s194 = scalar_select %p193, %s15, 1
      %s195 = smul.addr %s194, 8
      %s196 = smul.addr %s195, 8
      %s197 = scalar_lea.vmem %s4, %s196
      %v198 = vld [vmem:[%s192] sm:$0xf]
      %v199 = vld [vmem:[%s192 + $0x4] sm:$0xf]
      %v200 = vld [vmem:[%s192 + $0x8] sm:$0xf]
      %v201 = vld [vmem:[%s192 + $0xc] sm:$0xf]
      %v202 = vld [vmem:[%s192 + $0x10] sm:$0xf]
      %v203 = vld [vmem:[%s192 + $0x14] sm:$0xf]
      %v204 = vld [vmem:[%s192 + $0x18] sm:$0xf]
      %v205 = vld [vmem:[%s192 + $0x1c] sm:$0xf]
      %v206 = vld [vmem:[%s1] sm:$0xf]
      %v207 = vld [vmem:[%s1 + $0x4] sm:$0xf]
      %v208 = vld [vmem:[%s1 + $0x8] sm:$0xf]
      %v209 = vld [vmem:[%s1 + $0xc] sm:$0xf]
      %v210 = vld [vmem:[%s1 + $0x10] sm:$0xf]
      %v211 = vld [vmem:[%s1 + $0x14] sm:$0xf]
      %v212 = vld [vmem:[%s1 + $0x18] sm:$0xf]
      %v213 = vld [vmem:[%s1 + $0x1c] sm:$0xf]
      %v214 = vld [vmem:[%s1 + $0x20] sm:$0xf]
      %v215 = vld [vmem:[%s1 + $0x24] sm:$0xf]
      %v216 = vld [vmem:[%s1 + $0x28] sm:$0xf]
      %v217 = vld [vmem:[%s1 + $0x2c] sm:$0xf]
      %v218 = vld [vmem:[%s1 + $0x30] sm:$0xf]
      %v219 = vld [vmem:[%s1 + $0x34] sm:$0xf]
      %v220 = vld [vmem:[%s1 + $0x38] sm:$0xf]
      %v221 = vld [vmem:[%s1 + $0x3c] sm:$0xf]
      %v230 = vunpack.c.l.b16 %v198
      %v231 = vunpack.c.l.b16 %v199
      %v232 = vunpack.c.l.b16 %v200
      %v233 = vunpack.c.l.b16 %v201
      %v234 = vunpack.c.l.b16 %v202
      %v235 = vunpack.c.l.b16 %v203
      %v236 = vunpack.c.l.b16 %v204
      %v237 = vunpack.c.l.b16 %v205
      %v238 = vpack.c.b16 %v231, %v230
      %v239 = vpack.c.b16 %v233, %v232
      %v240 = vpack.c.b16 %v235, %v234
      %v241 = vpack.c.b16 %v237, %v236
      %v262 = vunpack.c.l.b16 %v206
      %v263 = vunpack.c.l.b16 %v207
      %v264 = vunpack.c.l.b16 %v208
      %v265 = vunpack.c.l.b16 %v209
      %v266 = vunpack.c.l.b16 %v210
      %v267 = vunpack.c.l.b16 %v211
      %v268 = vunpack.c.l.b16 %v212
      %v269 = vunpack.c.l.b16 %v213
      %v270 = vunpack.c.l.b16 %v214
      %v271 = vunpack.c.l.b16 %v215
      %v272 = vunpack.c.l.b16 %v216
      %v273 = vunpack.c.l.b16 %v217
      %v274 = vunpack.c.l.b16 %v218
      %v275 = vunpack.c.l.b16 %v219
      %v276 = vunpack.c.l.b16 %v220
      %v277 = vunpack.c.l.b16 %v221
      %v278 = vpack.c.b16 %v263, %v262
      %v279 = vpack.c.b16 %v265, %v264
      %v280 = vpack.c.b16 %v267, %v266
      %v281 = vpack.c.b16 %v269, %v268
      %v282 = vpack.c.b16 %v271, %v270
      %v283 = vpack.c.b16 %v273, %v272
      %v284 = vpack.c.b16 %v275, %v274
      %v285 = vpack.c.b16 %v277, %v276
      %294 = vmatpush.bf16.msra.mxu0 %v285
      %295 = vmatpush.bf16.msra.mxu0 %v284
      %296 = vmatpush.bf16.msra.mxu0 %v283
      %297 = vmatpush.bf16.msra.mxu0 %v282
      %298 = vmatpush.bf16.msra.mxu0 %v281
      %299 = vmatpush.bf16.msra.mxu0 %v280
      %300 = vmatpush.bf16.msra.mxu0 %v279
      %301 = vmatpush.bf16.msra.mxu0 %v278
      %302 = vmatmul.bf16.gmra.mxu0 %v238
      %v303 = vpop.f32.mrf.mxu0
      %v304 = vadd.f32 0.0, %v303
      %v305 = vpop.f32.mrf.mxu0
      %v306 = vadd.f32 0.0, %v305
      %307 = vmatmul.bf16.gmra.mxu0 %v239
      %v308 = vpop.f32.mrf.mxu0
      %v309 = vadd.f32 0.0, %v308
      %v310 = vpop.f32.mrf.mxu0
      %v311 = vadd.f32 0.0, %v310
      %312 = vmatmul.bf16.gmra.mxu0 %v240
      %v313 = vpop.f32.mrf.mxu0
      %v314 = vadd.f32 0.0, %v313
      %v315 = vpop.f32.mrf.mxu0
      %v316 = vadd.f32 0.0, %v315
      %317 = vmatmul.bf16.gmra.mxu0 %v241
      %v318 = vpop.f32.mrf.mxu0
      %v319 = vadd.f32 0.0, %v318
      %v320 = vpop.f32.mrf.mxu0
      %v321 = vadd.f32 0.0, %v320
      %322 = vdwg.mxu0
      %v323 = vld [vmem:[%s2] sm:$0x1]
      %v324 = vld [vmem:[%s3] sm:$0x1]
      %vm325 = vcmask 130048
      %v326 = vsel %vm325, %v304, 0.0
      %v327 = vsel %vm325, %v306, 0.0
      %v328 = vadd.f32 %v326, %v327
      %v329 = vsel %vm325, %v309, 0.0
      %v330 = vadd.f32 %v328, %v329
      %v331 = vsel %vm325, %v311, 0.0
      %v332 = vadd.f32 %v330, %v331
      %v333 = vsel %vm325, %v314, 0.0
      %v334 = vadd.f32 %v332, %v333
      %v335 = vsel %vm325, %v316, 0.0
      %v336 = vadd.f32 %v334, %v335
      %v337 = vsel %vm325, %v319, 0.0
      %v338 = vadd.f32 %v336, %v337
      %v339 = vsel %vm325, %v321, 0.0
      %v340 = vadd.f32 %v338, %v339
      %v341 = vrot.slane %v340, 4
      %v342 = vadd.f32 %v340, %v341
      %v343 = vrot.slane %v342, 2
      %v344 = vadd.f32 %v342, %v343
      %v345 = vrot.slane %v344, 1
      %v346 = vadd.f32 %v344, %v345
      %v347 = vadd.f32 %v346, 0.0
      %v348 = vrcp.pop 64.0
      %v349 = vmul.f32 64.0, %v348
      %v350 = vsub.f32 1.0, %v349
      %v351 = vmul.f32 %v348, %v350
      %v352 = vadd.f32 %v348, %v351
      %vm353 = vweird.f32 %v348
      %v354 = vsel %vm353, %v348, %v352
      %v355 = vmul.f32 %v347, %v354
      %v356 = vsub.f32 %v304, %v355
      %v357 = vsub.f32 %v306, %v355
      %v358 = vsub.f32 %v309, %v355
      %v359 = vsub.f32 %v311, %v355
      %v360 = vsub.f32 %v314, %v355
      %v361 = vsub.f32 %v316, %v355
      %v362 = vsub.f32 %v319, %v355
      %v363 = vsub.f32 %v321, %v355
      %v364 = vmul.f32 %v356, %v356
      %v365 = vmul.f32 %v357, %v357
      %v366 = vmul.f32 %v358, %v358
      %v367 = vmul.f32 %v359, %v359
      %v368 = vmul.f32 %v360, %v360
      %v369 = vmul.f32 %v361, %v361
      %v370 = vmul.f32 %v362, %v362
      %v371 = vmul.f32 %v363, %v363
      %v372 = vsel %vm325, %v364, 0.0
      %v373 = vsel %vm325, %v365, 0.0
      %v374 = vadd.f32 %v372, %v373
      %v375 = vsel %vm325, %v366, 0.0
      %v376 = vadd.f32 %v374, %v375
      %v377 = vsel %vm325, %v367, 0.0
      %v378 = vadd.f32 %v376, %v377
      %v379 = vsel %vm325, %v368, 0.0
      %v380 = vadd.f32 %v378, %v379
      %v381 = vsel %vm325, %v369, 0.0
      %v382 = vadd.f32 %v380, %v381
      %v383 = vsel %vm325, %v370, 0.0
      %v384 = vadd.f32 %v382, %v383
      %v385 = vsel %vm325, %v371, 0.0
      %v386 = vadd.f32 %v384, %v385
      %v387 = vrot.slane %v386, 4
      %v388 = vadd.f32 %v386, %v387
      %v389 = vrot.slane %v388, 2
      %v390 = vadd.f32 %v388, %v389
      %v391 = vrot.slane %v390, 1
      %v392 = vadd.f32 %v390, %v391
      %v393 = vadd.f32 %v392, 0.0
      %v394 = vmul.f32 %v393, %v354
      %v395 = vadd.f32 %v394, 1e-05
      %v396 = vrsqrt.pop %v395
      %v397 = vmul.f32 %v396, %v395
      %v398 = vmul.f32 %v397, %v396
      %v399 = vmul.f32 0.5, %v398
      %v400 = vsub.f32 1.5, %v399
      %v401 = vmul.f32 %v396, %v400
      %vm402 = vweird.f32 %v395
      %vm403 = vweird.f32 %v396
      %vm404 = vmor %vm402, %vm403
      %v405 = vsel %vm404, %v396, %v401
      %v406 = vmul.f32 %v356, %v405
      %v407 = vmul.f32 %v357, %v405
      %v408 = vmul.f32 %v358, %v405
      %v409 = vmul.f32 %v359, %v405
      %v410 = vmul.f32 %v360, %v405
      %v411 = vmul.f32 %v361, %v405
      %v412 = vmul.f32 %v362, %v405
      %v413 = vmul.f32 %v363, %v405
      %v415 = vperm.slane %v323, 0
      %v417 = vmul.f32 %v406, %v415
      %v418 = vmul.f32 %v407, %v415
      %v419 = vmul.f32 %v408, %v415
      %v420 = vmul.f32 %v409, %v415
      %v421 = vmul.f32 %v410, %v415
      %v422 = vmul.f32 %v411, %v415
      %v423 = vmul.f32 %v412, %v415
      %v424 = vmul.f32 %v413, %v415
      %v426 = vperm.slane %v324, 0
      %v428 = vadd.f32 %v417, %v426
      %v429 = vadd.f32 %v418, %v426
      %v430 = vadd.f32 %v419, %v426
      %v431 = vadd.f32 %v420, %v426
      %v432 = vadd.f32 %v421, %v426
      %v433 = vadd.f32 %v422, %v426
      %v434 = vadd.f32 %v423, %v426
      %v435 = vadd.f32 %v424, %v426
      %v436 = vmax.f32 %v428, 0.0
      %v437 = vmax.f32 %v429, 0.0
      %v438 = vmax.f32 %v430, 0.0
      %v439 = vmax.f32 %v431, 0.0
      %v440 = vmax.f32 %v432, 0.0
      %v441 = vmax.f32 %v433, 0.0
      %v442 = vmax.f32 %v434, 0.0
      %v443 = vmax.f32 %v435, 0.0
      %444 = vst.msk [vmem:[%s197] sm:$0xff] %vm325, %v436
      %445 = vst.msk [vmem:[%s197 + $0x8] sm:$0xff] %vm325, %v437
      %446 = vst.msk [vmem:[%s197 + $0x10] sm:$0xff] %vm325, %v438
      %447 = vst.msk [vmem:[%s197 + $0x18] sm:$0xff] %vm325, %v439
      %448 = vst.msk [vmem:[%s197 + $0x20] sm:$0xff] %vm325, %v440
      %449 = vst.msk [vmem:[%s197 + $0x28] sm:$0xff] %vm325, %v441
      %450 = vst.msk [vmem:[%s197 + $0x30] sm:$0xff] %vm325, %v442
      %451 = vst.msk [vmem:[%s197 + $0x38] sm:$0xff] %vm325, %v443
      %p452 = scmp.lt.s32.totalorder %s15, 1
      %s453 = scalar_select %p452, %s15, 1
      %s454 = smul.addr %s453, 8
      %s455 = smul.addr %s454, 8
      %s456 = scalar_lea.vmem %s4, %s455
      // Predicated region
      $region37: #{generator_forward.11} parent=35 // pred_check
        %p457 = pneg %p122
      $region38: #{generator_forward.11} parent=35 // pred_check_branch
        %459 = sbr.rel (%p457) target = $region40
      $region39: #{generator_forward.11} parent=35 // pred_region
        _
      $region40: #{generator_forward.11} parent=35 // pred_fallthru
        _
    $region36: #{generator_forward.11} parent=5 // pred_fallthru
      _
    %p460 = scmp.le.s32.totalorder 2, %s10
    // Predicated region
    $region41: #{generator_forward.11} parent=5 // pred_check
      %p461 = pneg %p460
    $region42: #{generator_forward.11} parent=5 // pred_check_branch
      %463 = sbr.rel (%p461) target = $region44
    $region43: #{generator_forward.11} parent=5 // pred_region
      %s464 = ssub.s32 %s10, 2
      // Predicated region
      $region45: #{generator_forward.11} parent=43 // pred_check
        %p465 = pneg %p128
      $region46: #{generator_forward.11} parent=43 // pred_check_branch
        %467 = sbr.rel (%p465) target = $region48
      $region47: #{generator_forward.11} parent=43 // pred_region
        %p468 = scmp.lt.s32.totalorder %s16, 1
        %s469 = scalar_select %p468, %s16, 1
        %s470 = smul.addr %s469, 8
        %s471 = smul.addr %s470, 8
        %s472 = scalar_lea.vmem %s4, %s471
      $region48: #{generator_forward.11} parent=43 // pred_fallthru
        _
    $region44: #{generator_forward.11} parent=5 // pred_fallthru
      _
  $region6: #{generator_forward.11} parent=0 // loop_footer
    %s14 = sadd.s32 1, %s10
  $region7: #{generator_forward.11} parent=0 // loop_footer_branch
    %9 = sbr.rel target = $region3
  $region8: #{generator_forward.11} parent=0 // loop_exit
    _

// kernel: generator_forward.12
$region0: #{generator_forward.12}
  #allocation0 [shape = 'u32[]', space=smem, size = 0x4, offset = 0x4, fixed_abs, tag = 'smem constant byte address 0x4 - core index']
  #allocation1 [shape = 'u32[72,128]{1,0:T(1,128)}', space=vmem, size = 0x9000, scoped, tag = 'internal scratch']
  %s0 = inlined_call_operand.vmem [shape: bf16[2,16,256], index: 0, kind: input, shape index: {}]
  %s1 = inlined_call_operand.vmem [shape: bf16[256,32], index: 1, kind: input, shape index: {}]
  %s2 = inlined_call_operand.vmem [shape: f32[1,32], index: 2, kind: input, shape index: {}]
  %s3 = inlined_call_operand.vmem [shape: f32[1,32], index: 3, kind: input, shape index: {}]
  %s4 = inlined_call_operand.vmem [shape: f32[2,16,32], index: 4, kind: output, shape index: {}]
  %s5 = sld [smem:[#allocation0]]
  $region49: #{generator_forward.12} parent=0
    _
  %s7 = ssub.s32 1, %s5
  %s8 = scalar_select 0, %s7, %s5
  loop: start=0, step=1, limit=4
  $region2: #{generator_forward.12} parent=0 // loop_pre_header
    _
  $region3: #{generator_forward.12} parent=0 // loop_header
    %s10 = sphi 0, %s14
    %p11 = scmp.ge.s32.totalorder %s10, 4
    %s20 = sphi 0, %s22
    %s23 = sphi 0, %s20
    %s24 = sphi 0, %s23
    %s40 = sphi 0, %s24
    %s44 = sphi 0, %s44
    %s46 = sphi 0, %s44
    %s47 = sphi 0, %s46
    %s61 = sphi 0, %s47
    %s65 = sphi 0, %s65
    %s67 = sphi 0, %s65
    %s68 = sphi 0, %s67
    %s82 = sphi 0, %s68
    %s86 = sphi 0, %s86
    %s88 = sphi 0, %s86
    %s89 = sphi 0, %s88
    %s103 = sphi 0, %s89
    %s109 = sphi 0, %s111
    %s112 = sphi 0, %s109
    %s113 = sphi 0, %s112
    %s129 = sphi 0, %s113
  $region4: #{generator_forward.12} parent=0 // loop_header_branch
    %13 = sbr.rel (%p11) target = $region8
  $region5: #{generator_forward.12} parent=0 // loop_body
    %s15 = ssub.s32 %s10, 1
    %s16 = ssub.s32 %s10, 2
    %s17 = sadd.s32 %s10, 1
    %s18 = ssub.s32 %s10, %s17
    %p19 = scmp.eq.s32.totalorder %s18, 0
    %s21 = sadd.s32 %s20, 1
    %s22 = scalar_select %p19, %s20, %s21
    %p25 = pneg %p19
    %p26 = scmp.eq.s32.totalorder %s10, 1
    %p27 = por %p25, %p26
    %p28 = scmp.ne.s32.totalorder %s20, %s23
    %p29 = scmp.eq.s32.totalorder %s10, 0
    %p30 = por %p28, %p29
    %p31 = scmp.ne.s32.totalorder %s20, %s23
    %p32 = scmp.eq.s32.totalorder %s15, 1
    %p33 = por %p31, %p32
    %p34 = scmp.ne.s32.totalorder %s23, %s24
    %p35 = scmp.eq.s32.totalorder %s15, 0
    %p36 = por %p34, %p35
    %p37 = scmp.ne.s32.totalorder %s23, %s24
    %p38 = scmp.eq.s32.totalorder %s16, 1
    %p39 = por %p37, %p38
    %p41 = scmp.ne.s32.totalorder %s24, %s40
    %p42 = scmp.eq.s32.totalorder %s16, 0
    %p43 = por %p41, %p42
    %s45 = sadd.s32 %s44, 1
    %p48 = scmp.eq.s32.totalorder %s10, 1
    %p49 = scmp.ne.s32.totalorder %s44, %s46
    %p50 = scmp.eq.s32.totalorder %s10, 0
    %p51 = por %p49, %p50
    %p52 = scmp.ne.s32.totalorder %s44, %s46
    %p53 = scmp.eq.s32.totalorder %s15, 1
    %p54 = por %p52, %p53
    %p55 = scmp.ne.s32.totalorder %s46, %s47
    %p56 = scmp.eq.s32.totalorder %s15, 0
    %p57 = por %p55, %p56
    %p58 = scmp.ne.s32.totalorder %s46, %s47
    %p59 = scmp.eq.s32.totalorder %s16, 1
    %p60 = por %p58, %p59
    %p62 = scmp.ne.s32.totalorder %s47, %s61
    %p63 = scmp.eq.s32.totalorder %s16, 0
    %p64 = por %p62, %p63
    %s66 = sadd.s32 %s65, 1
    %p69 = scmp.eq.s32.totalorder %s10, 1
    %p70 = scmp.ne.s32.totalorder %s65, %s67
    %p71 = scmp.eq.s32.totalorder %s10, 0
    %p72 = por %p70, %p71
    %p73 = scmp.ne.s32.totalorder %s65, %s67
    %p74 = scmp.eq.s32.totalorder %s15, 1
    %p75 = por %p73, %p74
    %p76 = scmp.ne.s32.totalorder %s67, %s68
    %p77 = scmp.eq.s32.totalorder %s15, 0
    %p78 = por %p76, %p77
    %p79 = scmp.ne.s32.totalorder %s67, %s68
    %p80 = scmp.eq.s32.totalorder %s16, 1
    %p81 = por %p79, %p80
    %p83 = scmp.ne.s32.totalorder %s68, %s82
    %p84 = scmp.eq.s32.totalorder %s16, 0
    %p85 = por %p83, %p84
    %s87 = sadd.s32 %s86, 1
    %p90 = scmp.eq.s32.totalorder %s10, 1
    %p91 = scmp.ne.s32.totalorder %s86, %s88
    %p92 = scmp.eq.s32.totalorder %s10, 0
    %p93 = por %p91, %p92
    %p94 = scmp.ne.s32.totalorder %s86, %s88
    %p95 = scmp.eq.s32.totalorder %s15, 1
    %p96 = por %p94, %p95
    %p97 = scmp.ne.s32.totalorder %s88, %s89
    %p98 = scmp.eq.s32.totalorder %s15, 0
    %p99 = por %p97, %p98
    %p100 = scmp.ne.s32.totalorder %s88, %s89
    %p101 = scmp.eq.s32.totalorder %s16, 1
    %p102 = por %p100, %p101
    %p104 = scmp.ne.s32.totalorder %s89, %s103
    %p105 = scmp.eq.s32.totalorder %s16, 0
    %p106 = por %p104, %p105
    %s107 = ssub.s32 %s10, %s17
    %p108 = scmp.eq.s32.totalorder %s107, 0
    %s110 = sadd.s32 %s109, 1
    %s111 = scalar_select %p108, %s109, %s110
    %p114 = pneg %p108
    %p115 = scmp.eq.s32.totalorder %s10, 1
    %p116 = por %p114, %p115
    %p117 = scmp.ne.s32.totalorder %s109, %s112
    %p118 = scmp.eq.s32.totalorder %s10, 0
    %p119 = por %p117, %p118
    %p120 = scmp.ne.s32.totalorder %s109, %s112
    %p121 = scmp.eq.s32.totalorder %s15, 1
    %p122 = por %p120, %p121
    %p123 = scmp.ne.s32.totalorder %s112, %s113
    %p124 = scmp.eq.s32.totalorder %s15, 0
    %p125 = por %p123, %p124
    %p126 = scmp.ne.s32.totalorder %s112, %s113
    %p127 = scmp.eq.s32.totalorder %s16, 1
    %p128 = por %p126, %p127
    %p130 = scmp.ne.s32.totalorder %s113, %s129
    %p131 = scmp.eq.s32.totalorder %s16, 0
    %p132 = por %p130, %p131
    %p133 = scmp.le.s32.totalorder 1, %s10
    %p134 = scmp.lt.s32.totalorder %s10, 3
    %p135 = pnand %p133, %p134
    %p136 = pneg %p135
    // Predicated region
    $region9: #{generator_forward.12} parent=5 // pred_check
      _
    $region10: #{generator_forward.12} parent=5 // pred_check_branch
      %138 = sbr.rel (%p135) target = $region12
    $region11: #{generator_forward.12} parent=5 // pred_region
      %s139 = ssub.s32 %s10, 1
      // Predicated region
      $region13: #{generator_forward.12} parent=11 // pred_check
        %p140 = pneg %p57
      $region14: #{generator_forward.12} parent=11 // pred_check_branch
        %142 = sbr.rel (%p140) target = $region16
      $region15: #{generator_forward.12} parent=11 // pred_region
        _
      $region16: #{generator_forward.12} parent=11 // pred_fallthru
        _
      // Predicated region
      $region17: #{generator_forward.12} parent=11 // pred_check
        %p143 = pneg %p78
      $region18: #{generator_forward.12} parent=11 // pred_check_branch
        %145 = sbr.rel (%p143) target = $region20
      $region19: #{generator_forward.12} parent=11 // pred_region
        _
      $region20: #{generator_forward.12} parent=11 // pred_fallthru
        _
      // Predicated region
      $region21: #{generator_forward.12} parent=11 // pred_check
        %p146 = pneg %p99
      $region22: #{generator_forward.12} parent=11 // pred_check_branch
        %148 = sbr.rel (%p146) target = $region24
      $region23: #{generator_forward.12} parent=11 // pred_region
        _
      $region24: #{generator_forward.12} parent=11 // pred_fallthru
        _
    $region12: #{generator_forward.12} parent=5 // pred_fallthru
      _
    %p149 = scmp.lt.s32.totalorder %s10, 2
    // Predicated region
    $region25: #{generator_forward.12} parent=5 // pred_check
      %p150 = pneg %p149
    $region26: #{generator_forward.12} parent=5 // pred_check_branch
      %152 = sbr.rel (%p150) target = $region28
    $region27: #{generator_forward.12} parent=5 // pred_region
      // Predicated region
      $region29: #{generator_forward.12} parent=27 // pred_check
        %p153 = pneg %p30
      $region30: #{generator_forward.12} parent=27 // pred_check_branch
        %155 = sbr.rel (%p153) target = $region32
      $region31: #{generator_forward.12} parent=27 // pred_region
        %p156 = scmp.lt.s32.totalorder %s10, 1
        %s157 = scalar_select %p156, %s10, 1
        %s158 = smul.addr %s157, 4
        %s159 = smul.addr %s158, 4
        %s160 = scalar_lea.vmem %s0, %s159
      $region32: #{generator_forward.12} parent=27 // pred_fallthru
        _
    $region28: #{generator_forward.12} parent=5 // pred_fallthru
      _
    %p161 = scmp.le.s32.totalorder 1, %s10
    %p162 = scmp.lt.s32.totalorder %s10, 3
    %p163 = pnand %p161, %p162
    %p164 = pneg %p163
    // Predicated region
    $region33: #{generator_forward.12} parent=5 // pred_check
      _
    $region34: #{generator_forward.12} parent=5 // pred_check_branch
      %166 = sbr.rel (%p163) target = $region36
    $region35: #{generator_forward.12} parent=5 // pred_region
      %s167 = ssub.s32 %s10, 1
      %p168 = scmp.lt.s32.totalorder %s15, 1
      %s169 = scalar_select %p168, %s15, 1
      %s170 = smul.addr %s169, 4
      %s171 = smul.addr %s170, 4
      %s172 = scalar_lea.vmem %s0, %s171
      %p173 = pneg %p36
      %p174 = pneg %p33
      %p175 = pneg %p57
      %p176 = pneg %p54
      %p177 = pneg %p78
      %p178 = pneg %p75
      %p179 = pneg %p99
      %p180 = pneg %p96
      %p181 = pneg %p125
      %p182 = pneg %p122
      %p183 = scmp.lt.s32.totalorder %s15, 1
      %s184 = scalar_select %p183, %s15, 1
      %s185 = smul.addr %s184, 2
      %s186 = smul.addr %s185, 8
      %s187 = scalar_lea.vmem %s4, %s186
      %p188 = scmp.lt.s32.totalorder %s15, 1
      %s189 = scalar_select %p188, %s15, 1
      %s190 = smul.addr %s189, 4
      %s191 = smul.addr %s190, 4
      %s192 = scalar_lea.vmem %s0, %s191
      %p193 = scmp.lt.s32.totalorder %s15, 1
      %s194 = scalar_select %p193, %s15, 1
      %s195 = smul.addr %s194, 2
      %s196 = smul.addr %s195, 8
      %s197 = scalar_lea.vmem %s4, %s196
      %v198 = vld [vmem:[%s192] sm:$0xff]
      %v199 = vld [vmem:[%s192 + $0x8] sm:$0xff]
      %v200 = vld [vmem:[%s1] sm:$0xf]
      %v201 = vld [vmem:[%s1 + $0x4] sm:$0xf]
      %v202 = vld [vmem:[%s1 + $0x8] sm:$0xf]
      %v203 = vld [vmem:[%s1 + $0xc] sm:$0xf]
      %v204 = vld [vmem:[%s1 + $0x10] sm:$0xf]
      %v205 = vld [vmem:[%s1 + $0x14] sm:$0xf]
      %v206 = vld [vmem:[%s1 + $0x18] sm:$0xf]
      %v207 = vld [vmem:[%s1 + $0x1c] sm:$0xf]
      %v208 = vld [vmem:[%s1 + $0x20] sm:$0xf]
      %v209 = vld [vmem:[%s1 + $0x24] sm:$0xf]
      %v210 = vld [vmem:[%s1 + $0x28] sm:$0xf]
      %v211 = vld [vmem:[%s1 + $0x2c] sm:$0xf]
      %v212 = vld [vmem:[%s1 + $0x30] sm:$0xf]
      %v213 = vld [vmem:[%s1 + $0x34] sm:$0xf]
      %v214 = vld [vmem:[%s1 + $0x38] sm:$0xf]
      %v215 = vld [vmem:[%s1 + $0x3c] sm:$0xf]
      %v216 = vld [vmem:[%s1 + $0x40] sm:$0xf]
      %v217 = vld [vmem:[%s1 + $0x44] sm:$0xf]
      %v218 = vld [vmem:[%s1 + $0x48] sm:$0xf]
      %v219 = vld [vmem:[%s1 + $0x4c] sm:$0xf]
      %v220 = vld [vmem:[%s1 + $0x50] sm:$0xf]
      %v221 = vld [vmem:[%s1 + $0x54] sm:$0xf]
      %v222 = vld [vmem:[%s1 + $0x58] sm:$0xf]
      %v223 = vld [vmem:[%s1 + $0x5c] sm:$0xf]
      %v224 = vld [vmem:[%s1 + $0x60] sm:$0xf]
      %v225 = vld [vmem:[%s1 + $0x64] sm:$0xf]
      %v226 = vld [vmem:[%s1 + $0x68] sm:$0xf]
      %v227 = vld [vmem:[%s1 + $0x6c] sm:$0xf]
      %v228 = vld [vmem:[%s1 + $0x70] sm:$0xf]
      %v229 = vld [vmem:[%s1 + $0x74] sm:$0xf]
      %v230 = vld [vmem:[%s1 + $0x78] sm:$0xf]
      %v231 = vld [vmem:[%s1 + $0x7c] sm:$0xf]
      %v234 = vunpack.c.l.b16 %v198
      %v235 = vunpack.c.h.b16 %v198
      %v236 = vunpack.c.l.b16 %v199
      %v237 = vunpack.c.h.b16 %v199
      %v238 = vpack.c.b16 %v236, %v234
      %v239 = vpack.c.b16 %v237, %v235
      %v274 = vunpack.c.l.b16 %v200
      %v275 = vunpack.c.l.b16 %v201
      %v276 = vunpack.c.l.b16 %v202
      %v277 = vunpack.c.l.b16 %v203
      %v278 = vunpack.c.l.b16 %v204
      %v279 = vunpack.c.l.b16 %v205
      %v280 = vunpack.c.l.b16 %v206
      %v281 = vunpack.c.l.b16 %v207
      %v282 = vunpack.c.l.b16 %v208
      %v283 = vunpack.c.l.b16 %v209
      %v284 = vunpack.c.l.b16 %v210
      %v285 = vunpack.c.l.b16 %v211
      %v286 = vunpack.c.l.b16 %v212
      %v287 = vunpack.c.l.b16 %v213
      %v288 = vunpack.c.l.b16 %v214
      %v289 = vunpack.c.l.b16 %v215
      %v290 = vunpack.c.l.b16 %v216
      %v291 = vunpack.c.l.b16 %v217
      %v292 = vunpack.c.l.b16 %v218
      %v293 = vunpack.c.l.b16 %v219
      %v294 = vunpack.c.l.b16 %v220
      %v295 = vunpack.c.l.b16 %v221
      %v296 = vunpack.c.l.b16 %v222
      %v297 = vunpack.c.l.b16 %v223
      %v298 = vunpack.c.l.b16 %v224
      %v299 = vunpack.c.l.b16 %v225
      %v300 = vunpack.c.l.b16 %v226
      %v301 = vunpack.c.l.b16 %v227
      %v302 = vunpack.c.l.b16 %v228
      %v303 = vunpack.c.l.b16 %v229
      %v304 = vunpack.c.l.b16 %v230
      %v305 = vunpack.c.l.b16 %v231
      %v306 = vpack.c.b16 %v275, %v274
      %v307 = vpack.c.b16 %v277, %v276
      %v308 = vpack.c.b16 %v279, %v278
      %v309 = vpack.c.b16 %v281, %v280
      %v310 = vpack.c.b16 %v283, %v282
      %v311 = vpack.c.b16 %v285, %v284
      %v312 = vpack.c.b16 %v287, %v286
      %v313 = vpack.c.b16 %v289, %v288
      %v314 = vpack.c.b16 %v291, %v290
      %v315 = vpack.c.b16 %v293, %v292
      %v316 = vpack.c.b16 %v295, %v294
      %v317 = vpack.c.b16 %v297, %v296
      %v318 = vpack.c.b16 %v299, %v298
      %v319 = vpack.c.b16 %v301, %v300
      %v320 = vpack.c.b16 %v303, %v302
      %v321 = vpack.c.b16 %v305, %v304
      %338 = vmatpush.bf16.msra.mxu0 %v313
      %339 = vmatpush.bf16.msra.mxu0 %v312
      %340 = vmatpush.bf16.msra.mxu0 %v311
      %341 = vmatpush.bf16.msra.mxu0 %v310
      %342 = vmatpush.bf16.msra.mxu0 %v309
      %343 = vmatpush.bf16.msra.mxu0 %v308
      %344 = vmatpush.bf16.msra.mxu0 %v307
      %345 = vmatpush.bf16.msra.mxu0 %v306
      %346 = vmatmul.bf16.gmra.mxu0 %v238
      %v347 = vpop.f32.mrf.mxu0
      %v348 = vadd.f32 0.0, %v347
      %v349 = vpop.f32.mrf.mxu0
      %v350 = vadd.f32 0.0, %v349
      %351 = vdwg.mxu0
      %352 = vmatpush.bf16.msra.mxu0 %v321
      %353 = vmatpush.bf16.msra.mxu0 %v320
      %354 = vmatpush.bf16.msra.mxu0 %v319
      %355 = vmatpush.bf16.msra.mxu0 %v318
      %356 = vmatpush.bf16.msra.mxu0 %v317
      %357 = vmatpush.bf16.msra.mxu0 %v316
      %358 = vmatpush.bf16.msra.mxu0 %v315
      %359 = vmatpush.bf16.msra.mxu0 %v314
      %360 = vmatmul.bf16.gmra.mxu0 %v239
      %v361 = vpop.f32.mrf.mxu0
      %v362 = vadd.f32 %v348, %v361
      %v363 = vpop.f32.mrf.mxu0
      %v364 = vadd.f32 %v350, %v363
      %365 = vdwg.mxu0
      %v366 = vld [vmem:[%s2] sm:$0x1]
      %v367 = vld [vmem:[%s3] sm:$0x1]
      %vm368 = vcmask 261120
      %v369 = vsel %vm368, %v362, 0.0
      %v370 = vsel %vm368, %v364, 0.0
      %v371 = vadd.f32 %v369, %v370
      %v372 = vrot.slane %v371, 4
      %v373 = vadd.f32 %v371, %v372
      %v374 = vrot.slane %v373, 2
      %v375 = vadd.f32 %v373, %v374
      %v376 = vrot.slane %v375, 1
      %v377 = vadd.f32 %v375, %v376
      %v378 = vadd.f32 %v377, 0.0
      %v379 = vrcp.pop 16.0
      %v380 = vmul.f32 16.0, %v379
      %v381 = vsub.f32 1.0, %v380
      %v382 = vmul.f32 %v379, %v381
      %v383 = vadd.f32 %v379, %v382
      %vm384 = vweird.f32 %v379
      %v385 = vsel %vm384, %v379, %v383
      %v386 = vmul.f32 %v378, %v385
      %v387 = vsub.f32 %v362, %v386
      %v388 = vsub.f32 %v364, %v386
      %v389 = vmul.f32 %v387, %v387
      %v390 = vmul.f32 %v388, %v388
      %v391 = vsel %vm368, %v389, 0.0
      %v392 = vsel %vm368, %v390, 0.0
      %v393 = vadd.f32 %v391, %v392
      %v394 = vrot.slane %v393, 4
      %v395 = vadd.f32 %v393, %v394
      %v396 = vrot.slane %v395, 2
      %v397 = vadd.f32 %v395, %v396
      %v398 = vrot.slane %v397, 1
      %v399 = vadd.f32 %v397, %v398
      %v400 = vadd.f32 %v399, 0.0
      %v401 = vmul.f32 %v400, %v385
      %v402 = vadd.f32 %v401, 1e-05
      %v403 = vrsqrt.pop %v402
      %v404 = vmul.f32 %v403, %v402
      %v405 = vmul.f32 %v404, %v403
      %v406 = vmul.f32 0.5, %v405
      %v407 = vsub.f32 1.5, %v406
      %v408 = vmul.f32 %v403, %v407
      %vm409 = vweird.f32 %v402
      %vm410 = vweird.f32 %v403
      %vm411 = vmor %vm409, %vm410
      %v412 = vsel %vm411, %v403, %v408
      %v413 = vmul.f32 %v387, %v412
      %v414 = vmul.f32 %v388, %v412
      %v416 = vperm.slane %v366, 0
      %v418 = vmul.f32 %v413, %v416
      %v419 = vmul.f32 %v414, %v416
      %v421 = vperm.slane %v367, 0
      %v423 = vadd.f32 %v418, %v421
      %v424 = vadd.f32 %v419, %v421
      %v425 = vmax.f32 %v423, 0.0
      %v426 = vmax.f32 %v424, 0.0
      %427 = vst.msk [vmem:[%s197] sm:$0xff] %vm368, %v425
      %428 = vst.msk [vmem:[%s197 + $0x8] sm:$0xff] %vm368, %v426
      %p429 = scmp.lt.s32.totalorder %s15, 1
      %s430 = scalar_select %p429, %s15, 1
      %s431 = smul.addr %s430, 2
      %s432 = smul.addr %s431, 8
      %s433 = scalar_lea.vmem %s4, %s432
      // Predicated region
      $region37: #{generator_forward.12} parent=35 // pred_check
        %p434 = pneg %p122
      $region38: #{generator_forward.12} parent=35 // pred_check_branch
        %436 = sbr.rel (%p434) target = $region40
      $region39: #{generator_forward.12} parent=35 // pred_region
        _
      $region40: #{generator_forward.12} parent=35 // pred_fallthru
        _
    $region36: #{generator_forward.12} parent=5 // pred_fallthru
      _
    %p437 = scmp.le.s32.totalorder 2, %s10
    // Predicated region
    $region41: #{generator_forward.12} parent=5 // pred_check
      %p438 = pneg %p437
    $region42: #{generator_forward.12} parent=5 // pred_check_branch
      %440 = sbr.rel (%p438) target = $region44
    $region43: #{generator_forward.12} parent=5 // pred_region
      %s441 = ssub.s32 %s10, 2
      // Predicated region
      $region45: #{generator_forward.12} parent=43 // pred_check
        %p442 = pneg %p128
      $region46: #{generator_forward.12} parent=43 // pred_check_branch
        %444 = sbr.rel (%p442) target = $region48
      $region47: #{generator_forward.12} parent=43 // pred_region
        %p445 = scmp.lt.s32.totalorder %s16, 1
        %s446 = scalar_select %p445, %s16, 1
        %s447 = smul.addr %s446, 2
        %s448 = smul.addr %s447, 8
        %s449 = scalar_lea.vmem %s4, %s448
      $region48: #{generator_forward.12} parent=43 // pred_fallthru
        _
    $region44: #{generator_forward.12} parent=5 // pred_fallthru
      _
  $region6: #{generator_forward.12} parent=0 // loop_footer
    %s14 = sadd.s32 1, %s10
  $region7: #{generator_forward.12} parent=0 // loop_footer_branch
    %9 = sbr.rel target = $region3
  $region8: #{generator_forward.12} parent=0 // loop_exit
    _

// kernel: generator_forward.13
$region0: #{generator_forward.13}
  #allocation0 [shape = 'u32[]', space=smem, size = 0x4, offset = 0x4, fixed_abs, tag = 'smem constant byte address 0x4 - core index']
  #allocation1 [shape = 'u32[72,128]{1,0:T(1,128)}', space=vmem, size = 0x9000, scoped, tag = 'internal scratch']
  %s0 = inlined_call_operand.vmem [shape: bf16[2,16,288], index: 0, kind: input, shape index: {}]
  %s1 = inlined_call_operand.vmem [shape: bf16[288,32], index: 1, kind: input, shape index: {}]
  %s2 = inlined_call_operand.vmem [shape: f32[1,32], index: 2, kind: input, shape index: {}]
  %s3 = inlined_call_operand.vmem [shape: f32[1,32], index: 3, kind: input, shape index: {}]
  %s4 = inlined_call_operand.vmem [shape: f32[2,16,32], index: 4, kind: output, shape index: {}]
  %s5 = sld [smem:[#allocation0]]
  $region49: #{generator_forward.13} parent=0
    _
  %s7 = ssub.s32 1, %s5
  %s8 = scalar_select 0, %s7, %s5
  loop: start=0, step=1, limit=4
  $region2: #{generator_forward.13} parent=0 // loop_pre_header
    _
  $region3: #{generator_forward.13} parent=0 // loop_header
    %s10 = sphi 0, %s14
    %p11 = scmp.ge.s32.totalorder %s10, 4
    %s20 = sphi 0, %s22
    %s23 = sphi 0, %s20
    %s24 = sphi 0, %s23
    %s40 = sphi 0, %s24
    %s44 = sphi 0, %s44
    %s46 = sphi 0, %s44
    %s47 = sphi 0, %s46
    %s61 = sphi 0, %s47
    %s65 = sphi 0, %s65
    %s67 = sphi 0, %s65
    %s68 = sphi 0, %s67
    %s82 = sphi 0, %s68
    %s86 = sphi 0, %s86
    %s88 = sphi 0, %s86
    %s89 = sphi 0, %s88
    %s103 = sphi 0, %s89
    %s109 = sphi 0, %s111
    %s112 = sphi 0, %s109
    %s113 = sphi 0, %s112
    %s129 = sphi 0, %s113
  $region4: #{generator_forward.13} parent=0 // loop_header_branch
    %13 = sbr.rel (%p11) target = $region8
  $region5: #{generator_forward.13} parent=0 // loop_body
    %s15 = ssub.s32 %s10, 1
    %s16 = ssub.s32 %s10, 2
    %s17 = sadd.s32 %s10, 1
    %s18 = ssub.s32 %s10, %s17
    %p19 = scmp.eq.s32.totalorder %s18, 0
    %s21 = sadd.s32 %s20, 1
    %s22 = scalar_select %p19, %s20, %s21
    %p25 = pneg %p19
    %p26 = scmp.eq.s32.totalorder %s10, 1
    %p27 = por %p25, %p26
    %p28 = scmp.ne.s32.totalorder %s20, %s23
    %p29 = scmp.eq.s32.totalorder %s10, 0
    %p30 = por %p28, %p29
    %p31 = scmp.ne.s32.totalorder %s20, %s23
    %p32 = scmp.eq.s32.totalorder %s15, 1
    %p33 = por %p31, %p32
    %p34 = scmp.ne.s32.totalorder %s23, %s24
    %p35 = scmp.eq.s32.totalorder %s15, 0
    %p36 = por %p34, %p35
    %p37 = scmp.ne.s32.totalorder %s23, %s24
    %p38 = scmp.eq.s32.totalorder %s16, 1
    %p39 = por %p37, %p38
    %p41 = scmp.ne.s32.totalorder %s24, %s40
    %p42 = scmp.eq.s32.totalorder %s16, 0
    %p43 = por %p41, %p42
    %s45 = sadd.s32 %s44, 1
    %p48 = scmp.eq.s32.totalorder %s10, 1
    %p49 = scmp.ne.s32.totalorder %s44, %s46
    %p50 = scmp.eq.s32.totalorder %s10, 0
    %p51 = por %p49, %p50
    %p52 = scmp.ne.s32.totalorder %s44, %s46
    %p53 = scmp.eq.s32.totalorder %s15, 1
    %p54 = por %p52, %p53
    %p55 = scmp.ne.s32.totalorder %s46, %s47
    %p56 = scmp.eq.s32.totalorder %s15, 0
    %p57 = por %p55, %p56
    %p58 = scmp.ne.s32.totalorder %s46, %s47
    %p59 = scmp.eq.s32.totalorder %s16, 1
    %p60 = por %p58, %p59
    %p62 = scmp.ne.s32.totalorder %s47, %s61
    %p63 = scmp.eq.s32.totalorder %s16, 0
    %p64 = por %p62, %p63
    %s66 = sadd.s32 %s65, 1
    %p69 = scmp.eq.s32.totalorder %s10, 1
    %p70 = scmp.ne.s32.totalorder %s65, %s67
    %p71 = scmp.eq.s32.totalorder %s10, 0
    %p72 = por %p70, %p71
    %p73 = scmp.ne.s32.totalorder %s65, %s67
    %p74 = scmp.eq.s32.totalorder %s15, 1
    %p75 = por %p73, %p74
    %p76 = scmp.ne.s32.totalorder %s67, %s68
    %p77 = scmp.eq.s32.totalorder %s15, 0
    %p78 = por %p76, %p77
    %p79 = scmp.ne.s32.totalorder %s67, %s68
    %p80 = scmp.eq.s32.totalorder %s16, 1
    %p81 = por %p79, %p80
    %p83 = scmp.ne.s32.totalorder %s68, %s82
    %p84 = scmp.eq.s32.totalorder %s16, 0
    %p85 = por %p83, %p84
    %s87 = sadd.s32 %s86, 1
    %p90 = scmp.eq.s32.totalorder %s10, 1
    %p91 = scmp.ne.s32.totalorder %s86, %s88
    %p92 = scmp.eq.s32.totalorder %s10, 0
    %p93 = por %p91, %p92
    %p94 = scmp.ne.s32.totalorder %s86, %s88
    %p95 = scmp.eq.s32.totalorder %s15, 1
    %p96 = por %p94, %p95
    %p97 = scmp.ne.s32.totalorder %s88, %s89
    %p98 = scmp.eq.s32.totalorder %s15, 0
    %p99 = por %p97, %p98
    %p100 = scmp.ne.s32.totalorder %s88, %s89
    %p101 = scmp.eq.s32.totalorder %s16, 1
    %p102 = por %p100, %p101
    %p104 = scmp.ne.s32.totalorder %s89, %s103
    %p105 = scmp.eq.s32.totalorder %s16, 0
    %p106 = por %p104, %p105
    %s107 = ssub.s32 %s10, %s17
    %p108 = scmp.eq.s32.totalorder %s107, 0
    %s110 = sadd.s32 %s109, 1
    %s111 = scalar_select %p108, %s109, %s110
    %p114 = pneg %p108
    %p115 = scmp.eq.s32.totalorder %s10, 1
    %p116 = por %p114, %p115
    %p117 = scmp.ne.s32.totalorder %s109, %s112
    %p118 = scmp.eq.s32.totalorder %s10, 0
    %p119 = por %p117, %p118
    %p120 = scmp.ne.s32.totalorder %s109, %s112
    %p121 = scmp.eq.s32.totalorder %s15, 1
    %p122 = por %p120, %p121
    %p123 = scmp.ne.s32.totalorder %s112, %s113
    %p124 = scmp.eq.s32.totalorder %s15, 0
    %p125 = por %p123, %p124
    %p126 = scmp.ne.s32.totalorder %s112, %s113
    %p127 = scmp.eq.s32.totalorder %s16, 1
    %p128 = por %p126, %p127
    %p130 = scmp.ne.s32.totalorder %s113, %s129
    %p131 = scmp.eq.s32.totalorder %s16, 0
    %p132 = por %p130, %p131
    %p133 = scmp.le.s32.totalorder 1, %s10
    %p134 = scmp.lt.s32.totalorder %s10, 3
    %p135 = pnand %p133, %p134
    %p136 = pneg %p135
    // Predicated region
    $region9: #{generator_forward.13} parent=5 // pred_check
      _
    $region10: #{generator_forward.13} parent=5 // pred_check_branch
      %138 = sbr.rel (%p135) target = $region12
    $region11: #{generator_forward.13} parent=5 // pred_region
      %s139 = ssub.s32 %s10, 1
      // Predicated region
      $region13: #{generator_forward.13} parent=11 // pred_check
        %p140 = pneg %p57
      $region14: #{generator_forward.13} parent=11 // pred_check_branch
        %142 = sbr.rel (%p140) target = $region16
      $region15: #{generator_forward.13} parent=11 // pred_region
        _
      $region16: #{generator_forward.13} parent=11 // pred_fallthru
        _
      // Predicated region
      $region17: #{generator_forward.13} parent=11 // pred_check
        %p143 = pneg %p78
      $region18: #{generator_forward.13} parent=11 // pred_check_branch
        %145 = sbr.rel (%p143) target = $region20
      $region19: #{generator_forward.13} parent=11 // pred_region
        _
      $region20: #{generator_forward.13} parent=11 // pred_fallthru
        _
      // Predicated region
      $region21: #{generator_forward.13} parent=11 // pred_check
        %p146 = pneg %p99
      $region22: #{generator_forward.13} parent=11 // pred_check_branch
        %148 = sbr.rel (%p146) target = $region24
      $region23: #{generator_forward.13} parent=11 // pred_region
        _
      $region24: #{generator_forward.13} parent=11 // pred_fallthru
        _
    $region12: #{generator_forward.13} parent=5 // pred_fallthru
      _
    %p149 = scmp.lt.s32.totalorder %s10, 2
    // Predicated region
    $region25: #{generator_forward.13} parent=5 // pred_check
      %p150 = pneg %p149
    $region26: #{generator_forward.13} parent=5 // pred_check_branch
      %152 = sbr.rel (%p150) target = $region28
    $region27: #{generator_forward.13} parent=5 // pred_region
      // Predicated region
      $region29: #{generator_forward.13} parent=27 // pred_check
        %p153 = pneg %p30
      $region30: #{generator_forward.13} parent=27 // pred_check_branch
        %155 = sbr.rel (%p153) target = $region32
      $region31: #{generator_forward.13} parent=27 // pred_region
        %p156 = scmp.lt.s32.totalorder %s10, 1
        %s157 = scalar_select %p156, %s10, 1
        %s158 = smul.addr %s157, 6
        %s159 = smul.addr %s158, 4
        %s160 = scalar_lea.vmem %s0, %s159
      $region32: #{generator_forward.13} parent=27 // pred_fallthru
        _
    $region28: #{generator_forward.13} parent=5 // pred_fallthru
      _
    %p161 = scmp.le.s32.totalorder 1, %s10
    %p162 = scmp.lt.s32.totalorder %s10, 3
    %p163 = pnand %p161, %p162
    %p164 = pneg %p163
    // Predicated region
    $region33: #{generator_forward.13} parent=5 // pred_check
      _
    $region34: #{generator_forward.13} parent=5 // pred_check_branch
      %166 = sbr.rel (%p163) target = $region36
    $region35: #{generator_forward.13} parent=5 // pred_region
      %s167 = ssub.s32 %s10, 1
      %p168 = scmp.lt.s32.totalorder %s15, 1
      %s169 = scalar_select %p168, %s15, 1
      %s170 = smul.addr %s169, 6
      %s171 = smul.addr %s170, 4
      %s172 = scalar_lea.vmem %s0, %s171
      %p173 = pneg %p36
      %p174 = pneg %p33
      %p175 = pneg %p57
      %p176 = pneg %p54
      %p177 = pneg %p78
      %p178 = pneg %p75
      %p179 = pneg %p99
      %p180 = pneg %p96
      %p181 = pneg %p125
      %p182 = pneg %p122
      %p183 = scmp.lt.s32.totalorder %s15, 1
      %s184 = scalar_select %p183, %s15, 1
      %s185 = smul.addr %s184, 2
      %s186 = smul.addr %s185, 8
      %s187 = scalar_lea.vmem %s4, %s186
      %p188 = scmp.lt.s32.totalorder %s15, 1
      %s189 = scalar_select %p188, %s15, 1
      %s190 = smul.addr %s189, 6
      %s191 = smul.addr %s190, 4
      %s192 = scalar_lea.vmem %s0, %s191
      %p193 = scmp.lt.s32.totalorder %s15, 1
      %s194 = scalar_select %p193, %s15, 1
      %s195 = smul.addr %s194, 2
      %s196 = smul.addr %s195, 8
      %s197 = scalar_lea.vmem %s4, %s196
      %v199 = vld [vmem:[%s192] sm:$0xff]
      %v200 = vld [vmem:[%s192 + $0x8] sm:$0xf]
      %v201 = vld [vmem:[%s192 + $0xc] sm:$0xff]
      %v202 = vld [vmem:[%s192 + $0x14] sm:$0xf]
      %v203 = vld [vmem:[%s1] sm:$0xf]
      %v204 = vld [vmem:[%s1 + $0x4] sm:$0xf]
      %v205 = vld [vmem:[%s1 + $0x8] sm:$0xf]
      %v206 = vld [vmem:[%s1 + $0xc] sm:$0xf]
      %v207 = vld [vmem:[%s1 + $0x10] sm:$0xf]
      %v208 = vld [vmem:[%s1 + $0x14] sm:$0xf]
      %v209 = vld [vmem:[%s1 + $0x18] sm:$0xf]
      %v210 = vld [vmem:[%s1 + $0x1c] sm:$0xf]
      %v211 = vld [vmem:[%s1 + $0x20] sm:$0xf]
      %v212 = vld [vmem:[%s1 + $0x24] sm:$0xf]
      %v213 = vld [vmem:[%s1 + $0x28] sm:$0xf]
      %v214 = vld [vmem:[%s1 + $0x2c] sm:$0xf]
      %v215 = vld [vmem:[%s1 + $0x30] sm:$0xf]
      %v216 = vld [vmem:[%s1 + $0x34] sm:$0xf]
      %v217 = vld [vmem:[%s1 + $0x38] sm:$0xf]
      %v218 = vld [vmem:[%s1 + $0x3c] sm:$0xf]
      %v219 = vld [vmem:[%s1 + $0x40] sm:$0xf]
      %v220 = vld [vmem:[%s1 + $0x44] sm:$0xf]
      %v221 = vld [vmem:[%s1 + $0x48] sm:$0xf]
      %v222 = vld [vmem:[%s1 + $0x4c] sm:$0xf]
      %v223 = vld [vmem:[%s1 + $0x50] sm:$0xf]
      %v224 = vld [vmem:[%s1 + $0x54] sm:$0xf]
      %v225 = vld [vmem:[%s1 + $0x58] sm:$0xf]
      %v226 = vld [vmem:[%s1 + $0x5c] sm:$0xf]
      %v227 = vld [vmem:[%s1 + $0x60] sm:$0xf]
      %v228 = vld [vmem:[%s1 + $0x64] sm:$0xf]
      %v229 = vld [vmem:[%s1 + $0x68] sm:$0xf]
      %v230 = vld [vmem:[%s1 + $0x6c] sm:$0xf]
      %v231 = vld [vmem:[%s1 + $0x70] sm:$0xf]
      %v232 = vld [vmem:[%s1 + $0x74] sm:$0xf]
      %v233 = vld [vmem:[%s1 + $0x78] sm:$0xf]
      %v234 = vld [vmem:[%s1 + $0x7c] sm:$0xf]
      %v235 = vld [vmem:[%s1 + $0x80] sm:$0xf]
      %v236 = vld [vmem:[%s1 + $0x84] sm:$0xf]
      %v237 = vld [vmem:[%s1 + $0x88] sm:$0xf]
      %v238 = vld [vmem:[%s1 + $0x8c] sm:$0xf]
      %v243 = vunpack.c.l.b16 %v199
      %v244 = vunpack.c.h.b16 %v199
      %v245 = vunpack.c.l.b16 %v200
      %v246 = vunpack.c.l.b16 %v201
      %v247 = vunpack.c.h.b16 %v201
      %v248 = vunpack.c.l.b16 %v202
      %v249 = vpack.c.b16 %v246, %v243
      %v250 = vpack.c.b16 %v247, %v244
      %v251 = vpack.c.b16 %v248, %v245
      %v290 = vunpack.c.l.b16 %v203
      %v291 = vunpack.c.l.b16 %v204
      %v292 = vunpack.c.l.b16 %v205
      %v293 = vunpack.c.l.b16 %v206
      %v294 = vunpack.c.l.b16 %v207
      %v295 = vunpack.c.l.b16 %v208
      %v296 = vunpack.c.l.b16 %v209
      %v297 = vunpack.c.l.b16 %v210
      %v298 = vunpack.c.l.b16 %v211
      %v299 = vunpack.c.l.b16 %v212
      %v300 = vunpack.c.l.b16 %v213
      %v301 = vunpack.c.l.b16 %v214
      %v302 = vunpack.c.l.b16 %v215
      %v303 = vunpack.c.l.b16 %v216
      %v304 = vunpack.c.l.b16 %v217
      %v305 = vunpack.c.l.b16 %v218
      %v306 = vunpack.c.l.b16 %v219
      %v307 = vunpack.c.l.b16 %v220
      %v308 = vunpack.c.l.b16 %v221
      %v309 = vunpack.c.l.b16 %v222
      %v310 = vunpack.c.l.b16 %v223
      %v311 = vunpack.c.l.b16 %v224
      %v312 = vunpack.c.l.b16 %v225
      %v313 = vunpack.c.l.b16 %v226
      %v314 = vunpack.c.l.b16 %v227
      %v315 = vunpack.c.l.b16 %v228
      %v316 = vunpack.c.l.b16 %v229
      %v317 = vunpack.c.l.b16 %v230
      %v318 = vunpack.c.l.b16 %v231
      %v319 = vunpack.c.l.b16 %v232
      %v320 = vunpack.c.l.b16 %v233
      %v321 = vunpack.c.l.b16 %v234
      %v322 = vunpack.c.l.b16 %v235
      %v323 = vunpack.c.l.b16 %v236
      %v324 = vunpack.c.l.b16 %v237
      %v325 = vunpack.c.l.b16 %v238
      %v326 = vpack.c.b16 %v291, %v290
      %v327 = vpack.c.b16 %v293, %v292
      %v328 = vpack.c.b16 %v295, %v294
      %v329 = vpack.c.b16 %v297, %v296
      %v330 = vpack.c.b16 %v299, %v298
      %v331 = vpack.c.b16 %v301, %v300
      %v332 = vpack.c.b16 %v303, %v302
      %v333 = vpack.c.b16 %v305, %v304
      %v334 = vpack.c.b16 %v307, %v306
      %v335 = vpack.c.b16 %v309, %v308
      %v336 = vpack.c.b16 %v311, %v310
      %v337 = vpack.c.b16 %v313, %v312
      %v338 = vpack.c.b16 %v315, %v314
      %v339 = vpack.c.b16 %v317, %v316
      %v340 = vpack.c.b16 %v319, %v318
      %v341 = vpack.c.b16 %v321, %v320
      %v342 = vpack.c.b16 %v323, %v322
      %v343 = vpack.c.b16 %v325, %v324
      %vm362 = vcmask 261120
      %v364 = vsel %vm362, %v251, 0
      %366 = vmatpush.bf16.msra.mxu0 %v333
      %367 = vmatpush.bf16.msra.mxu0 %v332
      %368 = vmatpush.bf16.msra.mxu0 %v331
      %369 = vmatpush.bf16.msra.mxu0 %v330
      %370 = vmatpush.bf16.msra.mxu0 %v329
      %371 = vmatpush.bf16.msra.mxu0 %v328
      %372 = vmatpush.bf16.msra.mxu0 %v327
      %373 = vmatpush.bf16.msra.mxu0 %v326
      %374 = vmatmul.bf16.gmra.mxu0 %v249
      %v375 = vpop.f32.mrf.mxu0
      %v376 = vadd.f32 0.0, %v375
      %v377 = vpop.f32.mrf.mxu0
      %v378 = vadd.f32 0.0, %v377
      %379 = vdwg.mxu0
      %380 = vmatpush.bf16.msra.mxu0 %v341
      %381 = vmatpush.bf16.msra.mxu0 %v340
      %382 = vmatpush.bf16.msra.mxu0 %v339
      %383 = vmatpush.bf16.msra.mxu0 %v338
      %384 = vmatpush.bf16.msra.mxu0 %v337
      %385 = vmatpush.bf16.msra.mxu0 %v336
      %386 = vmatpush.bf16.msra.mxu0 %v335
      %387 = vmatpush.bf16.msra.mxu0 %v334
      %388 = vmatmul.bf16.gmra.mxu0 %v250
      %v389 = vpop.f32.mrf.mxu0
      %v390 = vadd.f32 %v376, %v389
      %v391 = vpop.f32.mrf.mxu0
      %v392 = vadd.f32 %v378, %v391
      %393 = vdwg.mxu0
      %394 = vmatpush.bf16.msra.mxu0 0
      %395 = vmatpush.bf16.msra.mxu0 0
      %396 = vmatpush.bf16.msra.mxu0 0
      %397 = vmatpush.bf16.msra.mxu0 0
      %398 = vmatpush.bf16.msra.mxu0 0
      %399 = vmatpush.bf16.msra.mxu0 0
      %400 = vmatpush.bf16.msra.mxu0 %v343
      %401 = vmatpush.bf16.msra.mxu0 %v342
      %402 = vmatmul.bf16.gmra.mxu0 %v364
      %v403 = vpop.f32.mrf.mxu0
      %v404 = vadd.f32 %v390, %v403
      %v405 = vpop.f32.mrf.mxu0
      %v406 = vadd.f32 %v392, %v405
      %407 = vdwg.mxu0
      %v408 = vld [vmem:[%s2] sm:$0x1]
      %v409 = vld [vmem:[%s3] sm:$0x1]
      %v410 = vsel %vm362, %v404, 0.0
      %v411 = vsel %vm362, %v406, 0.0
      %v412 = vadd.f32 %v410, %v411
      %v413 = vrot.slane %v412, 4
      %v414 = vadd.f32 %v412, %v413
      %v415 = vrot.slane %v414, 2
      %v416 = vadd.f32 %v414, %v415
      %v417 = vrot.slane %v416, 1
      %v418 = vadd.f32 %v416, %v417
      %v419 = vadd.f32 %v418, 0.0
      %v420 = vrcp.pop 16.0
      %v421 = vmul.f32 16.0, %v420
      %v422 = vsub.f32 1.0, %v421
      %v423 = vmul.f32 %v420, %v422
      %v424 = vadd.f32 %v420, %v423
      %vm425 = vweird.f32 %v420
      %v426 = vsel %vm425, %v420, %v424
      %v427 = vmul.f32 %v419, %v426
      %v428 = vsub.f32 %v404, %v427
      %v429 = vsub.f32 %v406, %v427
      %v430 = vmul.f32 %v428, %v428
      %v431 = vmul.f32 %v429, %v429
      %v432 = vsel %vm362, %v430, 0.0
      %v433 = vsel %vm362, %v431, 0.0
      %v434 = vadd.f32 %v432, %v433
      %v435 = vrot.slane %v434, 4
      %v436 = vadd.f32 %v434, %v435
      %v437 = vrot.slane %v436, 2
      %v438 = vadd.f32 %v436, %v437
      %v439 = vrot.slane %v438, 1
      %v440 = vadd.f32 %v438, %v439
      %v441 = vadd.f32 %v440, 0.0
      %v442 = vmul.f32 %v441, %v426
      %v443 = vadd.f32 %v442, 1e-05
      %v444 = vrsqrt.pop %v443
      %v445 = vmul.f32 %v444, %v443
      %v446 = vmul.f32 %v445, %v444
      %v447 = vmul.f32 0.5, %v446
      %v448 = vsub.f32 1.5, %v447
      %v449 = vmul.f32 %v444, %v448
      %vm450 = vweird.f32 %v443
      %vm451 = vweird.f32 %v444
      %vm452 = vmor %vm450, %vm451
      %v453 = vsel %vm452, %v444, %v449
      %v454 = vmul.f32 %v428, %v453
      %v455 = vmul.f32 %v429, %v453
      %v457 = vperm.slane %v408, 0
      %v459 = vmul.f32 %v454, %v457
      %v460 = vmul.f32 %v455, %v457
      %v462 = vperm.slane %v409, 0
      %v464 = vadd.f32 %v459, %v462
      %v465 = vadd.f32 %v460, %v462
      %v466 = vmax.f32 %v464, 0.0
      %v467 = vmax.f32 %v465, 0.0
      %468 = vst.msk [vmem:[%s197] sm:$0xff] %vm362, %v466
      %469 = vst.msk [vmem:[%s197 + $0x8] sm:$0xff] %vm362, %v467
      %p470 = scmp.lt.s32.totalorder %s15, 1
      %s471 = scalar_select %p470, %s15, 1
      %s472 = smul.addr %s471, 2
      %s473 = smul.addr %s472, 8
      %s474 = scalar_lea.vmem %s4, %s473
      // Predicated region
      $region37: #{generator_forward.13} parent=35 // pred_check
        %p475 = pneg %p122
      $region38: #{generator_forward.13} parent=35 // pred_check_branch
        %477 = sbr.rel (%p475) target = $region40
      $region39: #{generator_forward.13} parent=35 // pred_region
        _
      $region40: #{generator_forward.13} parent=35 // pred_fallthru
        _
    $region36: #{generator_forward.13} parent=5 // pred_fallthru
      _
    %p478 = scmp.le.s32.totalorder 2, %s10
    // Predicated region
    $region41: #{generator_forward.13} parent=5 // pred_check
      %p479 = pneg %p478
    $region42: #{generator_forward.13} parent=5 // pred_check_branch
      %481 = sbr.rel (%p479) target = $region44
    $region43: #{generator_forward.13} parent=5 // pred_region
      %s482 = ssub.s32 %s10, 2
      // Predicated region
      $region45: #{generator_forward.13} parent=43 // pred_check
        %p483 = pneg %p128
      $region46: #{generator_forward.13} parent=43 // pred_check_branch
        %485 = sbr.rel (%p483) target = $region48
      $region47: #{generator_forward.13} parent=43 // pred_region
        %p486 = scmp.lt.s32.totalorder %s16, 1
        %s487 = scalar_select %p486, %s16, 1
        %s488 = smul.addr %s487, 2
        %s489 = smul.addr %s488, 8
        %s490 = scalar_lea.vmem %s4, %s489
      $region48: #{generator_forward.13} parent=43 // pred_fallthru
        _
    $region44: #{generator_forward.13} parent=5 // pred_fallthru
      _
  $region6: #{generator_forward.13} parent=0 // loop_footer
    %s14 = sadd.s32 1, %s10
  $region7: #{generator_forward.13} parent=0 // loop_footer_branch
    %9 = sbr.rel target = $region3
  $region8: #{generator_forward.13} parent=0 // loop_exit
    _

// kernel: generator_forward.14
$region0: #{generator_forward.14}
  #allocation0 [shape = 'u32[]', space=smem, size = 0x4, offset = 0x4, fixed_abs, tag = 'smem constant byte address 0x4 - core index']
  #allocation1 [shape = 'u32[72,128]{1,0:T(1,128)}', space=vmem, size = 0x9000, scoped, tag = 'internal scratch']
  %s0 = inlined_call_operand.vmem [shape: bf16[2,16,288], index: 0, kind: input, shape index: {}]
  %s1 = inlined_call_operand.vmem [shape: bf16[288,32], index: 1, kind: input, shape index: {}]
  %s2 = inlined_call_operand.vmem [shape: f32[1,32], index: 2, kind: input, shape index: {}]
  %s3 = inlined_call_operand.vmem [shape: f32[1,32], index: 3, kind: input, shape index: {}]
  %s4 = inlined_call_operand.vmem [shape: f32[2,16,32], index: 4, kind: input, shape index: {}]
  %s5 = inlined_call_operand.vmem [shape: f32[2,16,32], index: 5, kind: output, shape index: {}]
  %s6 = sld [smem:[#allocation0]]
  $region53: #{generator_forward.14} parent=0
    _
  %s8 = ssub.s32 1, %s6
  %s9 = scalar_select 0, %s8, %s6
  loop: start=0, step=1, limit=4
  $region2: #{generator_forward.14} parent=0 // loop_pre_header
    _
  $region3: #{generator_forward.14} parent=0 // loop_header
    %s11 = sphi 0, %s15
    %p12 = scmp.ge.s32.totalorder %s11, 4
    %s21 = sphi 0, %s23
    %s24 = sphi 0, %s21
    %s25 = sphi 0, %s24
    %s41 = sphi 0, %s25
    %s45 = sphi 0, %s45
    %s47 = sphi 0, %s45
    %s48 = sphi 0, %s47
    %s62 = sphi 0, %s48
    %s66 = sphi 0, %s66
    %s68 = sphi 0, %s66
    %s69 = sphi 0, %s68
    %s83 = sphi 0, %s69
    %s87 = sphi 0, %s87
    %s89 = sphi 0, %s87
    %s90 = sphi 0, %s89
    %s104 = sphi 0, %s90
    %s110 = sphi 0, %s112
    %s113 = sphi 0, %s110
    %s114 = sphi 0, %s113
    %s130 = sphi 0, %s114
    %s136 = sphi 0, %s138
    %s139 = sphi 0, %s136
    %s140 = sphi 0, %s139
    %s156 = sphi 0, %s140
  $region4: #{generator_forward.14} parent=0 // loop_header_branch
    %14 = sbr.rel (%p12) target = $region8
  $region5: #{generator_forward.14} parent=0 // loop_body
    %s16 = ssub.s32 %s11, 1
    %s17 = ssub.s32 %s11, 2
    %s18 = sadd.s32 %s11, 1
    %s19 = ssub.s32 %s11, %s18
    %p20 = scmp.eq.s32.totalorder %s19, 0
    %s22 = sadd.s32 %s21, 1
    %s23 = scalar_select %p20, %s21, %s22
    %p26 = pneg %p20
    %p27 = scmp.eq.s32.totalorder %s11, 1
    %p28 = por %p26, %p27
    %p29 = scmp.ne.s32.totalorder %s21, %s24
    %p30 = scmp.eq.s32.totalorder %s11, 0
    %p31 = por %p29, %p30
    %p32 = scmp.ne.s32.totalorder %s21, %s24
    %p33 = scmp.eq.s32.totalorder %s16, 1
    %p34 = por %p32, %p33
    %p35 = scmp.ne.s32.totalorder %s24, %s25
    %p36 = scmp.eq.s32.totalorder %s16, 0
    %p37 = por %p35, %p36
    %p38 = scmp.ne.s32.totalorder %s24, %s25
    %p39 = scmp.eq.s32.totalorder %s17, 1
    %p40 = por %p38, %p39
    %p42 = scmp.ne.s32.totalorder %s25, %s41
    %p43 = scmp.eq.s32.totalorder %s17, 0
    %p44 = por %p42, %p43
    %s46 = sadd.s32 %s45, 1
    %p49 = scmp.eq.s32.totalorder %s11, 1
    %p50 = scmp.ne.s32.totalorder %s45, %s47
    %p51 = scmp.eq.s32.totalorder %s11, 0
    %p52 = por %p50, %p51
    %p53 = scmp.ne.s32.totalorder %s45, %s47
    %p54 = scmp.eq.s32.totalorder %s16, 1
    %p55 = por %p53, %p54
    %p56 = scmp.ne.s32.totalorder %s47, %s48
    %p57 = scmp.eq.s32.totalorder %s16, 0
    %p58 = por %p56, %p57
    %p59 = scmp.ne.s32.totalorder %s47, %s48
    %p60 = scmp.eq.s32.totalorder %s17, 1
    %p61 = por %p59, %p60
    %p63 = scmp.ne.s32.totalorder %s48, %s62
    %p64 = scmp.eq.s32.totalorder %s17, 0
    %p65 = por %p63, %p64
    %s67 = sadd.s32 %s66, 1
    %p70 = scmp.eq.s32.totalorder %s11, 1
    %p71 = scmp.ne.s32.totalorder %s66, %s68
    %p72 = scmp.eq.s32.totalorder %s11, 0
    %p73 = por %p71, %p72
    %p74 = scmp.ne.s32.totalorder %s66, %s68
    %p75 = scmp.eq.s32.totalorder %s16, 1
    %p76 = por %p74, %p75
    %p77 = scmp.ne.s32.totalorder %s68, %s69
    %p78 = scmp.eq.s32.totalorder %s16, 0
    %p79 = por %p77, %p78
    %p80 = scmp.ne.s32.totalorder %s68, %s69
    %p81 = scmp.eq.s32.totalorder %s17, 1
    %p82 = por %p80, %p81
    %p84 = scmp.ne.s32.totalorder %s69, %s83
    %p85 = scmp.eq.s32.totalorder %s17, 0
    %p86 = por %p84, %p85
    %s88 = sadd.s32 %s87, 1
    %p91 = scmp.eq.s32.totalorder %s11, 1
    %p92 = scmp.ne.s32.totalorder %s87, %s89
    %p93 = scmp.eq.s32.totalorder %s11, 0
    %p94 = por %p92, %p93
    %p95 = scmp.ne.s32.totalorder %s87, %s89
    %p96 = scmp.eq.s32.totalorder %s16, 1
    %p97 = por %p95, %p96
    %p98 = scmp.ne.s32.totalorder %s89, %s90
    %p99 = scmp.eq.s32.totalorder %s16, 0
    %p100 = por %p98, %p99
    %p101 = scmp.ne.s32.totalorder %s89, %s90
    %p102 = scmp.eq.s32.totalorder %s17, 1
    %p103 = por %p101, %p102
    %p105 = scmp.ne.s32.totalorder %s90, %s104
    %p106 = scmp.eq.s32.totalorder %s17, 0
    %p107 = por %p105, %p106
    %s108 = ssub.s32 %s11, %s18
    %p109 = scmp.eq.s32.totalorder %s108, 0
    %s111 = sadd.s32 %s110, 1
    %s112 = scalar_select %p109, %s110, %s111
    %p115 = pneg %p109
    %p116 = scmp.eq.s32.totalorder %s11, 1
    %p117 = por %p115, %p116
    %p118 = scmp.ne.s32.totalorder %s110, %s113
    %p119 = scmp.eq.s32.totalorder %s11, 0
    %p120 = por %p118, %p119
    %p121 = scmp.ne.s32.totalorder %s110, %s113
    %p122 = scmp.eq.s32.totalorder %s16, 1
    %p123 = por %p121, %p122
    %p124 = scmp.ne.s32.totalorder %s113, %s114
    %p125 = scmp.eq.s32.totalorder %s16, 0
    %p126 = por %p124, %p125
    %p127 = scmp.ne.s32.totalorder %s113, %s114
    %p128 = scmp.eq.s32.totalorder %s17, 1
    %p129 = por %p127, %p128
    %p131 = scmp.ne.s32.totalorder %s114, %s130
    %p132 = scmp.eq.s32.totalorder %s17, 0
    %p133 = por %p131, %p132
    %s134 = ssub.s32 %s11, %s18
    %p135 = scmp.eq.s32.totalorder %s134, 0
    %s137 = sadd.s32 %s136, 1
    %s138 = scalar_select %p135, %s136, %s137
    %p141 = pneg %p135
    %p142 = scmp.eq.s32.totalorder %s11, 1
    %p143 = por %p141, %p142
    %p144 = scmp.ne.s32.totalorder %s136, %s139
    %p145 = scmp.eq.s32.totalorder %s11, 0
    %p146 = por %p144, %p145
    %p147 = scmp.ne.s32.totalorder %s136, %s139
    %p148 = scmp.eq.s32.totalorder %s16, 1
    %p149 = por %p147, %p148
    %p150 = scmp.ne.s32.totalorder %s139, %s140
    %p151 = scmp.eq.s32.totalorder %s16, 0
    %p152 = por %p150, %p151
    %p153 = scmp.ne.s32.totalorder %s139, %s140
    %p154 = scmp.eq.s32.totalorder %s17, 1
    %p155 = por %p153, %p154
    %p157 = scmp.ne.s32.totalorder %s140, %s156
    %p158 = scmp.eq.s32.totalorder %s17, 0
    %p159 = por %p157, %p158
    %p160 = scmp.le.s32.totalorder 1, %s11
    %p161 = scmp.lt.s32.totalorder %s11, 3
    %p162 = pnand %p160, %p161
    %p163 = pneg %p162
    // Predicated region
    $region9: #{generator_forward.14} parent=5 // pred_check
      _
    $region10: #{generator_forward.14} parent=5 // pred_check_branch
      %165 = sbr.rel (%p162) target = $region12
    $region11: #{generator_forward.14} parent=5 // pred_region
      %s166 = ssub.s32 %s11, 1
      // Predicated region
      $region13: #{generator_forward.14} parent=11 // pred_check
        %p167 = pneg %p58
      $region14: #{generator_forward.14} parent=11 // pred_check_branch
        %169 = sbr.rel (%p167) target = $region16
      $region15: #{generator_forward.14} parent=11 // pred_region
        _
      $region16: #{generator_forward.14} parent=11 // pred_fallthru
        _
      // Predicated region
      $region17: #{generator_forward.14} parent=11 // pred_check
        %p170 = pneg %p79
      $region18: #{generator_forward.14} parent=11 // pred_check_branch
        %172 = sbr.rel (%p170) target = $region20
      $region19: #{generator_forward.14} parent=11 // pred_region
        _
      $region20: #{generator_forward.14} parent=11 // pred_fallthru
        _
      // Predicated region
      $region21: #{generator_forward.14} parent=11 // pred_check
        %p173 = pneg %p100
      $region22: #{generator_forward.14} parent=11 // pred_check_branch
        %175 = sbr.rel (%p173) target = $region24
      $region23: #{generator_forward.14} parent=11 // pred_region
        _
      $region24: #{generator_forward.14} parent=11 // pred_fallthru
        _
    $region12: #{generator_forward.14} parent=5 // pred_fallthru
      _
    %p176 = scmp.lt.s32.totalorder %s11, 2
    // Predicated region
    $region25: #{generator_forward.14} parent=5 // pred_check
      %p177 = pneg %p176
    $region26: #{generator_forward.14} parent=5 // pred_check_branch
      %179 = sbr.rel (%p177) target = $region28
    $region27: #{generator_forward.14} parent=5 // pred_region
      // Predicated region
      $region29: #{generator_forward.14} parent=27 // pred_check
        %p180 = pneg %p31
      $region30: #{generator_forward.14} parent=27 // pred_check_branch
        %182 = sbr.rel (%p180) target = $region32
      $region31: #{generator_forward.14} parent=27 // pred_region
        %p183 = scmp.lt.s32.totalorder %s11, 1
        %s184 = scalar_select %p183, %s11, 1
        %s185 = smul.addr %s184, 6
        %s186 = smul.addr %s185, 4
        %s187 = scalar_lea.vmem %s0, %s186
      $region32: #{generator_forward.14} parent=27 // pred_fallthru
        _
      // Predicated region
      $region33: #{generator_forward.14} parent=27 // pred_check
        %p188 = pneg %p120
      $region34: #{generator_forward.14} parent=27 // pred_check_branch
        %190 = sbr.rel (%p188) target = $region36
      $region35: #{generator_forward.14} parent=27 // pred_region
        %p191 = scmp.lt.s32.totalorder %s11, 1
        %s192 = scalar_select %p191, %s11, 1
        %s193 = smul.addr %s192, 2
        %s194 = smul.addr %s193, 8
        %s195 = scalar_lea.vmem %s4, %s194
      $region36: #{generator_forward.14} parent=27 // pred_fallthru
        _
    $region28: #{generator_forward.14} parent=5 // pred_fallthru
      _
    %p196 = scmp.le.s32.totalorder 1, %s11
    %p197 = scmp.lt.s32.totalorder %s11, 3
    %p198 = pnand %p196, %p197
    %p199 = pneg %p198
    // Predicated region
    $region37: #{generator_forward.14} parent=5 // pred_check
      _
    $region38: #{generator_forward.14} parent=5 // pred_check_branch
      %201 = sbr.rel (%p198) target = $region40
    $region39: #{generator_forward.14} parent=5 // pred_region
      %s202 = ssub.s32 %s11, 1
      %p203 = scmp.lt.s32.totalorder %s16, 1
      %s204 = scalar_select %p203, %s16, 1
      %s205 = smul.addr %s204, 6
      %s206 = smul.addr %s205, 4
      %s207 = scalar_lea.vmem %s0, %s206
      %p208 = pneg %p37
      %p209 = pneg %p34
      %p210 = pneg %p58
      %p211 = pneg %p55
      %p212 = pneg %p79
      %p213 = pneg %p76
      %p214 = pneg %p100
      %p215 = pneg %p97
      %p216 = scmp.lt.s32.totalorder %s16, 1
      %s217 = scalar_select %p216, %s16, 1
      %s218 = smul.addr %s217, 2
      %s219 = smul.addr %s218, 8
      %s220 = scalar_lea.vmem %s4, %s219
      %p221 = pneg %p126
      %p222 = pneg %p123
      %p223 = pneg %p152
      %p224 = pneg %p149
      %p225 = scmp.lt.s32.totalorder %s16, 1
      %s226 = scalar_select %p225, %s16, 1
      %s227 = smul.addr %s226, 2
      %s228 = smul.addr %s227, 8
      %s229 = scalar_lea.vmem %s5, %s228
      %p230 = scmp.lt.s32.totalorder %s16, 1
      %s231 = scalar_select %p230, %s16, 1
      %s232 = smul.addr %s231, 6
      %s233 = smul.addr %s232, 4
      %s234 = scalar_lea.vmem %s0, %s233
      %p235 = scmp.lt.s32.totalorder %s16, 1
      %s236 = scalar_select %p235, %s16, 1
      %s237 = smul.addr %s236, 2
      %s238 = smul.addr %s237, 8
      %s239 = scalar_lea.vmem %s4, %s238
      %p240 = scmp.lt.s32.totalorder %s16, 1
      %s241 = scalar_select %p240, %s16, 1
      %s242 = smul.addr %s241, 2
      %s243 = smul.addr %s242, 8
      %s244 = scalar_lea.vmem %s5, %s243
      %v246 = vld [vmem:[%s234] sm:$0xff]
      %v247 = vld [vmem:[%s234 + $0x8] sm:$0xf]
      %v248 = vld [vmem:[%s234 + $0xc] sm:$0xff]
      %v249 = vld [vmem:[%s234 + $0x14] sm:$0xf]
      %v250 = vld [vmem:[%s1] sm:$0xf]
      %v251 = vld [vmem:[%s1 + $0x4] sm:$0xf]
      %v252 = vld [vmem:[%s1 + $0x8] sm:$0xf]
      %v253 = vld [vmem:[%s1 + $0xc] sm:$0xf]
      %v254 = vld [vmem:[%s1 + $0x10] sm:$0xf]
      %v255 = vld [vmem:[%s1 + $0x14] sm:$0xf]
      %v256 = vld [vmem:[%s1 + $0x18] sm:$0xf]
      %v257 = vld [vmem:[%s1 + $0x1c] sm:$0xf]
      %v258 = vld [vmem:[%s1 + $0x20] sm:$0xf]
      %v259 = vld [vmem:[%s1 + $0x24] sm:$0xf]
      %v260 = vld [vmem:[%s1 + $0x28] sm:$0xf]
      %v261 = vld [vmem:[%s1 + $0x2c] sm:$0xf]
      %v262 = vld [vmem:[%s1 + $0x30] sm:$0xf]
      %v263 = vld [vmem:[%s1 + $0x34] sm:$0xf]
      %v264 = vld [vmem:[%s1 + $0x38] sm:$0xf]
      %v265 = vld [vmem:[%s1 + $0x3c] sm:$0xf]
      %v266 = vld [vmem:[%s1 + $0x40] sm:$0xf]
      %v267 = vld [vmem:[%s1 + $0x44] sm:$0xf]
      %v268 = vld [vmem:[%s1 + $0x48] sm:$0xf]
      %v269 = vld [vmem:[%s1 + $0x4c] sm:$0xf]
      %v270 = vld [vmem:[%s1 + $0x50] sm:$0xf]
      %v271 = vld [vmem:[%s1 + $0x54] sm:$0xf]
      %v272 = vld [vmem:[%s1 + $0x58] sm:$0xf]
      %v273 = vld [vmem:[%s1 + $0x5c] sm:$0xf]
      %v274 = vld [vmem:[%s1 + $0x60] sm:$0xf]
      %v275 = vld [vmem:[%s1 + $0x64] sm:$0xf]
      %v276 = vld [vmem:[%s1 + $0x68] sm:$0xf]
      %v277 = vld [vmem:[%s1 + $0x6c] sm:$0xf]
      %v278 = vld [vmem:[%s1 + $0x70] sm:$0xf]
      %v279 = vld [vmem:[%s1 + $0x74] sm:$0xf]
      %v280 = vld [vmem:[%s1 + $0x78] sm:$0xf]
      %v281 = vld [vmem:[%s1 + $0x7c] sm:$0xf]
      %v282 = vld [vmem:[%s1 + $0x80] sm:$0xf]
      %v283 = vld [vmem:[%s1 + $0x84] sm:$0xf]
      %v284 = vld [vmem:[%s1 + $0x88] sm:$0xf]
      %v285 = vld [vmem:[%s1 + $0x8c] sm:$0xf]
      %v290 = vunpack.c.l.b16 %v246
      %v291 = vunpack.c.h.b16 %v246
      %v292 = vunpack.c.l.b16 %v247
      %v293 = vunpack.c.l.b16 %v248
      %v294 = vunpack.c.h.b16 %v248
      %v295 = vunpack.c.l.b16 %v249
      %v296 = vpack.c.b16 %v293, %v290
      %v297 = vpack.c.b16 %v294, %v291
      %v298 = vpack.c.b16 %v295, %v292
      %v337 = vunpack.c.l.b16 %v250
      %v338 = vunpack.c.l.b16 %v251
      %v339 = vunpack.c.l.b16 %v252
      %v340 = vunpack.c.l.b16 %v253
      %v341 = vunpack.c.l.b16 %v254
      %v342 = vunpack.c.l.b16 %v255
      %v343 = vunpack.c.l.b16 %v256
      %v344 = vunpack.c.l.b16 %v257
      %v345 = vunpack.c.l.b16 %v258
      %v346 = vunpack.c.l.b16 %v259
      %v347 = vunpack.c.l.b16 %v260
      %v348 = vunpack.c.l.b16 %v261
      %v349 = vunpack.c.l.b16 %v262
      %v350 = vunpack.c.l.b16 %v263
      %v351 = vunpack.c.l.b16 %v264
      %v352 = vunpack.c.l.b16 %v265
      %v353 = vunpack.c.l.b16 %v266
      %v354 = vunpack.c.l.b16 %v267
      %v355 = vunpack.c.l.b16 %v268
      %v356 = vunpack.c.l.b16 %v269
      %v357 = vunpack.c.l.b16 %v270
      %v358 = vunpack.c.l.b16 %v271
      %v359 = vunpack.c.l.b16 %v272
      %v360 = vunpack.c.l.b16 %v273
      %v361 = vunpack.c.l.b16 %v274
      %v362 = vunpack.c.l.b16 %v275
      %v363 = vunpack.c.l.b16 %v276
      %v364 = vunpack.c.l.b16 %v277
      %v365 = vunpack.c.l.b16 %v278
      %v366 = vunpack.c.l.b16 %v279
      %v367 = vunpack.c.l.b16 %v280
      %v368 = vunpack.c.l.b16 %v281
      %v369 = vunpack.c.l.b16 %v282
      %v370 = vunpack.c.l.b16 %v283
      %v371 = vunpack.c.l.b16 %v284
      %v372 = vunpack.c.l.b16 %v285
      %v373 = vpack.c.b16 %v338, %v337
      %v374 = vpack.c.b16 %v340, %v339
      %v375 = vpack.c.b16 %v342, %v341
      %v376 = vpack.c.b16 %v344, %v343
      %v377 = vpack.c.b16 %v346, %v345
      %v378 = vpack.c.b16 %v348, %v347
      %v379 = vpack.c.b16 %v350, %v349
      %v380 = vpack.c.b16 %v352, %v351
      %v381 = vpack.c.b16 %v354, %v353
      %v382 = vpack.c.b16 %v356, %v355
      %v383 = vpack.c.b16 %v358, %v357
      %v384 = vpack.c.b16 %v360, %v359
      %v385 = vpack.c.b16 %v362, %v361
      %v386 = vpack.c.b16 %v364, %v363
      %v387 = vpack.c.b16 %v366, %v365
      %v388 = vpack.c.b16 %v368, %v367
      %v389 = vpack.c.b16 %v370, %v369
      %v390 = vpack.c.b16 %v372, %v371
      %vm409 = vcmask 261120
      %v411 = vsel %vm409, %v298, 0
      %413 = vmatpush.bf16.msra.mxu0 %v380
      %414 = vmatpush.bf16.msra.mxu0 %v379
      %415 = vmatpush.bf16.msra.mxu0 %v378
      %416 = vmatpush.bf16.msra.mxu0 %v377
      %417 = vmatpush.bf16.msra.mxu0 %v376
      %418 = vmatpush.bf16.msra.mxu0 %v375
      %419 = vmatpush.bf16.msra.mxu0 %v374
      %420 = vmatpush.bf16.msra.mxu0 %v373
      %421 = vmatmul.bf16.gmra.mxu0 %v296
      %v422 = vpop.f32.mrf.mxu0
      %v423 = vadd.f32 0.0, %v422
      %v424 = vpop.f32.mrf.mxu0
      %v425 = vadd.f32 0.0, %v424
      %426 = vdwg.mxu0
      %427 = vmatpush.bf16.msra.mxu0 %v388
      %428 = vmatpush.bf16.msra.mxu0 %v387
      %429 = vmatpush.bf16.msra.mxu0 %v386
      %430 = vmatpush.bf16.msra.mxu0 %v385
      %431 = vmatpush.bf16.msra.mxu0 %v384
      %432 = vmatpush.bf16.msra.mxu0 %v383
      %433 = vmatpush.bf16.msra.mxu0 %v382
      %434 = vmatpush.bf16.msra.mxu0 %v381
      %435 = vmatmul.bf16.gmra.mxu0 %v297
      %v436 = vpop.f32.mrf.mxu0
      %v437 = vadd.f32 %v423, %v436
      %v438 = vpop.f32.mrf.mxu0
      %v439 = vadd.f32 %v425, %v438
      %440 = vdwg.mxu0
      %441 = vmatpush.bf16.msra.mxu0 0
      %442 = vmatpush.bf16.msra.mxu0 0
      %443 = vmatpush.bf16.msra.mxu0 0
      %444 = vmatpush.bf16.msra.mxu0 0
      %445 = vmatpush.bf16.msra.mxu0 0
      %446 = vmatpush.bf16.msra.mxu0 0
      %447 = vmatpush.bf16.msra.mxu0 %v390
      %448 = vmatpush.bf16.msra.mxu0 %v389
      %449 = vmatmul.bf16.gmra.mxu0 %v411
      %v450 = vpop.f32.mrf.mxu0
      %v451 = vadd.f32 %v437, %v450
      %v452 = vpop.f32.mrf.mxu0
      %v453 = vadd.f32 %v439, %v452
      %454 = vdwg.mxu0
      %v455 = vld [vmem:[%s239] sm:$0xff]
      %v456 = vld [vmem:[%s239 + $0x8] sm:$0xff]
      %v457 = vld [vmem:[%s2] sm:$0x1]
      %v458 = vld [vmem:[%s3] sm:$0x1]
      %v459 = vsel %vm409, %v451, 0.0
      %v460 = vsel %vm409, %v453, 0.0
      %v461 = vadd.f32 %v459, %v460
      %v462 = vrot.slane %v461, 4
      %v463 = vadd.f32 %v461, %v462
      %v464 = vrot.slane %v463, 2
      %v465 = vadd.f32 %v463, %v464
      %v466 = vrot.slane %v465, 1
      %v467 = vadd.f32 %v465, %v466
      %v468 = vadd.f32 %v467, 0.0
      %v469 = vrcp.pop 16.0
      %v470 = vmul.f32 16.0, %v469
      %v471 = vsub.f32 1.0, %v470
      %v472 = vmul.f32 %v469, %v471
      %v473 = vadd.f32 %v469, %v472
      %vm474 = vweird.f32 %v469
      %v475 = vsel %vm474, %v469, %v473
      %v476 = vmul.f32 %v468, %v475
      %v477 = vsub.f32 %v451, %v476
      %v478 = vsub.f32 %v453, %v476
      %v479 = vmul.f32 %v477, %v477
      %v480 = vmul.f32 %v478, %v478
      %v481 = vsel %vm409, %v479, 0.0
      %v482 = vsel %vm409, %v480, 0.0
      %v483 = vadd.f32 %v481, %v482
      %v484 = vrot.slane %v483, 4
      %v485 = vadd.f32 %v483, %v484
      %v486 = vrot.slane %v485, 2
      %v487 = vadd.f32 %v485, %v486
      %v488 = vrot.slane %v487, 1
      %v489 = vadd.f32 %v487, %v488
      %v490 = vadd.f32 %v489, 0.0
      %v491 = vmul.f32 %v490, %v475
      %v492 = vadd.f32 %v491, 1e-05
      %v493 = vrsqrt.pop %v492
      %v494 = vmul.f32 %v493, %v492
      %v495 = vmul.f32 %v494, %v493
      %v496 = vmul.f32 0.5, %v495
      %v497 = vsub.f32 1.5, %v496
      %v498 = vmul.f32 %v493, %v497
      %vm499 = vweird.f32 %v492
      %vm500 = vweird.f32 %v493
      %vm501 = vmor %vm499, %vm500
      %v502 = vsel %vm501, %v493, %v498
      %v503 = vmul.f32 %v477, %v502
      %v504 = vmul.f32 %v478, %v502
      %v506 = vperm.slane %v457, 0
      %v508 = vmul.f32 %v503, %v506
      %v509 = vmul.f32 %v504, %v506
      %v511 = vperm.slane %v458, 0
      %v513 = vadd.f32 %v508, %v511
      %v514 = vadd.f32 %v509, %v511
      %v515 = vadd.f32 %v455, %v513
      %v516 = vadd.f32 %v456, %v514
      %517 = vst.msk [vmem:[%s244] sm:$0xff] %vm409, %v515
      %518 = vst.msk [vmem:[%s244 + $0x8] sm:$0xff] %vm409, %v516
      %p519 = scmp.lt.s32.totalorder %s16, 1
      %s520 = scalar_select %p519, %s16, 1
      %s521 = smul.addr %s520, 2
      %s522 = smul.addr %s521, 8
      %s523 = scalar_lea.vmem %s5, %s522
      // Predicated region
      $region41: #{generator_forward.14} parent=39 // pred_check
        %p524 = pneg %p149
      $region42: #{generator_forward.14} parent=39 // pred_check_branch
        %526 = sbr.rel (%p524) target = $region44
      $region43: #{generator_forward.14} parent=39 // pred_region
        _
      $region44: #{generator_forward.14} parent=39 // pred_fallthru
        _
    $region40: #{generator_forward.14} parent=5 // pred_fallthru
      _
    %p527 = scmp.le.s32.totalorder 2, %s11
    // Predicated region
    $region45: #{generator_forward.14} parent=5 // pred_check
      %p528 = pneg %p527
    $region46: #{generator_forward.14} parent=5 // pred_check_branch
      %530 = sbr.rel (%p528) target = $region48
    $region47: #{generator_forward.14} parent=5 // pred_region
      %s531 = ssub.s32 %s11, 2
      // Predicated region
      $region49: #{generator_forward.14} parent=47 // pred_check
        %p532 = pneg %p155
      $region50: #{generator_forward.14} parent=47 // pred_check_branch
        %534 = sbr.rel (%p532) target = $region52
      $region51: #{generator_forward.14} parent=47 // pred_region
        %p535 = scmp.lt.s32.totalorder %s17, 1
        %s536 = scalar_select %p535, %s17, 1
        %s537 = smul.addr %s536, 2
        %s538 = smul.addr %s537, 8
        %s539 = scalar_lea.vmem %s5, %s538
      $region52: #{generator_forward.14} parent=47 // pred_fallthru
        _
    $region48: #{generator_forward.14} parent=5 // pred_fallthru
      _
  $region6: #{generator_forward.14} parent=0 // loop_footer
    %s15 = sadd.s32 1, %s11
  $region7: #{generator_forward.14} parent=0 // loop_footer_branch
    %10 = sbr.rel target = $region3
  $region8: #{generator_forward.14} parent=0 // loop_exit
    _

// kernel: tile.23
$region0: #{tile.23}
  #allocation0 [shape = 's32[1]{0}', space=sflag, size = 0x4, scoped, tag = 'scoped memory for tile.23']
  %s0 = inlined_call_operand.vmem [shape: f32[16], index: 0, kind: input, shape index: {}]
  %s1 = inlined_call_operand.vmem [shape: f32[4,16], index: 1, kind: output, shape index: {}]
  // Predicated region
  $region2: #{tile.23} parent=0 // pred_check
    _
  $region3: #{tile.23} parent=0 // pred_check_branch
    %3 = sbr.rel (0) target = $region5
  $region4: #{tile.23} parent=0 // pred_region
    _
  $region5: #{tile.23} parent=0 // pred_fallthru
    _
  %v4 = vld [vmem:[%s0] ss:$0 sm:$0xff]
  %5 = vst [vmem:[%s1] sm:$0xf] %v4

// kernel: tile.28
$region0: #{tile.28}
  %s0 = inlined_call_operand.vmem [shape: f32[4,16], index: 0, kind: input, shape index: {}]
  %s1 = inlined_call_operand.vmem [shape: f32[1,64], index: 1, kind: output, shape index: {}]
  $region1: #{tile.28} parent=0
    #allocation0 [shape = 'u8[4096]{0}', space=vmem, size = 0x1000, scoped, tag = 'scoped mem for output reshape']
    #allocation1 [shape = 'u8[4096]{0}', space=vmem, size = 0x1000, scoped, tag = 'scoped mem for input reshape']
    %s3 = ssub.s32 16, 1
    %v4 = vld [vmem:[%s0] sm:%s3]
    %5 = vst [vmem:[#allocation1] sm:%s3] %v4
    %v6 = vld [vmem:[#allocation1] sm:$0x1]
    %vm7 = vcmask 130048
    %8 = vst.msk [vmem:[#allocation0] sm:$0x1] %vm7, %v6
    %s9 = scalar_lea.vmem [#allocation1], 3
    %v10 = vld [vmem:[%s9] sm:$0x1]
    %11 = vrot.lane.b32.xlu0 %v10, 48
    %v12 = vpop.permute.xlu0 %11
    %vm13 = vcmask 523648
    %14 = vst.msk [vmem:[#allocation0] sm:$0x1] %vm13, %v12
    %s15 = scalar_lea.vmem [#allocation1], 2
    %v16 = vld [vmem:[%s15] sm:$0x1]
    %17 = vrot.lane.b32.xlu0 %v16, 32
    %v18 = vpop.permute.xlu0 %17
    %vm19 = vcmask 392448
    %20 = vst.msk [vmem:[#allocation0] sm:$0x1] %vm19, %v18
    %s21 = scalar_lea.vmem [#allocation1], 1
    %v22 = vld [vmem:[%s21] sm:$0x1]
    %23 = vrot.lane.b32.xlu0 %v22, 16
    %v24 = vpop.permute.xlu0 %23
    %vm25 = vcmask 261248
    %26 = vst.msk [vmem:[#allocation0] sm:$0x1] %vm25, %v24
    %s28 = ssub.s32 2, 1
    %v29 = vld [vmem:[#allocation0] sm:%s28]
    %s31 = ssub.s32 2, 1
    %32 = vst [vmem:[%s1] sm:%s31] %v29

// kernel: generator_forward.17
$region0: #{generator_forward.17}
  #allocation0 [shape = 'u32[]', space=smem, size = 0x4, offset = 0x4, fixed_abs, tag = 'smem constant byte address 0x4 - core index']
  #allocation1 [shape = 'u32[72,128]{1,0:T(1,128)}', space=vmem, size = 0x9000, scoped, tag = 'internal scratch']
  %s0 = inlined_call_operand.vmem [shape: bf16[2,16,288], index: 0, kind: input, shape index: {}]
  %s1 = inlined_call_operand.vmem [shape: bf16[288,64], index: 1, kind: input, shape index: {}]
  %s2 = inlined_call_operand.vmem [shape: f32[1,64], index: 2, kind: input, shape index: {}]
  %s3 = inlined_call_operand.vmem [shape: f32[1,64], index: 3, kind: input, shape index: {}]
  %s4 = inlined_call_operand.vmem [shape: f32[2,16,64], index: 4, kind: output, shape index: {}]
  %s5 = sld [smem:[#allocation0]]
  $region49: #{generator_forward.17} parent=0
    _
  %s7 = ssub.s32 1, %s5
  %s8 = scalar_select 0, %s7, %s5
  loop: start=0, step=1, limit=4
  $region2: #{generator_forward.17} parent=0 // loop_pre_header
    _
  $region3: #{generator_forward.17} parent=0 // loop_header
    %s10 = sphi 0, %s14
    %p11 = scmp.ge.s32.totalorder %s10, 4
    %s20 = sphi 0, %s22
    %s23 = sphi 0, %s20
    %s24 = sphi 0, %s23
    %s40 = sphi 0, %s24
    %s44 = sphi 0, %s44
    %s46 = sphi 0, %s44
    %s47 = sphi 0, %s46
    %s61 = sphi 0, %s47
    %s65 = sphi 0, %s65
    %s67 = sphi 0, %s65
    %s68 = sphi 0, %s67
    %s82 = sphi 0, %s68
    %s86 = sphi 0, %s86
    %s88 = sphi 0, %s86
    %s89 = sphi 0, %s88
    %s103 = sphi 0, %s89
    %s109 = sphi 0, %s111
    %s112 = sphi 0, %s109
    %s113 = sphi 0, %s112
    %s129 = sphi 0, %s113
  $region4: #{generator_forward.17} parent=0 // loop_header_branch
    %13 = sbr.rel (%p11) target = $region8
  $region5: #{generator_forward.17} parent=0 // loop_body
    %s15 = ssub.s32 %s10, 1
    %s16 = ssub.s32 %s10, 2
    %s17 = sadd.s32 %s10, 1
    %s18 = ssub.s32 %s10, %s17
    %p19 = scmp.eq.s32.totalorder %s18, 0
    %s21 = sadd.s32 %s20, 1
    %s22 = scalar_select %p19, %s20, %s21
    %p25 = pneg %p19
    %p26 = scmp.eq.s32.totalorder %s10, 1
    %p27 = por %p25, %p26
    %p28 = scmp.ne.s32.totalorder %s20, %s23
    %p29 = scmp.eq.s32.totalorder %s10, 0
    %p30 = por %p28, %p29
    %p31 = scmp.ne.s32.totalorder %s20, %s23
    %p32 = scmp.eq.s32.totalorder %s15, 1
    %p33 = por %p31, %p32
    %p34 = scmp.ne.s32.totalorder %s23, %s24
    %p35 = scmp.eq.s32.totalorder %s15, 0
    %p36 = por %p34, %p35
    %p37 = scmp.ne.s32.totalorder %s23, %s24
    %p38 = scmp.eq.s32.totalorder %s16, 1
    %p39 = por %p37, %p38
    %p41 = scmp.ne.s32.totalorder %s24, %s40
    %p42 = scmp.eq.s32.totalorder %s16, 0
    %p43 = por %p41, %p42
    %s45 = sadd.s32 %s44, 1
    %p48 = scmp.eq.s32.totalorder %s10, 1
    %p49 = scmp.ne.s32.totalorder %s44, %s46
    %p50 = scmp.eq.s32.totalorder %s10, 0
    %p51 = por %p49, %p50
    %p52 = scmp.ne.s32.totalorder %s44, %s46
    %p53 = scmp.eq.s32.totalorder %s15, 1
    %p54 = por %p52, %p53
    %p55 = scmp.ne.s32.totalorder %s46, %s47
    %p56 = scmp.eq.s32.totalorder %s15, 0
    %p57 = por %p55, %p56
    %p58 = scmp.ne.s32.totalorder %s46, %s47
    %p59 = scmp.eq.s32.totalorder %s16, 1
    %p60 = por %p58, %p59
    %p62 = scmp.ne.s32.totalorder %s47, %s61
    %p63 = scmp.eq.s32.totalorder %s16, 0
    %p64 = por %p62, %p63
    %s66 = sadd.s32 %s65, 1
    %p69 = scmp.eq.s32.totalorder %s10, 1
    %p70 = scmp.ne.s32.totalorder %s65, %s67
    %p71 = scmp.eq.s32.totalorder %s10, 0
    %p72 = por %p70, %p71
    %p73 = scmp.ne.s32.totalorder %s65, %s67
    %p74 = scmp.eq.s32.totalorder %s15, 1
    %p75 = por %p73, %p74
    %p76 = scmp.ne.s32.totalorder %s67, %s68
    %p77 = scmp.eq.s32.totalorder %s15, 0
    %p78 = por %p76, %p77
    %p79 = scmp.ne.s32.totalorder %s67, %s68
    %p80 = scmp.eq.s32.totalorder %s16, 1
    %p81 = por %p79, %p80
    %p83 = scmp.ne.s32.totalorder %s68, %s82
    %p84 = scmp.eq.s32.totalorder %s16, 0
    %p85 = por %p83, %p84
    %s87 = sadd.s32 %s86, 1
    %p90 = scmp.eq.s32.totalorder %s10, 1
    %p91 = scmp.ne.s32.totalorder %s86, %s88
    %p92 = scmp.eq.s32.totalorder %s10, 0
    %p93 = por %p91, %p92
    %p94 = scmp.ne.s32.totalorder %s86, %s88
    %p95 = scmp.eq.s32.totalorder %s15, 1
    %p96 = por %p94, %p95
    %p97 = scmp.ne.s32.totalorder %s88, %s89
    %p98 = scmp.eq.s32.totalorder %s15, 0
    %p99 = por %p97, %p98
    %p100 = scmp.ne.s32.totalorder %s88, %s89
    %p101 = scmp.eq.s32.totalorder %s16, 1
    %p102 = por %p100, %p101
    %p104 = scmp.ne.s32.totalorder %s89, %s103
    %p105 = scmp.eq.s32.totalorder %s16, 0
    %p106 = por %p104, %p105
    %s107 = ssub.s32 %s10, %s17
    %p108 = scmp.eq.s32.totalorder %s107, 0
    %s110 = sadd.s32 %s109, 1
    %s111 = scalar_select %p108, %s109, %s110
    %p114 = pneg %p108
    %p115 = scmp.eq.s32.totalorder %s10, 1
    %p116 = por %p114, %p115
    %p117 = scmp.ne.s32.totalorder %s109, %s112
    %p118 = scmp.eq.s32.totalorder %s10, 0
    %p119 = por %p117, %p118
    %p120 = scmp.ne.s32.totalorder %s109, %s112
    %p121 = scmp.eq.s32.totalorder %s15, 1
    %p122 = por %p120, %p121
    %p123 = scmp.ne.s32.totalorder %s112, %s113
    %p124 = scmp.eq.s32.totalorder %s15, 0
    %p125 = por %p123, %p124
    %p126 = scmp.ne.s32.totalorder %s112, %s113
    %p127 = scmp.eq.s32.totalorder %s16, 1
    %p128 = por %p126, %p127
    %p130 = scmp.ne.s32.totalorder %s113, %s129
    %p131 = scmp.eq.s32.totalorder %s16, 0
    %p132 = por %p130, %p131
    %p133 = scmp.le.s32.totalorder 1, %s10
    %p134 = scmp.lt.s32.totalorder %s10, 3
    %p135 = pnand %p133, %p134
    %p136 = pneg %p135
    // Predicated region
    $region9: #{generator_forward.17} parent=5 // pred_check
      _
    $region10: #{generator_forward.17} parent=5 // pred_check_branch
      %138 = sbr.rel (%p135) target = $region12
    $region11: #{generator_forward.17} parent=5 // pred_region
      %s139 = ssub.s32 %s10, 1
      // Predicated region
      $region13: #{generator_forward.17} parent=11 // pred_check
        %p140 = pneg %p57
      $region14: #{generator_forward.17} parent=11 // pred_check_branch
        %142 = sbr.rel (%p140) target = $region16
      $region15: #{generator_forward.17} parent=11 // pred_region
        _
      $region16: #{generator_forward.17} parent=11 // pred_fallthru
        _
      // Predicated region
      $region17: #{generator_forward.17} parent=11 // pred_check
        %p143 = pneg %p78
      $region18: #{generator_forward.17} parent=11 // pred_check_branch
        %145 = sbr.rel (%p143) target = $region20
      $region19: #{generator_forward.17} parent=11 // pred_region
        _
      $region20: #{generator_forward.17} parent=11 // pred_fallthru
        _
      // Predicated region
      $region21: #{generator_forward.17} parent=11 // pred_check
        %p146 = pneg %p99
      $region22: #{generator_forward.17} parent=11 // pred_check_branch
        %148 = sbr.rel (%p146) target = $region24
      $region23: #{generator_forward.17} parent=11 // pred_region
        _
      $region24: #{generator_forward.17} parent=11 // pred_fallthru
        _
    $region12: #{generator_forward.17} parent=5 // pred_fallthru
      _
    %p149 = scmp.lt.s32.totalorder %s10, 2
    // Predicated region
    $region25: #{generator_forward.17} parent=5 // pred_check
      %p150 = pneg %p149
    $region26: #{generator_forward.17} parent=5 // pred_check_branch
      %152 = sbr.rel (%p150) target = $region28
    $region27: #{generator_forward.17} parent=5 // pred_region
      // Predicated region
      $region29: #{generator_forward.17} parent=27 // pred_check
        %p153 = pneg %p30
      $region30: #{generator_forward.17} parent=27 // pred_check_branch
        %155 = sbr.rel (%p153) target = $region32
      $region31: #{generator_forward.17} parent=27 // pred_region
        %p156 = scmp.lt.s32.totalorder %s10, 1
        %s157 = scalar_select %p156, %s10, 1
        %s158 = smul.addr %s157, 6
        %s159 = smul.addr %s158, 4
        %s160 = scalar_lea.vmem %s0, %s159
      $region32: #{generator_forward.17} parent=27 // pred_fallthru
        _
    $region28: #{generator_forward.17} parent=5 // pred_fallthru
      _
    %p161 = scmp.le.s32.totalorder 1, %s10
    %p162 = scmp.lt.s32.totalorder %s10, 3
    %p163 = pnand %p161, %p162
    %p164 = pneg %p163
    // Predicated region
    $region33: #{generator_forward.17} parent=5 // pred_check
      _
    $region34: #{generator_forward.17} parent=5 // pred_check_branch
      %166 = sbr.rel (%p163) target = $region36
    $region35: #{generator_forward.17} parent=5 // pred_region
      %s167 = ssub.s32 %s10, 1
      %p168 = scmp.lt.s32.totalorder %s15, 1
      %s169 = scalar_select %p168, %s15, 1
      %s170 = smul.addr %s169, 6
      %s171 = smul.addr %s170, 4
      %s172 = scalar_lea.vmem %s0, %s171
      %p173 = pneg %p36
      %p174 = pneg %p33
      %p175 = pneg %p57
      %p176 = pneg %p54
      %p177 = pneg %p78
      %p178 = pneg %p75
      %p179 = pneg %p99
      %p180 = pneg %p96
      %p181 = pneg %p125
      %p182 = pneg %p122
      %p183 = scmp.lt.s32.totalorder %s15, 1
      %s184 = scalar_select %p183, %s15, 1
      %s185 = smul.addr %s184, 2
      %s186 = smul.addr %s185, 8
      %s187 = scalar_lea.vmem %s4, %s186
      %p188 = scmp.lt.s32.totalorder %s15, 1
      %s189 = scalar_select %p188, %s15, 1
      %s190 = smul.addr %s189, 6
      %s191 = smul.addr %s190, 4
      %s192 = scalar_lea.vmem %s0, %s191
      %p193 = scmp.lt.s32.totalorder %s15, 1
      %s194 = scalar_select %p193, %s15, 1
      %s195 = smul.addr %s194, 2
      %s196 = smul.addr %s195, 8
      %s197 = scalar_lea.vmem %s4, %s196
      %v199 = vld [vmem:[%s192] sm:$0xff]
      %v200 = vld [vmem:[%s192 + $0x8] sm:$0xf]
      %v201 = vld [vmem:[%s192 + $0xc] sm:$0xff]
      %v202 = vld [vmem:[%s192 + $0x14] sm:$0xf]
      %v203 = vld [vmem:[%s1] sm:$0xf]
      %v204 = vld [vmem:[%s1 + $0x4] sm:$0xf]
      %v205 = vld [vmem:[%s1 + $0x8] sm:$0xf]
      %v206 = vld [vmem:[%s1 + $0xc] sm:$0xf]
      %v207 = vld [vmem:[%s1 + $0x10] sm:$0xf]
      %v208 = vld [vmem:[%s1 + $0x14] sm:$0xf]
      %v209 = vld [vmem:[%s1 + $0x18] sm:$0xf]
      %v210 = vld [vmem:[%s1 + $0x1c] sm:$0xf]
      %v211 = vld [vmem:[%s1 + $0x20] sm:$0xf]
      %v212 = vld [vmem:[%s1 + $0x24] sm:$0xf]
      %v213 = vld [vmem:[%s1 + $0x28] sm:$0xf]
      %v214 = vld [vmem:[%s1 + $0x2c] sm:$0xf]
      %v215 = vld [vmem:[%s1 + $0x30] sm:$0xf]
      %v216 = vld [vmem:[%s1 + $0x34] sm:$0xf]
      %v217 = vld [vmem:[%s1 + $0x38] sm:$0xf]
      %v218 = vld [vmem:[%s1 + $0x3c] sm:$0xf]
      %v219 = vld [vmem:[%s1 + $0x40] sm:$0xf]
      %v220 = vld [vmem:[%s1 + $0x44] sm:$0xf]
      %v221 = vld [vmem:[%s1 + $0x48] sm:$0xf]
      %v222 = vld [vmem:[%s1 + $0x4c] sm:$0xf]
      %v223 = vld [vmem:[%s1 + $0x50] sm:$0xf]
      %v224 = vld [vmem:[%s1 + $0x54] sm:$0xf]
      %v225 = vld [vmem:[%s1 + $0x58] sm:$0xf]
      %v226 = vld [vmem:[%s1 + $0x5c] sm:$0xf]
      %v227 = vld [vmem:[%s1 + $0x60] sm:$0xf]
      %v228 = vld [vmem:[%s1 + $0x64] sm:$0xf]
      %v229 = vld [vmem:[%s1 + $0x68] sm:$0xf]
      %v230 = vld [vmem:[%s1 + $0x6c] sm:$0xf]
      %v231 = vld [vmem:[%s1 + $0x70] sm:$0xf]
      %v232 = vld [vmem:[%s1 + $0x74] sm:$0xf]
      %v233 = vld [vmem:[%s1 + $0x78] sm:$0xf]
      %v234 = vld [vmem:[%s1 + $0x7c] sm:$0xf]
      %v235 = vld [vmem:[%s1 + $0x80] sm:$0xf]
      %v236 = vld [vmem:[%s1 + $0x84] sm:$0xf]
      %v237 = vld [vmem:[%s1 + $0x88] sm:$0xf]
      %v238 = vld [vmem:[%s1 + $0x8c] sm:$0xf]
      %v243 = vunpack.c.l.b16 %v199
      %v244 = vunpack.c.h.b16 %v199
      %v245 = vunpack.c.l.b16 %v200
      %v246 = vunpack.c.l.b16 %v201
      %v247 = vunpack.c.h.b16 %v201
      %v248 = vunpack.c.l.b16 %v202
      %v249 = vpack.c.b16 %v246, %v243
      %v250 = vpack.c.b16 %v247, %v244
      %v251 = vpack.c.b16 %v248, %v245
      %v290 = vunpack.c.l.b16 %v203
      %v291 = vunpack.c.l.b16 %v204
      %v292 = vunpack.c.l.b16 %v205
      %v293 = vunpack.c.l.b16 %v206
      %v294 = vunpack.c.l.b16 %v207
      %v295 = vunpack.c.l.b16 %v208
      %v296 = vunpack.c.l.b16 %v209
      %v297 = vunpack.c.l.b16 %v210
      %v298 = vunpack.c.l.b16 %v211
      %v299 = vunpack.c.l.b16 %v212
      %v300 = vunpack.c.l.b16 %v213
      %v301 = vunpack.c.l.b16 %v214
      %v302 = vunpack.c.l.b16 %v215
      %v303 = vunpack.c.l.b16 %v216
      %v304 = vunpack.c.l.b16 %v217
      %v305 = vunpack.c.l.b16 %v218
      %v306 = vunpack.c.l.b16 %v219
      %v307 = vunpack.c.l.b16 %v220
      %v308 = vunpack.c.l.b16 %v221
      %v309 = vunpack.c.l.b16 %v222
      %v310 = vunpack.c.l.b16 %v223
      %v311 = vunpack.c.l.b16 %v224
      %v312 = vunpack.c.l.b16 %v225
      %v313 = vunpack.c.l.b16 %v226
      %v314 = vunpack.c.l.b16 %v227
      %v315 = vunpack.c.l.b16 %v228
      %v316 = vunpack.c.l.b16 %v229
      %v317 = vunpack.c.l.b16 %v230
      %v318 = vunpack.c.l.b16 %v231
      %v319 = vunpack.c.l.b16 %v232
      %v320 = vunpack.c.l.b16 %v233
      %v321 = vunpack.c.l.b16 %v234
      %v322 = vunpack.c.l.b16 %v235
      %v323 = vunpack.c.l.b16 %v236
      %v324 = vunpack.c.l.b16 %v237
      %v325 = vunpack.c.l.b16 %v238
      %v326 = vpack.c.b16 %v291, %v290
      %v327 = vpack.c.b16 %v293, %v292
      %v328 = vpack.c.b16 %v295, %v294
      %v329 = vpack.c.b16 %v297, %v296
      %v330 = vpack.c.b16 %v299, %v298
      %v331 = vpack.c.b16 %v301, %v300
      %v332 = vpack.c.b16 %v303, %v302
      %v333 = vpack.c.b16 %v305, %v304
      %v334 = vpack.c.b16 %v307, %v306
      %v335 = vpack.c.b16 %v309, %v308
      %v336 = vpack.c.b16 %v311, %v310
      %v337 = vpack.c.b16 %v313, %v312
      %v338 = vpack.c.b16 %v315, %v314
      %v339 = vpack.c.b16 %v317, %v316
      %v340 = vpack.c.b16 %v319, %v318
      %v341 = vpack.c.b16 %v321, %v320
      %v342 = vpack.c.b16 %v323, %v322
      %v343 = vpack.c.b16 %v325, %v324
      %vm362 = vcmask 261120
      %v364 = vsel %vm362, %v251, 0
      %366 = vmatpush.bf16.msra.mxu0 %v333
      %367 = vmatpush.bf16.msra.mxu0 %v332
      %368 = vmatpush.bf16.msra.mxu0 %v331
      %369 = vmatpush.bf16.msra.mxu0 %v330
      %370 = vmatpush.bf16.msra.mxu0 %v329
      %371 = vmatpush.bf16.msra.mxu0 %v328
      %372 = vmatpush.bf16.msra.mxu0 %v327
      %373 = vmatpush.bf16.msra.mxu0 %v326
      %374 = vmatmul.bf16.gmra.mxu0 %v249
      %v375 = vpop.f32.mrf.mxu0
      %v376 = vadd.f32 0.0, %v375
      %v377 = vpop.f32.mrf.mxu0
      %v378 = vadd.f32 0.0, %v377
      %379 = vdwg.mxu0
      %380 = vmatpush.bf16.msra.mxu0 %v341
      %381 = vmatpush.bf16.msra.mxu0 %v340
      %382 = vmatpush.bf16.msra.mxu0 %v339
      %383 = vmatpush.bf16.msra.mxu0 %v338
      %384 = vmatpush.bf16.msra.mxu0 %v337
      %385 = vmatpush.bf16.msra.mxu0 %v336
      %386 = vmatpush.bf16.msra.mxu0 %v335
      %387 = vmatpush.bf16.msra.mxu0 %v334
      %388 = vmatmul.bf16.gmra.mxu0 %v250
      %v389 = vpop.f32.mrf.mxu0
      %v390 = vadd.f32 %v376, %v389
      %v391 = vpop.f32.mrf.mxu0
      %v392 = vadd.f32 %v378, %v391
      %393 = vdwg.mxu0
      %394 = vmatpush.bf16.msra.mxu0 0
      %395 = vmatpush.bf16.msra.mxu0 0
      %396 = vmatpush.bf16.msra.mxu0 0
      %397 = vmatpush.bf16.msra.mxu0 0
      %398 = vmatpush.bf16.msra.mxu0 0
      %399 = vmatpush.bf16.msra.mxu0 0
      %400 = vmatpush.bf16.msra.mxu0 %v343
      %401 = vmatpush.bf16.msra.mxu0 %v342
      %402 = vmatmul.bf16.gmra.mxu0 %v364
      %v403 = vpop.f32.mrf.mxu0
      %v404 = vadd.f32 %v390, %v403
      %v405 = vpop.f32.mrf.mxu0
      %v406 = vadd.f32 %v392, %v405
      %407 = vdwg.mxu0
      %v408 = vld [vmem:[%s2] sm:$0x1]
      %v409 = vld [vmem:[%s3] sm:$0x1]
      %vm410 = vcmask 523264
      %v411 = vsel %vm410, %v404, 0.0
      %v412 = vsel %vm410, %v406, 0.0
      %v413 = vadd.f32 %v411, %v412
      %v414 = vrot.slane %v413, 4
      %v415 = vadd.f32 %v413, %v414
      %v416 = vrot.slane %v415, 2
      %v417 = vadd.f32 %v415, %v416
      %v418 = vrot.slane %v417, 1
      %v419 = vadd.f32 %v417, %v418
      %v420 = vadd.f32 %v419, 0.0
      %422 = vrot.lane.b32.xlu0 %v419, 112
      %v423 = vpop.permute.xlu0 %422
      %v425 = vadd.f32 %v420, %v423
      %426 = vrot.lane.b32.xlu0 %v419, 96
      %v427 = vpop.permute.xlu0 %426
      %v429 = vadd.f32 %v425, %v427
      %430 = vrot.lane.b32.xlu0 %v419, 80
      %v431 = vpop.permute.xlu0 %430
      %v433 = vadd.f32 %v429, %v431
      %v434 = vrcp.pop 64.0
      %v435 = vmul.f32 64.0, %v434
      %v436 = vsub.f32 1.0, %v435
      %v437 = vmul.f32 %v434, %v436
      %v438 = vadd.f32 %v434, %v437
      %vm439 = vweird.f32 %v434
      %v440 = vsel %vm439, %v434, %v438
      %v441 = vmul.f32 %v433, %v440
      %443 = vrot.lane.b32.xlu0 %v441, 16
      %v444 = vpop.permute.xlu0 %443
      %446 = vrot.lane.b32.xlu0 %v441, 32
      %v447 = vpop.permute.xlu0 %446
      %449 = vrot.lane.b32.xlu0 %v441, 48
      %v450 = vpop.permute.xlu0 %449
      %vm452 = vcmask 130048
      %v453 = vsel %vm452, %v441, %v444
      %v454 = vsel %vm362, %v453, %v447
      %vm455 = vcmask 392192
      %v456 = vsel %vm455, %v454, %v450
      %v457 = vperm.slane %v456, 0
      %v458 = vsub.f32 %v404, %v457
      %v459 = vsub.f32 %v406, %v457
      %v460 = vmul.f32 %v458, %v458
      %v461 = vmul.f32 %v459, %v459
      %v462 = vsel %vm410, %v460, 0.0
      %v463 = vsel %vm410, %v461, 0.0
      %v464 = vadd.f32 %v462, %v463
      %v465 = vrot.slane %v464, 4
      %v466 = vadd.f32 %v464, %v465
      %v467 = vrot.slane %v466, 2
      %v468 = vadd.f32 %v466, %v467
      %v469 = vrot.slane %v468, 1
      %v470 = vadd.f32 %v468, %v469
      %v471 = vadd.f32 %v470, 0.0
      %473 = vrot.lane.b32.xlu0 %v470, 112
      %v474 = vpop.permute.xlu0 %473
      %v476 = vadd.f32 %v471, %v474
      %477 = vrot.lane.b32.xlu0 %v470, 96
      %v478 = vpop.permute.xlu0 %477
      %v480 = vadd.f32 %v476, %v478
      %481 = vrot.lane.b32.xlu0 %v470, 80
      %v482 = vpop.permute.xlu0 %481
      %v484 = vadd.f32 %v480, %v482
      %v485 = vmul.f32 %v484, %v440
      %487 = vrot.lane.b32.xlu0 %v485, 16
      %v488 = vpop.permute.xlu0 %487
      %490 = vrot.lane.b32.xlu0 %v485, 32
      %v491 = vpop.permute.xlu0 %490
      %493 = vrot.lane.b32.xlu0 %v485, 48
      %v494 = vpop.permute.xlu0 %493
      %v496 = vsel %vm452, %v485, %v488
      %v497 = vsel %vm362, %v496, %v491
      %v498 = vsel %vm455, %v497, %v494
      %v499 = vadd.f32 %v498, 1e-05
      %v500 = vrsqrt.pop %v499
      %v501 = vmul.f32 %v500, %v499
      %v502 = vmul.f32 %v501, %v500
      %v503 = vmul.f32 0.5, %v502
      %v504 = vsub.f32 1.5, %v503
      %v505 = vmul.f32 %v500, %v504
      %vm506 = vweird.f32 %v499
      %vm507 = vweird.f32 %v500
      %vm508 = vmor %vm506, %vm507
      %v509 = vsel %vm508, %v500, %v505
      %v510 = vperm.slane %v509, 0
      %v511 = vmul.f32 %v458, %v510
      %v512 = vmul.f32 %v459, %v510
      %v514 = vperm.slane %v408, 0
      %v516 = vmul.f32 %v511, %v514
      %v517 = vmul.f32 %v512, %v514
      %v519 = vperm.slane %v409, 0
      %v521 = vadd.f32 %v516, %v519
      %v522 = vadd.f32 %v517, %v519
      %v523 = vmax.f32 %v521, 0.0
      %v524 = vmax.f32 %v522, 0.0
      %525 = vst.msk [vmem:[%s197] sm:$0xff] %vm410, %v523
      %526 = vst.msk [vmem:[%s197 + $0x8] sm:$0xff] %vm410, %v524
      %p527 = scmp.lt.s32.totalorder %s15, 1
      %s528 = scalar_select %p527, %s15, 1
      %s529 = smul.addr %s528, 2
      %s530 = smul.addr %s529, 8
      %s531 = scalar_lea.vmem %s4, %s530
      // Predicated region
      $region37: #{generator_forward.17} parent=35 // pred_check
        %p532 = pneg %p122
      $region38: #{generator_forward.17} parent=35 // pred_check_branch
        %534 = sbr.rel (%p532) target = $region40
      $region39: #{generator_forward.17} parent=35 // pred_region
        _
      $region40: #{generator_forward.17} parent=35 // pred_fallthru
        _
    $region36: #{generator_forward.17} parent=5 // pred_fallthru
      _
    %p535 = scmp.le.s32.totalorder 2, %s10
    // Predicated region
    $region41: #{generator_forward.17} parent=5 // pred_check
      %p536 = pneg %p535
    $region42: #{generator_forward.17} parent=5 // pred_check_branch
      %538 = sbr.rel (%p536) target = $region44
    $region43: #{generator_forward.17} parent=5 // pred_region
      %s539 = ssub.s32 %s10, 2
      // Predicated region
      $region45: #{generator_forward.17} parent=43 // pred_check
        %p540 = pneg %p128
      $region46: #{generator_forward.17} parent=43 // pred_check_branch
        %542 = sbr.rel (%p540) target = $region48
      $region47: #{generator_forward.17} parent=43 // pred_region
        %p543 = scmp.lt.s32.totalorder %s16, 1
        %s544 = scalar_select %p543, %s16, 1
        %s545 = smul.addr %s544, 2
        %s546 = smul.addr %s545, 8
        %s547 = scalar_lea.vmem %s4, %s546
      $region48: #{generator_forward.17} parent=43 // pred_fallthru
        _
    $region44: #{generator_forward.17} parent=5 // pred_fallthru
      _
  $region6: #{generator_forward.17} parent=0 // loop_footer
    %s14 = sadd.s32 1, %s10
  $region7: #{generator_forward.17} parent=0 // loop_footer_branch
    %9 = sbr.rel target = $region3
  $region8: #{generator_forward.17} parent=0 // loop_exit
    _

// kernel: tile.33
$region0: #{tile.33}
  #allocation0 [shape = 's32[1]{0}', space=sflag, size = 0x4, scoped, tag = 'scoped memory for tile.33']
  %s0 = inlined_call_operand.vmem [shape: f32[8], index: 0, kind: input, shape index: {}]
  %s1 = inlined_call_operand.vmem [shape: f32[4,8], index: 1, kind: output, shape index: {}]
  // Predicated region
  $region2: #{tile.33} parent=0 // pred_check
    _
  $region3: #{tile.33} parent=0 // pred_check_branch
    %3 = sbr.rel (0) target = $region5
  $region4: #{tile.33} parent=0 // pred_region
    _
  $region5: #{tile.33} parent=0 // pred_fallthru
    _
  %v4 = vld [vmem:[%s0] ss:$0 sm:$0xff]
  %5 = vst [vmem:[%s1] sm:$0xf] %v4

// kernel: tile.38
$region0: #{tile.38}
  %s0 = inlined_call_operand.vmem [shape: f32[4,8], index: 0, kind: input, shape index: {}]
  %s1 = inlined_call_operand.vmem [shape: f32[1,32], index: 1, kind: output, shape index: {}]
  $region1: #{tile.38} parent=0
    #allocation0 [shape = 'u8[4096]{0}', space=vmem, size = 0x1000, scoped, tag = 'scoped mem for output reshape']
    #allocation1 [shape = 'u8[4096]{0}', space=vmem, size = 0x1000, scoped, tag = 'scoped mem for input reshape']
    %s3 = ssub.s32 16, 1
    %v4 = vld [vmem:[%s0] sm:%s3]
    %5 = vst [vmem:[#allocation1] sm:%s3] %v4
    %v6 = vld [vmem:[#allocation1] sm:$0x1]
    %vm7 = vcmask 64512
    %8 = vst.msk [vmem:[#allocation0] sm:$0x1] %vm7, %v6
    %s9 = scalar_lea.vmem [#allocation1], 3
    %v10 = vld [vmem:[%s9] sm:$0x1]
    %11 = vrot.lane.b32.xlu0 %v10, 24
    %v12 = vpop.permute.xlu0 %11
    %vm13 = vcmask 261312
    %14 = vst.msk [vmem:[#allocation0] sm:$0x1] %vm13, %v12
    %s15 = scalar_lea.vmem [#allocation1], 2
    %v16 = vld [vmem:[%s15] sm:$0x1]
    %17 = vrot.lane.b32.xlu0 %v16, 16
    %v18 = vpop.permute.xlu0 %17
    %vm19 = vcmask 195712
    %20 = vst.msk [vmem:[#allocation0] sm:$0x1] %vm19, %v18
    %s21 = scalar_lea.vmem [#allocation1], 1
    %v22 = vld [vmem:[%s21] sm:$0x1]
    %23 = vrot.lane.b32.xlu0 %v22, 8
    %v24 = vpop.permute.xlu0 %23
    %vm25 = vcmask 130112
    %26 = vst.msk [vmem:[#allocation0] sm:$0x1] %vm25, %v24
    %s28 = ssub.s32 2, 1
    %v29 = vld [vmem:[#allocation0] sm:%s28]
    %s31 = ssub.s32 2, 1
    %32 = vst [vmem:[%s1] sm:%s31] %v29

// kernel: generator_forward.18
$region0: #{generator_forward.18}
  #allocation0 [shape = 'u32[]', space=smem, size = 0x4, offset = 0x4, fixed_abs, tag = 'smem constant byte address 0x4 - core index']
  #allocation1 [shape = 'u32[72,128]{1,0:T(1,128)}', space=vmem, size = 0x9000, scoped, tag = 'internal scratch']
  %s0 = inlined_call_operand.vmem [shape: bf16[2,64,144], index: 0, kind: input, shape index: {}]
  %s1 = inlined_call_operand.vmem [shape: bf16[144,32], index: 1, kind: input, shape index: {}]
  %s2 = inlined_call_operand.vmem [shape: f32[1,32], index: 2, kind: input, shape index: {}]
  %s3 = inlined_call_operand.vmem [shape: f32[1,32], index: 3, kind: input, shape index: {}]
  %s4 = inlined_call_operand.vmem [shape: f32[2,64,32], index: 4, kind: output, shape index: {}]
  %s5 = sld [smem:[#allocation0]]
  $region49: #{generator_forward.18} parent=0
    _
  %s7 = ssub.s32 1, %s5
  %s8 = scalar_select 0, %s7, %s5
  loop: start=0, step=1, limit=4
  $region2: #{generator_forward.18} parent=0 // loop_pre_header
    _
  $region3: #{generator_forward.18} parent=0 // loop_header
    %s10 = sphi 0, %s14
    %p11 = scmp.ge.s32.totalorder %s10, 4
    %s20 = sphi 0, %s22
    %s23 = sphi 0, %s20
    %s24 = sphi 0, %s23
    %s40 = sphi 0, %s24
    %s44 = sphi 0, %s44
    %s46 = sphi 0, %s44
    %s47 = sphi 0, %s46
    %s61 = sphi 0, %s47
    %s65 = sphi 0, %s65
    %s67 = sphi 0, %s65
    %s68 = sphi 0, %s67
    %s82 = sphi 0, %s68
    %s86 = sphi 0, %s86
    %s88 = sphi 0, %s86
    %s89 = sphi 0, %s88
    %s103 = sphi 0, %s89
    %s109 = sphi 0, %s111
    %s112 = sphi 0, %s109
    %s113 = sphi 0, %s112
    %s129 = sphi 0, %s113
  $region4: #{generator_forward.18} parent=0 // loop_header_branch
    %13 = sbr.rel (%p11) target = $region8
  $region5: #{generator_forward.18} parent=0 // loop_body
    %s15 = ssub.s32 %s10, 1
    %s16 = ssub.s32 %s10, 2
    %s17 = sadd.s32 %s10, 1
    %s18 = ssub.s32 %s10, %s17
    %p19 = scmp.eq.s32.totalorder %s18, 0
    %s21 = sadd.s32 %s20, 1
    %s22 = scalar_select %p19, %s20, %s21
    %p25 = pneg %p19
    %p26 = scmp.eq.s32.totalorder %s10, 1
    %p27 = por %p25, %p26
    %p28 = scmp.ne.s32.totalorder %s20, %s23
    %p29 = scmp.eq.s32.totalorder %s10, 0
    %p30 = por %p28, %p29
    %p31 = scmp.ne.s32.totalorder %s20, %s23
    %p32 = scmp.eq.s32.totalorder %s15, 1
    %p33 = por %p31, %p32
    %p34 = scmp.ne.s32.totalorder %s23, %s24
    %p35 = scmp.eq.s32.totalorder %s15, 0
    %p36 = por %p34, %p35
    %p37 = scmp.ne.s32.totalorder %s23, %s24
    %p38 = scmp.eq.s32.totalorder %s16, 1
    %p39 = por %p37, %p38
    %p41 = scmp.ne.s32.totalorder %s24, %s40
    %p42 = scmp.eq.s32.totalorder %s16, 0
    %p43 = por %p41, %p42
    %s45 = sadd.s32 %s44, 1
    %p48 = scmp.eq.s32.totalorder %s10, 1
    %p49 = scmp.ne.s32.totalorder %s44, %s46
    %p50 = scmp.eq.s32.totalorder %s10, 0
    %p51 = por %p49, %p50
    %p52 = scmp.ne.s32.totalorder %s44, %s46
    %p53 = scmp.eq.s32.totalorder %s15, 1
    %p54 = por %p52, %p53
    %p55 = scmp.ne.s32.totalorder %s46, %s47
    %p56 = scmp.eq.s32.totalorder %s15, 0
    %p57 = por %p55, %p56
    %p58 = scmp.ne.s32.totalorder %s46, %s47
    %p59 = scmp.eq.s32.totalorder %s16, 1
    %p60 = por %p58, %p59
    %p62 = scmp.ne.s32.totalorder %s47, %s61
    %p63 = scmp.eq.s32.totalorder %s16, 0
    %p64 = por %p62, %p63
    %s66 = sadd.s32 %s65, 1
    %p69 = scmp.eq.s32.totalorder %s10, 1
    %p70 = scmp.ne.s32.totalorder %s65, %s67
    %p71 = scmp.eq.s32.totalorder %s10, 0
    %p72 = por %p70, %p71
    %p73 = scmp.ne.s32.totalorder %s65, %s67
    %p74 = scmp.eq.s32.totalorder %s15, 1
    %p75 = por %p73, %p74
    %p76 = scmp.ne.s32.totalorder %s67, %s68
    %p77 = scmp.eq.s32.totalorder %s15, 0
    %p78 = por %p76, %p77
    %p79 = scmp.ne.s32.totalorder %s67, %s68
    %p80 = scmp.eq.s32.totalorder %s16, 1
    %p81 = por %p79, %p80
    %p83 = scmp.ne.s32.totalorder %s68, %s82
    %p84 = scmp.eq.s32.totalorder %s16, 0
    %p85 = por %p83, %p84
    %s87 = sadd.s32 %s86, 1
    %p90 = scmp.eq.s32.totalorder %s10, 1
    %p91 = scmp.ne.s32.totalorder %s86, %s88
    %p92 = scmp.eq.s32.totalorder %s10, 0
    %p93 = por %p91, %p92
    %p94 = scmp.ne.s32.totalorder %s86, %s88
    %p95 = scmp.eq.s32.totalorder %s15, 1
    %p96 = por %p94, %p95
    %p97 = scmp.ne.s32.totalorder %s88, %s89
    %p98 = scmp.eq.s32.totalorder %s15, 0
    %p99 = por %p97, %p98
    %p100 = scmp.ne.s32.totalorder %s88, %s89
    %p101 = scmp.eq.s32.totalorder %s16, 1
    %p102 = por %p100, %p101
    %p104 = scmp.ne.s32.totalorder %s89, %s103
    %p105 = scmp.eq.s32.totalorder %s16, 0
    %p106 = por %p104, %p105
    %s107 = ssub.s32 %s10, %s17
    %p108 = scmp.eq.s32.totalorder %s107, 0
    %s110 = sadd.s32 %s109, 1
    %s111 = scalar_select %p108, %s109, %s110
    %p114 = pneg %p108
    %p115 = scmp.eq.s32.totalorder %s10, 1
    %p116 = por %p114, %p115
    %p117 = scmp.ne.s32.totalorder %s109, %s112
    %p118 = scmp.eq.s32.totalorder %s10, 0
    %p119 = por %p117, %p118
    %p120 = scmp.ne.s32.totalorder %s109, %s112
    %p121 = scmp.eq.s32.totalorder %s15, 1
    %p122 = por %p120, %p121
    %p123 = scmp.ne.s32.totalorder %s112, %s113
    %p124 = scmp.eq.s32.totalorder %s15, 0
    %p125 = por %p123, %p124
    %p126 = scmp.ne.s32.totalorder %s112, %s113
    %p127 = scmp.eq.s32.totalorder %s16, 1
    %p128 = por %p126, %p127
    %p130 = scmp.ne.s32.totalorder %s113, %s129
    %p131 = scmp.eq.s32.totalorder %s16, 0
    %p132 = por %p130, %p131
    %p133 = scmp.le.s32.totalorder 1, %s10
    %p134 = scmp.lt.s32.totalorder %s10, 3
    %p135 = pnand %p133, %p134
    %p136 = pneg %p135
    // Predicated region
    $region9: #{generator_forward.18} parent=5 // pred_check
      _
    $region10: #{generator_forward.18} parent=5 // pred_check_branch
      %138 = sbr.rel (%p135) target = $region12
    $region11: #{generator_forward.18} parent=5 // pred_region
      %s139 = ssub.s32 %s10, 1
      // Predicated region
      $region13: #{generator_forward.18} parent=11 // pred_check
        %p140 = pneg %p57
      $region14: #{generator_forward.18} parent=11 // pred_check_branch
        %142 = sbr.rel (%p140) target = $region16
      $region15: #{generator_forward.18} parent=11 // pred_region
        _
      $region16: #{generator_forward.18} parent=11 // pred_fallthru
        _
      // Predicated region
      $region17: #{generator_forward.18} parent=11 // pred_check
        %p143 = pneg %p78
      $region18: #{generator_forward.18} parent=11 // pred_check_branch
        %145 = sbr.rel (%p143) target = $region20
      $region19: #{generator_forward.18} parent=11 // pred_region
        _
      $region20: #{generator_forward.18} parent=11 // pred_fallthru
        _
      // Predicated region
      $region21: #{generator_forward.18} parent=11 // pred_check
        %p146 = pneg %p99
      $region22: #{generator_forward.18} parent=11 // pred_check_branch
        %148 = sbr.rel (%p146) target = $region24
      $region23: #{generator_forward.18} parent=11 // pred_region
        _
      $region24: #{generator_forward.18} parent=11 // pred_fallthru
        _
    $region12: #{generator_forward.18} parent=5 // pred_fallthru
      _
    %p149 = scmp.lt.s32.totalorder %s10, 2
    // Predicated region
    $region25: #{generator_forward.18} parent=5 // pred_check
      %p150 = pneg %p149
    $region26: #{generator_forward.18} parent=5 // pred_check_branch
      %152 = sbr.rel (%p150) target = $region28
    $region27: #{generator_forward.18} parent=5 // pred_region
      // Predicated region
      $region29: #{generator_forward.18} parent=27 // pred_check
        %p153 = pneg %p30
      $region30: #{generator_forward.18} parent=27 // pred_check_branch
        %155 = sbr.rel (%p153) target = $region32
      $region31: #{generator_forward.18} parent=27 // pred_region
        %p156 = scmp.lt.s32.totalorder %s10, 1
        %s157 = scalar_select %p156, %s10, 1
        %s158 = smul.addr %s157, 16
        %s159 = smul.addr %s158, 4
        %s160 = scalar_lea.vmem %s0, %s159
      $region32: #{generator_forward.18} parent=27 // pred_fallthru
        _
    $region28: #{generator_forward.18} parent=5 // pred_fallthru
      _
    %p161 = scmp.le.s32.totalorder 1, %s10
    %p162 = scmp.lt.s32.totalorder %s10, 3
    %p163 = pnand %p161, %p162
    %p164 = pneg %p163
    // Predicated region
    $region33: #{generator_forward.18} parent=5 // pred_check
      _
    $region34: #{generator_forward.18} parent=5 // pred_check_branch
      %166 = sbr.rel (%p163) target = $region36
    $region35: #{generator_forward.18} parent=5 // pred_region
      %s167 = ssub.s32 %s10, 1
      %p168 = scmp.lt.s32.totalorder %s15, 1
      %s169 = scalar_select %p168, %s15, 1
      %s170 = smul.addr %s169, 16
      %s171 = smul.addr %s170, 4
      %s172 = scalar_lea.vmem %s0, %s171
      %p173 = pneg %p36
      %p174 = pneg %p33
      %p175 = pneg %p57
      %p176 = pneg %p54
      %p177 = pneg %p78
      %p178 = pneg %p75
      %p179 = pneg %p99
      %p180 = pneg %p96
      %p181 = pneg %p125
      %p182 = pneg %p122
      %p183 = scmp.lt.s32.totalorder %s15, 1
      %s184 = scalar_select %p183, %s15, 1
      %s185 = smul.addr %s184, 8
      %s186 = smul.addr %s185, 8
      %s187 = scalar_lea.vmem %s4, %s186
      %p188 = scmp.lt.s32.totalorder %s15, 1
      %s189 = scalar_select %p188, %s15, 1
      %s190 = smul.addr %s189, 16
      %s191 = smul.addr %s190, 4
      %s192 = scalar_lea.vmem %s0, %s191
      %p193 = scmp.lt.s32.totalorder %s15, 1
      %s194 = scalar_select %p193, %s15, 1
      %s195 = smul.addr %s194, 8
      %s196 = smul.addr %s195, 8
      %s197 = scalar_lea.vmem %s4, %s196
      %v199 = vld [vmem:[%s192] sm:$0xff]
      %v200 = vld [vmem:[%s192 + $0x8] sm:$0xff]
      %v201 = vld [vmem:[%s192 + $0x10] sm:$0xff]
      %v202 = vld [vmem:[%s192 + $0x18] sm:$0xff]
      %v203 = vld [vmem:[%s192 + $0x20] sm:$0xff]
      %v204 = vld [vmem:[%s192 + $0x28] sm:$0xff]
      %v205 = vld [vmem:[%s192 + $0x30] sm:$0xff]
      %v206 = vld [vmem:[%s192 + $0x38] sm:$0xff]
      %v207 = vld [vmem:[%s1] sm:$0xf]
      %v208 = vld [vmem:[%s1 + $0x4] sm:$0xf]
      %v209 = vld [vmem:[%s1 + $0x8] sm:$0xf]
      %v210 = vld [vmem:[%s1 + $0xc] sm:$0xf]
      %v211 = vld [vmem:[%s1 + $0x10] sm:$0xf]
      %v212 = vld [vmem:[%s1 + $0x14] sm:$0xf]
      %v213 = vld [vmem:[%s1 + $0x18] sm:$0xf]
      %v214 = vld [vmem:[%s1 + $0x1c] sm:$0xf]
      %v215 = vld [vmem:[%s1 + $0x20] sm:$0xf]
      %v216 = vld [vmem:[%s1 + $0x24] sm:$0xf]
      %v217 = vld [vmem:[%s1 + $0x28] sm:$0xf]
      %v218 = vld [vmem:[%s1 + $0x2c] sm:$0xf]
      %v219 = vld [vmem:[%s1 + $0x30] sm:$0xf]
      %v220 = vld [vmem:[%s1 + $0x34] sm:$0xf]
      %v221 = vld [vmem:[%s1 + $0x38] sm:$0xf]
      %v222 = vld [vmem:[%s1 + $0x3c] sm:$0xf]
      %v223 = vld [vmem:[%s1 + $0x40] sm:$0xf]
      %v224 = vld [vmem:[%s1 + $0x44] sm:$0xf]
      %v233 = vunpack.c.l.b16 %v199
      %v234 = vunpack.c.h.b16 %v199
      %v235 = vunpack.c.l.b16 %v200
      %v236 = vunpack.c.h.b16 %v200
      %v237 = vunpack.c.l.b16 %v201
      %v238 = vunpack.c.h.b16 %v201
      %v239 = vunpack.c.l.b16 %v202
      %v240 = vunpack.c.h.b16 %v202
      %v241 = vunpack.c.l.b16 %v203
      %v242 = vunpack.c.h.b16 %v203
      %v243 = vunpack.c.l.b16 %v204
      %v244 = vunpack.c.h.b16 %v204
      %v245 = vunpack.c.l.b16 %v205
      %v246 = vunpack.c.h.b16 %v205
      %v247 = vunpack.c.l.b16 %v206
      %v248 = vunpack.c.h.b16 %v206
      %v249 = vpack.c.b16 %v235, %v233
      %v250 = vpack.c.b16 %v236, %v234
      %v251 = vpack.c.b16 %v239, %v237
      %v252 = vpack.c.b16 %v240, %v238
      %v253 = vpack.c.b16 %v243, %v241
      %v254 = vpack.c.b16 %v244, %v242
      %v255 = vpack.c.b16 %v247, %v245
      %v256 = vpack.c.b16 %v248, %v246
      %v279 = vunpack.c.l.b16 %v207
      %v280 = vunpack.c.l.b16 %v208
      %v281 = vunpack.c.l.b16 %v209
      %v282 = vunpack.c.l.b16 %v210
      %v283 = vunpack.c.l.b16 %v211
      %v284 = vunpack.c.l.b16 %v212
      %v285 = vunpack.c.l.b16 %v213
      %v286 = vunpack.c.l.b16 %v214
      %v287 = vunpack.c.l.b16 %v215
      %v288 = vunpack.c.l.b16 %v216
      %v289 = vunpack.c.l.b16 %v217
      %v290 = vunpack.c.l.b16 %v218
      %v291 = vunpack.c.l.b16 %v219
      %v292 = vunpack.c.l.b16 %v220
      %v293 = vunpack.c.l.b16 %v221
      %v294 = vunpack.c.l.b16 %v222
      %v295 = vunpack.c.l.b16 %v223
      %v296 = vunpack.c.l.b16 %v224
      %v297 = vpack.c.b16 %v280, %v279
      %v298 = vpack.c.b16 %v282, %v281
      %v299 = vpack.c.b16 %v284, %v283
      %v300 = vpack.c.b16 %v286, %v285
      %v301 = vpack.c.b16 %v288, %v287
      %v302 = vpack.c.b16 %v290, %v289
      %v303 = vpack.c.b16 %v292, %v291
      %v304 = vpack.c.b16 %v294, %v293
      %v305 = vpack.c.b16 %v296, %v295
      %vm315 = vcmask 130048
      %v317 = vsel %vm315, %v250, 0
      %v320 = vsel %vm315, %v252, 0
      %v323 = vsel %vm315, %v254, 0
      %v326 = vsel %vm315, %v256, 0
      %328 = vmatpush.bf16.msra.mxu0 %v304
      %329 = vmatpush.bf16.msra.mxu0 %v303
      %330 = vmatpush.bf16.msra.mxu0 %v302
      %331 = vmatpush.bf16.msra.mxu0 %v301
      %332 = vmatpush.bf16.msra.mxu0 %v300
      %333 = vmatpush.bf16.msra.mxu0 %v299
      %334 = vmatpush.bf16.msra.mxu0 %v298
      %335 = vmatpush.bf16.msra.mxu0 %v297
      %336 = vmatmul.bf16.gmra.mxu0 %v249
      %v337 = vpop.f32.mrf.mxu0
      %v338 = vadd.f32 0.0, %v337
      %v339 = vpop.f32.mrf.mxu0
      %v340 = vadd.f32 0.0, %v339
      %341 = vmatmul.bf16.gmra.mxu0 %v251
      %v342 = vpop.f32.mrf.mxu0
      %v343 = vadd.f32 0.0, %v342
      %v344 = vpop.f32.mrf.mxu0
      %v345 = vadd.f32 0.0, %v344
      %346 = vmatmul.bf16.gmra.mxu0 %v253
      %v347 = vpop.f32.mrf.mxu0
      %v348 = vadd.f32 0.0, %v347
      %v349 = vpop.f32.mrf.mxu0
      %v350 = vadd.f32 0.0, %v349
      %351 = vmatmul.bf16.gmra.mxu0 %v255
      %v352 = vpop.f32.mrf.mxu0
      %v353 = vadd.f32 0.0, %v352
      %v354 = vpop.f32.mrf.mxu0
      %v355 = vadd.f32 0.0, %v354
      %356 = vdwg.mxu0
      %357 = vmatpush.bf16.msra.mxu0 0
      %358 = vmatpush.bf16.msra.mxu0 0
      %359 = vmatpush.bf16.msra.mxu0 0
      %360 = vmatpush.bf16.msra.mxu0 0
      %361 = vmatpush.bf16.msra.mxu0 0
      %362 = vmatpush.bf16.msra.mxu0 0
      %363 = vmatpush.bf16.msra.mxu0 0
      %364 = vmatpush.bf16.msra.mxu0 %v305
      %365 = vmatmul.bf16.gmra.mxu0 %v317
      %v366 = vpop.f32.mrf.mxu0
      %v367 = vadd.f32 %v338, %v366
      %v368 = vpop.f32.mrf.mxu0
      %v369 = vadd.f32 %v340, %v368
      %370 = vmatmul.bf16.gmra.mxu0 %v320
      %v371 = vpop.f32.mrf.mxu0
      %v372 = vadd.f32 %v343, %v371
      %v373 = vpop.f32.mrf.mxu0
      %v374 = vadd.f32 %v345, %v373
      %375 = vmatmul.bf16.gmra.mxu0 %v323
      %v376 = vpop.f32.mrf.mxu0
      %v377 = vadd.f32 %v348, %v376
      %v378 = vpop.f32.mrf.mxu0
      %v379 = vadd.f32 %v350, %v378
      %380 = vmatmul.bf16.gmra.mxu0 %v326
      %v381 = vpop.f32.mrf.mxu0
      %v382 = vadd.f32 %v353, %v381
      %v383 = vpop.f32.mrf.mxu0
      %v384 = vadd.f32 %v355, %v383
      %385 = vdwg.mxu0
      %v386 = vld [vmem:[%s2] sm:$0x1]
      %v387 = vld [vmem:[%s3] sm:$0x1]
      %vm388 = vcmask 261120
      %v389 = vsel %vm388, %v367, 0.0
      %v390 = vsel %vm388, %v369, 0.0
      %v391 = vadd.f32 %v389, %v390
      %v392 = vsel %vm388, %v372, 0.0
      %v393 = vadd.f32 %v391, %v392
      %v394 = vsel %vm388, %v374, 0.0
      %v395 = vadd.f32 %v393, %v394
      %v396 = vsel %vm388, %v377, 0.0
      %v397 = vadd.f32 %v395, %v396
      %v398 = vsel %vm388, %v379, 0.0
      %v399 = vadd.f32 %v397, %v398
      %v400 = vsel %vm388, %v382, 0.0
      %v401 = vadd.f32 %v399, %v400
      %v402 = vsel %vm388, %v384, 0.0
      %v403 = vadd.f32 %v401, %v402
      %v404 = vrot.slane %v403, 4
      %v405 = vadd.f32 %v403, %v404
      %v406 = vrot.slane %v405, 2
      %v407 = vadd.f32 %v405, %v406
      %v408 = vrot.slane %v407, 1
      %v409 = vadd.f32 %v407, %v408
      %v410 = vadd.f32 %v409, 0.0
      %412 = vrot.lane.b32.xlu0 %v409, 120
      %v413 = vpop.permute.xlu0 %412
      %v415 = vadd.f32 %v410, %v413
      %416 = vrot.lane.b32.xlu0 %v409, 112
      %v417 = vpop.permute.xlu0 %416
      %v419 = vadd.f32 %v415, %v417
      %420 = vrot.lane.b32.xlu0 %v409, 104
      %v421 = vpop.permute.xlu0 %420
      %v423 = vadd.f32 %v419, %v421
      %v424 = vrcp.pop 256.0
      %v425 = vmul.f32 256.0, %v424
      %v426 = vsub.f32 1.0, %v425
      %v427 = vmul.f32 %v424, %v426
      %v428 = vadd.f32 %v424, %v427
      %vm429 = vweird.f32 %v424
      %v430 = vsel %vm429, %v424, %v428
      %v431 = vmul.f32 %v423, %v430
      %433 = vrot.lane.b32.xlu0 %v431, 8
      %v434 = vpop.permute.xlu0 %433
      %436 = vrot.lane.b32.xlu0 %v431, 16
      %v437 = vpop.permute.xlu0 %436
      %439 = vrot.lane.b32.xlu0 %v431, 24
      %v440 = vpop.permute.xlu0 %439
      %vm442 = vcmask 64512
      %v443 = vsel %vm442, %v431, %v434
      %v444 = vsel %vm315, %v443, %v437
      %vm445 = vcmask 195584
      %v446 = vsel %vm445, %v444, %v440
      %v447 = vperm.slane %v446, 0
      %v448 = vsub.f32 %v367, %v447
      %v449 = vsub.f32 %v369, %v447
      %v450 = vsub.f32 %v372, %v447
      %v451 = vsub.f32 %v374, %v447
      %v452 = vsub.f32 %v377, %v447
      %v453 = vsub.f32 %v379, %v447
      %v454 = vsub.f32 %v382, %v447
      %v455 = vsub.f32 %v384, %v447
      %v456 = vmul.f32 %v448, %v448
      %v457 = vmul.f32 %v449, %v449
      %v458 = vmul.f32 %v450, %v450
      %v459 = vmul.f32 %v451, %v451
      %v460 = vmul.f32 %v452, %v452
      %v461 = vmul.f32 %v453, %v453
      %v462 = vmul.f32 %v454, %v454
      %v463 = vmul.f32 %v455, %v455
      %v464 = vsel %vm388, %v456, 0.0
      %v465 = vsel %vm388, %v457, 0.0
      %v466 = vadd.f32 %v464, %v465
      %v467 = vsel %vm388, %v458, 0.0
      %v468 = vadd.f32 %v466, %v467
      %v469 = vsel %vm388, %v459, 0.0
      %v470 = vadd.f32 %v468, %v469
      %v471 = vsel %vm388, %v460, 0.0
      %v472 = vadd.f32 %v470, %v471
      %v473 = vsel %vm388, %v461, 0.0
      %v474 = vadd.f32 %v472, %v473
      %v475 = vsel %vm388, %v462, 0.0
      %v476 = vadd.f32 %v474, %v475
      %v477 = vsel %vm388, %v463, 0.0
      %v478 = vadd.f32 %v476, %v477
      %v479 = vrot.slane %v478, 4
      %v480 = vadd.f32 %v478, %v479
      %v481 = vrot.slane %v480, 2
      %v482 = vadd.f32 %v480, %v481
      %v483 = vrot.slane %v482, 1
      %v484 = vadd.f32 %v482, %v483
      %v485 = vadd.f32 %v484, 0.0
      %487 = vrot.lane.b32.xlu0 %v484, 120
      %v488 = vpop.permute.xlu0 %487
      %v490 = vadd.f32 %v485, %v488
      %491 = vrot.lane.b32.xlu0 %v484, 112
      %v492 = vpop.permute.xlu0 %491
      %v494 = vadd.f32 %v490, %v492
      %495 = vrot.lane.b32.xlu0 %v484, 104
      %v496 = vpop.permute.xlu0 %495
      %v498 = vadd.f32 %v494, %v496
      %v499 = vmul.f32 %v498, %v430
      %501 = vrot.lane.b32.xlu0 %v499, 8
      %v502 = vpop.permute.xlu0 %501
      %504 = vrot.lane.b32.xlu0 %v499, 16
      %v505 = vpop.permute.xlu0 %504
      %507 = vrot.lane.b32.xlu0 %v499, 24
      %v508 = vpop.permute.xlu0 %507
      %v510 = vsel %vm442, %v499, %v502
      %v511 = vsel %vm315, %v510, %v505
      %v512 = vsel %vm445, %v511, %v508
      %v513 = vadd.f32 %v512, 1e-05
      %v514 = vrsqrt.pop %v513
      %v515 = vmul.f32 %v514, %v513
      %v516 = vmul.f32 %v515, %v514
      %v517 = vmul.f32 0.5, %v516
      %v518 = vsub.f32 1.5, %v517
      %v519 = vmul.f32 %v514, %v518
      %vm520 = vweird.f32 %v513
      %vm521 = vweird.f32 %v514
      %vm522 = vmor %vm520, %vm521
      %v523 = vsel %vm522, %v514, %v519
      %v524 = vperm.slane %v523, 0
      %v525 = vmul.f32 %v448, %v524
      %v526 = vmul.f32 %v449, %v524
      %v527 = vmul.f32 %v450, %v524
      %v528 = vmul.f32 %v451, %v524
      %v529 = vmul.f32 %v452, %v524
      %v530 = vmul.f32 %v453, %v524
      %v531 = vmul.f32 %v454, %v524
      %v532 = vmul.f32 %v455, %v524
      %v534 = vperm.slane %v386, 0
      %v536 = vmul.f32 %v525, %v534
      %v537 = vmul.f32 %v526, %v534
      %v538 = vmul.f32 %v527, %v534
      %v539 = vmul.f32 %v528, %v534
      %v540 = vmul.f32 %v529, %v534
      %v541 = vmul.f32 %v530, %v534
      %v542 = vmul.f32 %v531, %v534
      %v543 = vmul.f32 %v532, %v534
      %v545 = vperm.slane %v387, 0
      %v547 = vadd.f32 %v536, %v545
      %v548 = vadd.f32 %v537, %v545
      %v549 = vadd.f32 %v538, %v545
      %v550 = vadd.f32 %v539, %v545
      %v551 = vadd.f32 %v540, %v545
      %v552 = vadd.f32 %v541, %v545
      %v553 = vadd.f32 %v542, %v545
      %v554 = vadd.f32 %v543, %v545
      %v555 = vmax.f32 %v547, 0.0
      %v556 = vmax.f32 %v548, 0.0
      %v557 = vmax.f32 %v549, 0.0
      %v558 = vmax.f32 %v550, 0.0
      %v559 = vmax.f32 %v551, 0.0
      %v560 = vmax.f32 %v552, 0.0
      %v561 = vmax.f32 %v553, 0.0
      %v562 = vmax.f32 %v554, 0.0
      %563 = vst.msk [vmem:[%s197] sm:$0xff] %vm388, %v555
      %564 = vst.msk [vmem:[%s197 + $0x8] sm:$0xff] %vm388, %v556
      %565 = vst.msk [vmem:[%s197 + $0x10] sm:$0xff] %vm388, %v557
      %566 = vst.msk [vmem:[%s197 + $0x18] sm:$0xff] %vm388, %v558
      %567 = vst.msk [vmem:[%s197 + $0x20] sm:$0xff] %vm388, %v559
      %568 = vst.msk [vmem:[%s197 + $0x28] sm:$0xff] %vm388, %v560
      %569 = vst.msk [vmem:[%s197 + $0x30] sm:$0xff] %vm388, %v561
      %570 = vst.msk [vmem:[%s197 + $0x38] sm:$0xff] %vm388, %v562
      %p571 = scmp.lt.s32.totalorder %s15, 1
      %s572 = scalar_select %p571, %s15, 1
      %s573 = smul.addr %s572, 8
      %s574 = smul.addr %s573, 8
      %s575 = scalar_lea.vmem %s4, %s574
      // Predicated region
      $region37: #{generator_forward.18} parent=35 // pred_check
        %p576 = pneg %p122
      $region38: #{generator_forward.18} parent=35 // pred_check_branch
        %578 = sbr.rel (%p576) target = $region40
      $region39: #{generator_forward.18} parent=35 // pred_region
        _
      $region40: #{generator_forward.18} parent=35 // pred_fallthru
        _
    $region36: #{generator_forward.18} parent=5 // pred_fallthru
      _
    %p579 = scmp.le.s32.totalorder 2, %s10
    // Predicated region
    $region41: #{generator_forward.18} parent=5 // pred_check
      %p580 = pneg %p579
    $region42: #{generator_forward.18} parent=5 // pred_check_branch
      %582 = sbr.rel (%p580) target = $region44
    $region43: #{generator_forward.18} parent=5 // pred_region
      %s583 = ssub.s32 %s10, 2
      // Predicated region
      $region45: #{generator_forward.18} parent=43 // pred_check
        %p584 = pneg %p128
      $region46: #{generator_forward.18} parent=43 // pred_check_branch
        %586 = sbr.rel (%p584) target = $region48
      $region47: #{generator_forward.18} parent=43 // pred_region
        %p587 = scmp.lt.s32.totalorder %s16, 1
        %s588 = scalar_select %p587, %s16, 1
        %s589 = smul.addr %s588, 8
        %s590 = smul.addr %s589, 8
        %s591 = scalar_lea.vmem %s4, %s590
      $region48: #{generator_forward.18} parent=43 // pred_fallthru
        _
    $region44: #{generator_forward.18} parent=5 // pred_fallthru
      _
  $region6: #{generator_forward.18} parent=0 // loop_footer
    %s14 = sadd.s32 1, %s10
  $region7: #{generator_forward.18} parent=0 // loop_footer_branch
    %9 = sbr.rel target = $region3
  $region8: #{generator_forward.18} parent=0 // loop_exit
    _

// kernel: generator_forward.19
$region0: #{generator_forward.19}
  #allocation0 [shape = 'u32[]', space=smem, size = 0x4, offset = 0x4, fixed_abs, tag = 'smem constant byte address 0x4 - core index']
  #allocation1 [shape = 'u32[72,128]{1,0:T(1,128)}', space=vmem, size = 0x9000, scoped, tag = 'internal scratch']
  %s0 = inlined_call_operand.vmem [shape: bf16[2,256,392], index: 0, kind: input, shape index: {}]
  %s1 = inlined_call_operand.vmem [shape: bf16[392,3], index: 1, kind: input, shape index: {}]
  %s2 = inlined_call_operand.vmem [shape: f32[2,256,3], index: 2, kind: output, shape index: {}]
  %s3 = sld [smem:[#allocation0]]
  $region41: #{generator_forward.19} parent=0
    _
  %s5 = ssub.s32 1, %s3
  %s6 = scalar_select 0, %s5, %s3
  loop: start=0, step=1, limit=4
  $region2: #{generator_forward.19} parent=0 // loop_pre_header
    _
  $region3: #{generator_forward.19} parent=0 // loop_header
    %s8 = sphi 0, %s12
    %p9 = scmp.ge.s32.totalorder %s8, 4
    %s18 = sphi 0, %s20
    %s21 = sphi 0, %s18
    %s22 = sphi 0, %s21
    %s38 = sphi 0, %s22
    %s42 = sphi 0, %s42
    %s44 = sphi 0, %s42
    %s45 = sphi 0, %s44
    %s59 = sphi 0, %s45
    %s65 = sphi 0, %s67
    %s68 = sphi 0, %s65
    %s69 = sphi 0, %s68
    %s85 = sphi 0, %s69
  $region4: #{generator_forward.19} parent=0 // loop_header_branch
    %11 = sbr.rel (%p9) target = $region8
  $region5: #{generator_forward.19} parent=0 // loop_body
    %s13 = ssub.s32 %s8, 1
    %s14 = ssub.s32 %s8, 2
    %s15 = sadd.s32 %s8, 1
    %s16 = ssub.s32 %s8, %s15
    %p17 = scmp.eq.s32.totalorder %s16, 0
    %s19 = sadd.s32 %s18, 1
    %s20 = scalar_select %p17, %s18, %s19
    %p23 = pneg %p17
    %p24 = scmp.eq.s32.totalorder %s8, 1
    %p25 = por %p23, %p24
    %p26 = scmp.ne.s32.totalorder %s18, %s21
    %p27 = scmp.eq.s32.totalorder %s8, 0
    %p28 = por %p26, %p27
    %p29 = scmp.ne.s32.totalorder %s18, %s21
    %p30 = scmp.eq.s32.totalorder %s13, 1
    %p31 = por %p29, %p30
    %p32 = scmp.ne.s32.totalorder %s21, %s22
    %p33 = scmp.eq.s32.totalorder %s13, 0
    %p34 = por %p32, %p33
    %p35 = scmp.ne.s32.totalorder %s21, %s22
    %p36 = scmp.eq.s32.totalorder %s14, 1
    %p37 = por %p35, %p36
    %p39 = scmp.ne.s32.totalorder %s22, %s38
    %p40 = scmp.eq.s32.totalorder %s14, 0
    %p41 = por %p39, %p40
    %s43 = sadd.s32 %s42, 1
    %p46 = scmp.eq.s32.totalorder %s8, 1
    %p47 = scmp.ne.s32.totalorder %s42, %s44
    %p48 = scmp.eq.s32.totalorder %s8, 0
    %p49 = por %p47, %p48
    %p50 = scmp.ne.s32.totalorder %s42, %s44
    %p51 = scmp.eq.s32.totalorder %s13, 1
    %p52 = por %p50, %p51
    %p53 = scmp.ne.s32.totalorder %s44, %s45
    %p54 = scmp.eq.s32.totalorder %s13, 0
    %p55 = por %p53, %p54
    %p56 = scmp.ne.s32.totalorder %s44, %s45
    %p57 = scmp.eq.s32.totalorder %s14, 1
    %p58 = por %p56, %p57
    %p60 = scmp.ne.s32.totalorder %s45, %s59
    %p61 = scmp.eq.s32.totalorder %s14, 0
    %p62 = por %p60, %p61
    %s63 = ssub.s32 %s8, %s15
    %p64 = scmp.eq.s32.totalorder %s63, 0
    %s66 = sadd.s32 %s65, 1
    %s67 = scalar_select %p64, %s65, %s66
    %p70 = pneg %p64
    %p71 = scmp.eq.s32.totalorder %s8, 1
    %p72 = por %p70, %p71
    %p73 = scmp.ne.s32.totalorder %s65, %s68
    %p74 = scmp.eq.s32.totalorder %s8, 0
    %p75 = por %p73, %p74
    %p76 = scmp.ne.s32.totalorder %s65, %s68
    %p77 = scmp.eq.s32.totalorder %s13, 1
    %p78 = por %p76, %p77
    %p79 = scmp.ne.s32.totalorder %s68, %s69
    %p80 = scmp.eq.s32.totalorder %s13, 0
    %p81 = por %p79, %p80
    %p82 = scmp.ne.s32.totalorder %s68, %s69
    %p83 = scmp.eq.s32.totalorder %s14, 1
    %p84 = por %p82, %p83
    %p86 = scmp.ne.s32.totalorder %s69, %s85
    %p87 = scmp.eq.s32.totalorder %s14, 0
    %p88 = por %p86, %p87
    %p89 = scmp.le.s32.totalorder 1, %s8
    %p90 = scmp.lt.s32.totalorder %s8, 3
    %p91 = pnand %p89, %p90
    %p92 = pneg %p91
    // Predicated region
    $region9: #{generator_forward.19} parent=5 // pred_check
      _
    $region10: #{generator_forward.19} parent=5 // pred_check_branch
      %94 = sbr.rel (%p91) target = $region12
    $region11: #{generator_forward.19} parent=5 // pred_region
      %s95 = ssub.s32 %s8, 1
      // Predicated region
      $region13: #{generator_forward.19} parent=11 // pred_check
        %p96 = pneg %p55
      $region14: #{generator_forward.19} parent=11 // pred_check_branch
        %98 = sbr.rel (%p96) target = $region16
      $region15: #{generator_forward.19} parent=11 // pred_region
        _
      $region16: #{generator_forward.19} parent=11 // pred_fallthru
        _
    $region12: #{generator_forward.19} parent=5 // pred_fallthru
      _
    %p99 = scmp.lt.s32.totalorder %s8, 2
    // Predicated region
    $region17: #{generator_forward.19} parent=5 // pred_check
      %p100 = pneg %p99
    $region18: #{generator_forward.19} parent=5 // pred_check_branch
      %102 = sbr.rel (%p100) target = $region20
    $region19: #{generator_forward.19} parent=5 // pred_region
      // Predicated region
      $region21: #{generator_forward.19} parent=19 // pred_check
        %p103 = pneg %p28
      $region22: #{generator_forward.19} parent=19 // pred_check_branch
        %105 = sbr.rel (%p103) target = $region24
      $region23: #{generator_forward.19} parent=19 // pred_region
        %p106 = scmp.lt.s32.totalorder %s8, 1
        %s107 = scalar_select %p106, %s8, 1
        %s108 = smul.addr %s107, 128
        %s109 = smul.addr %s108, 4
        %s110 = scalar_lea.vmem %s0, %s109
      $region24: #{generator_forward.19} parent=19 // pred_fallthru
        _
    $region20: #{generator_forward.19} parent=5 // pred_fallthru
      _
    %p111 = scmp.le.s32.totalorder 1, %s8
    %p112 = scmp.lt.s32.totalorder %s8, 3
    %p113 = pnand %p111, %p112
    %p114 = pneg %p113
    // Predicated region
    $region25: #{generator_forward.19} parent=5 // pred_check
      _
    $region26: #{generator_forward.19} parent=5 // pred_check_branch
      %116 = sbr.rel (%p113) target = $region28
    $region27: #{generator_forward.19} parent=5 // pred_region
      %s117 = ssub.s32 %s8, 1
      %p118 = scmp.lt.s32.totalorder %s13, 1
      %s119 = scalar_select %p118, %s13, 1
      %s120 = smul.addr %s119, 128
      %s121 = smul.addr %s120, 4
      %s122 = scalar_lea.vmem %s0, %s121
      %p123 = pneg %p34
      %p124 = pneg %p31
      %p125 = pneg %p55
      %p126 = pneg %p52
      %p127 = pneg %p81
      %p128 = pneg %p78
      %p129 = scmp.lt.s32.totalorder %s13, 1
      %s130 = scalar_select %p129, %s13, 1
      %s131 = smul.addr %s130, 32
      %s132 = smul.addr %s131, 8
      %s133 = scalar_lea.vmem %s2, %s132
      %p134 = scmp.lt.s32.totalorder %s13, 1
      %s135 = scalar_select %p134, %s13, 1
      %s136 = smul.addr %s135, 128
      %s137 = smul.addr %s136, 4
      %s138 = scalar_lea.vmem %s0, %s137
      %p139 = scmp.lt.s32.totalorder %s13, 1
      %s140 = scalar_select %p139, %s13, 1
      %s141 = smul.addr %s140, 32
      %s142 = smul.addr %s141, 8
      %s143 = scalar_lea.vmem %s2, %s142
      %v145 = vld [vmem:[%s138] sm:$0xff]
      %v146 = vld [vmem:[%s138 + $0x8] sm:$0xff]
      %v147 = vld [vmem:[%s138 + $0x10] sm:$0xff]
      %v148 = vld [vmem:[%s138 + $0x18] sm:$0xff]
      %v149 = vld [vmem:[%s138 + $0x20] sm:$0xff]
      %v150 = vld [vmem:[%s138 + $0x28] sm:$0xff]
      %v151 = vld [vmem:[%s138 + $0x30] sm:$0xff]
      %v152 = vld [vmem:[%s138 + $0x38] sm:$0xff]
      %v153 = vld [vmem:[%s138 + $0x40] sm:$0xff]
      %v154 = vld [vmem:[%s138 + $0x48] sm:$0xff]
      %v155 = vld [vmem:[%s138 + $0x50] sm:$0xff]
      %v156 = vld [vmem:[%s138 + $0x58] sm:$0xff]
      %v157 = vld [vmem:[%s138 + $0x60] sm:$0xff]
      %v158 = vld [vmem:[%s138 + $0x68] sm:$0xff]
      %v159 = vld [vmem:[%s138 + $0x70] sm:$0xff]
      %v160 = vld [vmem:[%s138 + $0x78] sm:$0xff]
      %v161 = vld [vmem:[%s138 + $0x80] sm:$0xff]
      %v162 = vld [vmem:[%s138 + $0x88] sm:$0xff]
      %v163 = vld [vmem:[%s138 + $0x90] sm:$0xff]
      %v164 = vld [vmem:[%s138 + $0x98] sm:$0xff]
      %v165 = vld [vmem:[%s138 + $0xa0] sm:$0xff]
      %v166 = vld [vmem:[%s138 + $0xa8] sm:$0xff]
      %v167 = vld [vmem:[%s138 + $0xb0] sm:$0xff]
      %v168 = vld [vmem:[%s138 + $0xb8] sm:$0xff]
      %v169 = vld [vmem:[%s138 + $0xc0] sm:$0xff]
      %v170 = vld [vmem:[%s138 + $0xc8] sm:$0xff]
      %v171 = vld [vmem:[%s138 + $0xd0] sm:$0xff]
      %v172 = vld [vmem:[%s138 + $0xd8] sm:$0xff]
      %v173 = vld [vmem:[%s138 + $0xe0] sm:$0xff]
      %v174 = vld [vmem:[%s138 + $0xe8] sm:$0xff]
      %v175 = vld [vmem:[%s138 + $0xf0] sm:$0xff]
      %v176 = vld [vmem:[%s138 + $0xf8] sm:$0xff]
      %v177 = vld [vmem:[%s138 + $0x100] sm:$0xff]
      %v178 = vld [vmem:[%s138 + $0x108] sm:$0xff]
      %v179 = vld [vmem:[%s138 + $0x110] sm:$0xff]
      %v180 = vld [vmem:[%s138 + $0x118] sm:$0xff]
      %v181 = vld [vmem:[%s138 + $0x120] sm:$0xff]
      %v182 = vld [vmem:[%s138 + $0x128] sm:$0xff]
      %v183 = vld [vmem:[%s138 + $0x130] sm:$0xff]
      %v184 = vld [vmem:[%s138 + $0x138] sm:$0xff]
      %v185 = vld [vmem:[%s138 + $0x140] sm:$0xff]
      %v186 = vld [vmem:[%s138 + $0x148] sm:$0xff]
      %v187 = vld [vmem:[%s138 + $0x150] sm:$0xff]
      %v188 = vld [vmem:[%s138 + $0x158] sm:$0xff]
      %v189 = vld [vmem:[%s138 + $0x160] sm:$0xff]
      %v190 = vld [vmem:[%s138 + $0x168] sm:$0xff]
      %v191 = vld [vmem:[%s138 + $0x170] sm:$0xff]
      %v192 = vld [vmem:[%s138 + $0x178] sm:$0xff]
      %v193 = vld [vmem:[%s138 + $0x180] sm:$0xff]
      %v194 = vld [vmem:[%s138 + $0x188] sm:$0xff]
      %v195 = vld [vmem:[%s138 + $0x190] sm:$0xff]
      %v196 = vld [vmem:[%s138 + $0x198] sm:$0xff]
      %v197 = vld [vmem:[%s138 + $0x1a0] sm:$0xff]
      %v198 = vld [vmem:[%s138 + $0x1a8] sm:$0xff]
      %v199 = vld [vmem:[%s138 + $0x1b0] sm:$0xff]
      %v200 = vld [vmem:[%s138 + $0x1b8] sm:$0xff]
      %v201 = vld [vmem:[%s138 + $0x1c0] sm:$0xff]
      %v202 = vld [vmem:[%s138 + $0x1c8] sm:$0xff]
      %v203 = vld [vmem:[%s138 + $0x1d0] sm:$0xff]
      %v204 = vld [vmem:[%s138 + $0x1d8] sm:$0xff]
      %v205 = vld [vmem:[%s138 + $0x1e0] sm:$0xff]
      %v206 = vld [vmem:[%s138 + $0x1e8] sm:$0xff]
      %v207 = vld [vmem:[%s138 + $0x1f0] sm:$0xff]
      %v208 = vld [vmem:[%s138 + $0x1f8] sm:$0xff]
      %v209 = vld [vmem:[%s1] sm:$0xf]
      %v210 = vld [vmem:[%s1 + $0x4] sm:$0xf]
      %v211 = vld [vmem:[%s1 + $0x8] sm:$0xf]
      %v212 = vld [vmem:[%s1 + $0xc] sm:$0xf]
      %v213 = vld [vmem:[%s1 + $0x10] sm:$0xf]
      %v214 = vld [vmem:[%s1 + $0x14] sm:$0xf]
      %v215 = vld [vmem:[%s1 + $0x18] sm:$0xf]
      %v216 = vld [vmem:[%s1 + $0x1c] sm:$0xf]
      %v217 = vld [vmem:[%s1 + $0x20] sm:$0xf]
      %v218 = vld [vmem:[%s1 + $0x24] sm:$0xf]
      %v219 = vld [vmem:[%s1 + $0x28] sm:$0xf]
      %v220 = vld [vmem:[%s1 + $0x2c] sm:$0xf]
      %v221 = vld [vmem:[%s1 + $0x30] sm:$0xf]
      %v222 = vld [vmem:[%s1 + $0x34] sm:$0xf]
      %v223 = vld [vmem:[%s1 + $0x38] sm:$0xf]
      %v224 = vld [vmem:[%s1 + $0x3c] sm:$0xf]
      %v225 = vld [vmem:[%s1 + $0x40] sm:$0xf]
      %v226 = vld [vmem:[%s1 + $0x44] sm:$0xf]
      %v227 = vld [vmem:[%s1 + $0x48] sm:$0xf]
      %v228 = vld [vmem:[%s1 + $0x4c] sm:$0xf]
      %v229 = vld [vmem:[%s1 + $0x50] sm:$0xf]
      %v230 = vld [vmem:[%s1 + $0x54] sm:$0xf]
      %v231 = vld [vmem:[%s1 + $0x58] sm:$0xf]
      %v232 = vld [vmem:[%s1 + $0x5c] sm:$0xf]
      %v233 = vld [vmem:[%s1 + $0x60] sm:$0xf]
      %v234 = vld [vmem:[%s1 + $0x64] sm:$0xf]
      %v235 = vld [vmem:[%s1 + $0x68] sm:$0xf]
      %v236 = vld [vmem:[%s1 + $0x6c] sm:$0xf]
      %v237 = vld [vmem:[%s1 + $0x70] sm:$0xf]
      %v238 = vld [vmem:[%s1 + $0x74] sm:$0xf]
      %v239 = vld [vmem:[%s1 + $0x78] sm:$0xf]
      %v240 = vld [vmem:[%s1 + $0x7c] sm:$0xf]
      %v241 = vld [vmem:[%s1 + $0x80] sm:$0xf]
      %v242 = vld [vmem:[%s1 + $0x84] sm:$0xf]
      %v243 = vld [vmem:[%s1 + $0x88] sm:$0xf]
      %v244 = vld [vmem:[%s1 + $0x8c] sm:$0xf]
      %v245 = vld [vmem:[%s1 + $0x90] sm:$0xf]
      %v246 = vld [vmem:[%s1 + $0x94] sm:$0xf]
      %v247 = vld [vmem:[%s1 + $0x98] sm:$0xf]
      %v248 = vld [vmem:[%s1 + $0x9c] sm:$0xf]
      %v249 = vld [vmem:[%s1 + $0xa0] sm:$0xf]
      %v250 = vld [vmem:[%s1 + $0xa4] sm:$0xf]
      %v251 = vld [vmem:[%s1 + $0xa8] sm:$0xf]
      %v252 = vld [vmem:[%s1 + $0xac] sm:$0xf]
      %v253 = vld [vmem:[%s1 + $0xb0] sm:$0xf]
      %v254 = vld [vmem:[%s1 + $0xb4] sm:$0xf]
      %v255 = vld [vmem:[%s1 + $0xb8] sm:$0xf]
      %v256 = vld [vmem:[%s1 + $0xbc] sm:$0xf]
      %v257 = vld [vmem:[%s1 + $0xc0] sm:$0xf]
      %v322 = vunpack.c.l.b16 %v145
      %v323 = vunpack.c.h.b16 %v145
      %v324 = vunpack.c.l.b16 %v146
      %v325 = vunpack.c.h.b16 %v146
      %v326 = vunpack.c.l.b16 %v147
      %v327 = vunpack.c.h.b16 %v147
      %v328 = vunpack.c.l.b16 %v148
      %v329 = vunpack.c.h.b16 %v148
      %v330 = vunpack.c.l.b16 %v149
      %v331 = vunpack.c.h.b16 %v149
      %v332 = vunpack.c.l.b16 %v150
      %v333 = vunpack.c.h.b16 %v150
      %v334 = vunpack.c.l.b16 %v151
      %v335 = vunpack.c.h.b16 %v151
      %v336 = vunpack.c.l.b16 %v152
      %v337 = vunpack.c.h.b16 %v152
      %v338 = vunpack.c.l.b16 %v153
      %v339 = vunpack.c.h.b16 %v153
      %v340 = vunpack.c.l.b16 %v154
      %v341 = vunpack.c.h.b16 %v154
      %v342 = vunpack.c.l.b16 %v155
      %v343 = vunpack.c.h.b16 %v155
      %v344 = vunpack.c.l.b16 %v156
      %v345 = vunpack.c.h.b16 %v156
      %v346 = vunpack.c.l.b16 %v157
      %v347 = vunpack.c.h.b16 %v157
      %v348 = vunpack.c.l.b16 %v158
      %v349 = vunpack.c.h.b16 %v158
      %v350 = vunpack.c.l.b16 %v159
      %v351 = vunpack.c.h.b16 %v159
      %v352 = vunpack.c.l.b16 %v160
      %v353 = vunpack.c.h.b16 %v160
      %v354 = vunpack.c.l.b16 %v161
      %v355 = vunpack.c.h.b16 %v161
      %v356 = vunpack.c.l.b16 %v162
      %v357 = vunpack.c.h.b16 %v162
      %v358 = vunpack.c.l.b16 %v163
      %v359 = vunpack.c.h.b16 %v163
      %v360 = vunpack.c.l.b16 %v164
      %v361 = vunpack.c.h.b16 %v164
      %v362 = vunpack.c.l.b16 %v165
      %v363 = vunpack.c.h.b16 %v165
      %v364 = vunpack.c.l.b16 %v166
      %v365 = vunpack.c.h.b16 %v166
      %v366 = vunpack.c.l.b16 %v167
      %v367 = vunpack.c.h.b16 %v167
      %v368 = vunpack.c.l.b16 %v168
      %v369 = vunpack.c.h.b16 %v168
      %v370 = vunpack.c.l.b16 %v169
      %v371 = vunpack.c.h.b16 %v169
      %v372 = vunpack.c.l.b16 %v170
      %v373 = vunpack.c.h.b16 %v170
      %v374 = vunpack.c.l.b16 %v171
      %v375 = vunpack.c.h.b16 %v171
      %v376 = vunpack.c.l.b16 %v172
      %v377 = vunpack.c.h.b16 %v172
      %v378 = vunpack.c.l.b16 %v173
      %v379 = vunpack.c.h.b16 %v173
      %v380 = vunpack.c.l.b16 %v174
      %v381 = vunpack.c.h.b16 %v174
      %v382 = vunpack.c.l.b16 %v175
      %v383 = vunpack.c.h.b16 %v175
      %v384 = vunpack.c.l.b16 %v176
      %v385 = vunpack.c.h.b16 %v176
      %v386 = vunpack.c.l.b16 %v177
      %v387 = vunpack.c.h.b16 %v177
      %v388 = vunpack.c.l.b16 %v178
      %v389 = vunpack.c.h.b16 %v178
      %v390 = vunpack.c.l.b16 %v179
      %v391 = vunpack.c.h.b16 %v179
      %v392 = vunpack.c.l.b16 %v180
      %v393 = vunpack.c.h.b16 %v180
      %v394 = vunpack.c.l.b16 %v181
      %v395 = vunpack.c.h.b16 %v181
      %v396 = vunpack.c.l.b16 %v182
      %v397 = vunpack.c.h.b16 %v182
      %v398 = vunpack.c.l.b16 %v183
      %v399 = vunpack.c.h.b16 %v183
      %v400 = vunpack.c.l.b16 %v184
      %v401 = vunpack.c.h.b16 %v184
      %v402 = vunpack.c.l.b16 %v185
      %v403 = vunpack.c.h.b16 %v185
      %v404 = vunpack.c.l.b16 %v186
      %v405 = vunpack.c.h.b16 %v186
      %v406 = vunpack.c.l.b16 %v187
      %v407 = vunpack.c.h.b16 %v187
      %v408 = vunpack.c.l.b16 %v188
      %v409 = vunpack.c.h.b16 %v188
      %v410 = vunpack.c.l.b16 %v189
      %v411 = vunpack.c.h.b16 %v189
      %v412 = vunpack.c.l.b16 %v190
      %v413 = vunpack.c.h.b16 %v190
      %v414 = vunpack.c.l.b16 %v191
      %v415 = vunpack.c.h.b16 %v191
      %v416 = vunpack.c.l.b16 %v192
      %v417 = vunpack.c.h.b16 %v192
      %v418 = vunpack.c.l.b16 %v193
      %v419 = vunpack.c.h.b16 %v193
      %v420 = vunpack.c.l.b16 %v194
      %v421 = vunpack.c.h.b16 %v194
      %v422 = vunpack.c.l.b16 %v195
      %v423 = vunpack.c.h.b16 %v195
      %v424 = vunpack.c.l.b16 %v196
      %v425 = vunpack.c.h.b16 %v196
      %v426 = vunpack.c.l.b16 %v197
      %v427 = vunpack.c.h.b16 %v197
      %v428 = vunpack.c.l.b16 %v198
      %v429 = vunpack.c.h.b16 %v198
      %v430 = vunpack.c.l.b16 %v199
      %v431 = vunpack.c.h.b16 %v199
      %v432 = vunpack.c.l.b16 %v200
      %v433 = vunpack.c.h.b16 %v200
      %v434 = vunpack.c.l.b16 %v201
      %v435 = vunpack.c.h.b16 %v201
      %v436 = vunpack.c.l.b16 %v202
      %v437 = vunpack.c.h.b16 %v202
      %v438 = vunpack.c.l.b16 %v203
      %v439 = vunpack.c.h.b16 %v203
      %v440 = vunpack.c.l.b16 %v204
      %v441 = vunpack.c.h.b16 %v204
      %v442 = vunpack.c.l.b16 %v205
      %v443 = vunpack.c.h.b16 %v205
      %v444 = vunpack.c.l.b16 %v206
      %v445 = vunpack.c.h.b16 %v206
      %v446 = vunpack.c.l.b16 %v207
      %v447 = vunpack.c.h.b16 %v207
      %v448 = vunpack.c.l.b16 %v208
      %v449 = vunpack.c.h.b16 %v208
      %v450 = vpack.c.b16 %v326, %v322
      %v451 = vpack.c.b16 %v327, %v323
      %v452 = vpack.c.b16 %v328, %v324
      %v453 = vpack.c.b16 %v329, %v325
      %v454 = vpack.c.b16 %v334, %v330
      %v455 = vpack.c.b16 %v335, %v331
      %v456 = vpack.c.b16 %v336, %v332
      %v457 = vpack.c.b16 %v337, %v333
      %v458 = vpack.c.b16 %v342, %v338
      %v459 = vpack.c.b16 %v343, %v339
      %v460 = vpack.c.b16 %v344, %v340
      %v461 = vpack.c.b16 %v345, %v341
      %v462 = vpack.c.b16 %v350, %v346
      %v463 = vpack.c.b16 %v351, %v347
      %v464 = vpack.c.b16 %v352, %v348
      %v465 = vpack.c.b16 %v353, %v349
      %v466 = vpack.c.b16 %v358, %v354
      %v467 = vpack.c.b16 %v359, %v355
      %v468 = vpack.c.b16 %v360, %v356
      %v469 = vpack.c.b16 %v361, %v357
      %v470 = vpack.c.b16 %v366, %v362
      %v471 = vpack.c.b16 %v367, %v363
      %v472 = vpack.c.b16 %v368, %v364
      %v473 = vpack.c.b16 %v369, %v365
      %v474 = vpack.c.b16 %v374, %v370
      %v475 = vpack.c.b16 %v375, %v371
      %v476 = vpack.c.b16 %v376, %v372
      %v477 = vpack.c.b16 %v377, %v373
      %v478 = vpack.c.b16 %v382, %v378
      %v479 = vpack.c.b16 %v383, %v379
      %v480 = vpack.c.b16 %v384, %v380
      %v481 = vpack.c.b16 %v385, %v381
      %v482 = vpack.c.b16 %v390, %v386
      %v483 = vpack.c.b16 %v391, %v387
      %v484 = vpack.c.b16 %v392, %v388
      %v485 = vpack.c.b16 %v393, %v389
      %v486 = vpack.c.b16 %v398, %v394
      %v487 = vpack.c.b16 %v399, %v395
      %v488 = vpack.c.b16 %v400, %v396
      %v489 = vpack.c.b16 %v401, %v397
      %v490 = vpack.c.b16 %v406, %v402
      %v491 = vpack.c.b16 %v407, %v403
      %v492 = vpack.c.b16 %v408, %v404
      %v493 = vpack.c.b16 %v409, %v405
      %v494 = vpack.c.b16 %v414, %v410
      %v495 = vpack.c.b16 %v415, %v411
      %v496 = vpack.c.b16 %v416, %v412
      %v497 = vpack.c.b16 %v417, %v413
      %v498 = vpack.c.b16 %v422, %v418
      %v499 = vpack.c.b16 %v423, %v419
      %v500 = vpack.c.b16 %v424, %v420
      %v501 = vpack.c.b16 %v425, %v421
      %v502 = vpack.c.b16 %v430, %v426
      %v503 = vpack.c.b16 %v431, %v427
      %v504 = vpack.c.b16 %v432, %v428
      %v505 = vpack.c.b16 %v433, %v429
      %v506 = vpack.c.b16 %v438, %v434
      %v507 = vpack.c.b16 %v439, %v435
      %v508 = vpack.c.b16 %v440, %v436
      %v509 = vpack.c.b16 %v441, %v437
      %v510 = vpack.c.b16 %v446, %v442
      %v511 = vpack.c.b16 %v447, %v443
      %v512 = vpack.c.b16 %v448, %v444
      %v513 = vpack.c.b16 %v449, %v445
      %v611 = vunpack.c.l.b16 %v209
      %v612 = vunpack.c.l.b16 %v210
      %v613 = vunpack.c.l.b16 %v211
      %v614 = vunpack.c.l.b16 %v212
      %v615 = vunpack.c.l.b16 %v213
      %v616 = vunpack.c.l.b16 %v214
      %v617 = vunpack.c.l.b16 %v215
      %v618 = vunpack.c.l.b16 %v216
      %v619 = vunpack.c.l.b16 %v217
      %v620 = vunpack.c.l.b16 %v218
      %v621 = vunpack.c.l.b16 %v219
      %v622 = vunpack.c.l.b16 %v220
      %v623 = vunpack.c.l.b16 %v221
      %v624 = vunpack.c.l.b16 %v222
      %v625 = vunpack.c.l.b16 %v223
      %v626 = vunpack.c.l.b16 %v224
      %v627 = vunpack.c.l.b16 %v225
      %v628 = vunpack.c.l.b16 %v226
      %v629 = vunpack.c.l.b16 %v227
      %v630 = vunpack.c.l.b16 %v228
      %v631 = vunpack.c.l.b16 %v229
      %v632 = vunpack.c.l.b16 %v230
      %v633 = vunpack.c.l.b16 %v231
      %v634 = vunpack.c.l.b16 %v232
      %v635 = vunpack.c.l.b16 %v233
      %v636 = vunpack.c.l.b16 %v234
      %v637 = vunpack.c.l.b16 %v235
      %v638 = vunpack.c.l.b16 %v236
      %v639 = vunpack.c.l.b16 %v237
      %v640 = vunpack.c.l.b16 %v238
      %v641 = vunpack.c.l.b16 %v239
      %v642 = vunpack.c.l.b16 %v240
      %v643 = vunpack.c.l.b16 %v241
      %v644 = vunpack.c.l.b16 %v242
      %v645 = vunpack.c.l.b16 %v243
      %v646 = vunpack.c.l.b16 %v244
      %v647 = vunpack.c.l.b16 %v245
      %v648 = vunpack.c.l.b16 %v246
      %v649 = vunpack.c.l.b16 %v247
      %v650 = vunpack.c.l.b16 %v248
      %v651 = vunpack.c.l.b16 %v249
      %v652 = vunpack.c.l.b16 %v250
      %v653 = vunpack.c.l.b16 %v251
      %v654 = vunpack.c.l.b16 %v252
      %v655 = vunpack.c.l.b16 %v253
      %v656 = vunpack.c.l.b16 %v254
      %v657 = vunpack.c.l.b16 %v255
      %v658 = vunpack.c.l.b16 %v256
      %v659 = vunpack.c.l.b16 %v257
      %v660 = vpack.c.b16 %v612, %v611
      %v661 = vpack.c.b16 %v614, %v613
      %v662 = vpack.c.b16 %v616, %v615
      %v663 = vpack.c.b16 %v618, %v617
      %v664 = vpack.c.b16 %v620, %v619
      %v665 = vpack.c.b16 %v622, %v621
      %v666 = vpack.c.b16 %v624, %v623
      %v667 = vpack.c.b16 %v626, %v625
      %v668 = vpack.c.b16 %v628, %v627
      %v669 = vpack.c.b16 %v630, %v629
      %v670 = vpack.c.b16 %v632, %v631
      %v671 = vpack.c.b16 %v634, %v633
      %v672 = vpack.c.b16 %v636, %v635
      %v673 = vpack.c.b16 %v638, %v637
      %v674 = vpack.c.b16 %v640, %v639
      %v675 = vpack.c.b16 %v642, %v641
      %v676 = vpack.c.b16 %v644, %v643
      %v677 = vpack.c.b16 %v646, %v645
      %v678 = vpack.c.b16 %v648, %v647
      %v679 = vpack.c.b16 %v650, %v649
      %v680 = vpack.c.b16 %v652, %v651
      %v681 = vpack.c.b16 %v654, %v653
      %v682 = vpack.c.b16 %v656, %v655
      %v683 = vpack.c.b16 %v658, %v657
      %v684 = vpack.c.b16 %v659, %v659
      %vm709 = vcmask 64512
      %v711 = vsel %vm709, %v453, 0
      %v714 = vsel %vm709, %v457, 0
      %v717 = vsel %vm709, %v461, 0
      %v720 = vsel %vm709, %v465, 0
      %v723 = vsel %vm709, %v469, 0
      %v726 = vsel %vm709, %v473, 0
      %v729 = vsel %vm709, %v477, 0
      %v732 = vsel %vm709, %v481, 0
      %v735 = vsel %vm709, %v485, 0
      %v738 = vsel %vm709, %v489, 0
      %v741 = vsel %vm709, %v493, 0
      %v744 = vsel %vm709, %v497, 0
      %v747 = vsel %vm709, %v501, 0
      %v750 = vsel %vm709, %v505, 0
      %v753 = vsel %vm709, %v509, 0
      %v756 = vsel %vm709, %v513, 0
      %vm758 = vcmask 1043456
      %v760 = vsel %vm758, %v684, 0
      %762 = vmatpush.bf16.msra.mxu0 %v667
      %763 = vmatpush.bf16.msra.mxu0 %v666
      %764 = vmatpush.bf16.msra.mxu0 %v665
      %765 = vmatpush.bf16.msra.mxu0 %v664
      %766 = vmatpush.bf16.msra.mxu0 %v663
      %767 = vmatpush.bf16.msra.mxu0 %v662
      %768 = vmatpush.bf16.msra.mxu0 %v661
      %769 = vmatpush.bf16.msra.mxu0 %v660
      %770 = vmatmul.bf16.gmra.mxu0 %v450
      %v771 = vpop.f32.mrf.mxu0
      %v772 = vadd.f32 0.0, %v771
      %v773 = vpop.f32.mrf.mxu0
      %v774 = vadd.f32 0.0, %v773
      %775 = vmatmul.bf16.gmra.mxu0 %v454
      %v776 = vpop.f32.mrf.mxu0
      %v777 = vadd.f32 0.0, %v776
      %v778 = vpop.f32.mrf.mxu0
      %v779 = vadd.f32 0.0, %v778
      %780 = vmatmul.bf16.gmra.mxu0 %v458
      %v781 = vpop.f32.mrf.mxu0
      %v782 = vadd.f32 0.0, %v781
      %v783 = vpop.f32.mrf.mxu0
      %v784 = vadd.f32 0.0, %v783
      %785 = vmatmul.bf16.gmra.mxu0 %v462
      %v786 = vpop.f32.mrf.mxu0
      %v787 = vadd.f32 0.0, %v786
      %v788 = vpop.f32.mrf.mxu0
      %v789 = vadd.f32 0.0, %v788
      %790 = vmatmul.bf16.gmra.mxu0 %v466
      %v791 = vpop.f32.mrf.mxu0
      %v792 = vadd.f32 0.0, %v791
      %v793 = vpop.f32.mrf.mxu0
      %v794 = vadd.f32 0.0, %v793
      %795 = vmatmul.bf16.gmra.mxu0 %v470
      %v796 = vpop.f32.mrf.mxu0
      %v797 = vadd.f32 0.0, %v796
      %v798 = vpop.f32.mrf.mxu0
      %v799 = vadd.f32 0.0, %v798
      %800 = vmatmul.bf16.gmra.mxu0 %v474
      %v801 = vpop.f32.mrf.mxu0
      %v802 = vadd.f32 0.0, %v801
      %v803 = vpop.f32.mrf.mxu0
      %v804 = vadd.f32 0.0, %v803
      %805 = vmatmul.bf16.gmra.mxu0 %v478
      %v806 = vpop.f32.mrf.mxu0
      %v807 = vadd.f32 0.0, %v806
      %v808 = vpop.f32.mrf.mxu0
      %v809 = vadd.f32 0.0, %v808
      %810 = vmatmul.bf16.gmra.mxu0 %v482
      %v811 = vpop.f32.mrf.mxu0
      %v812 = vadd.f32 0.0, %v811
      %v813 = vpop.f32.mrf.mxu0
      %v814 = vadd.f32 0.0, %v813
      %815 = vmatmul.bf16.gmra.mxu0 %v486
      %v816 = vpop.f32.mrf.mxu0
      %v817 = vadd.f32 0.0, %v816
      %v818 = vpop.f32.mrf.mxu0
      %v819 = vadd.f32 0.0, %v818
      %820 = vmatmul.bf16.gmra.mxu0 %v490
      %v821 = vpop.f32.mrf.mxu0
      %v822 = vadd.f32 0.0, %v821
      %v823 = vpop.f32.mrf.mxu0
      %v824 = vadd.f32 0.0, %v823
      %825 = vmatmul.bf16.gmra.mxu0 %v494
      %v826 = vpop.f32.mrf.mxu0
      %v827 = vadd.f32 0.0, %v826
      %v828 = vpop.f32.mrf.mxu0
      %v829 = vadd.f32 0.0, %v828
      %830 = vmatmul.bf16.gmra.mxu0 %v498
      %v831 = vpop.f32.mrf.mxu0
      %v832 = vadd.f32 0.0, %v831
      %v833 = vpop.f32.mrf.mxu0
      %v834 = vadd.f32 0.0, %v833
      %835 = vmatmul.bf16.gmra.mxu0 %v502
      %v836 = vpop.f32.mrf.mxu0
      %v837 = vadd.f32 0.0, %v836
      %v838 = vpop.f32.mrf.mxu0
      %v839 = vadd.f32 0.0, %v838
      %840 = vmatmul.bf16.gmra.mxu0 %v506
      %v841 = vpop.f32.mrf.mxu0
      %v842 = vadd.f32 0.0, %v841
      %v843 = vpop.f32.mrf.mxu0
      %v844 = vadd.f32 0.0, %v843
      %845 = vmatmul.bf16.gmra.mxu0 %v510
      %v846 = vpop.f32.mrf.mxu0
      %v847 = vadd.f32 0.0, %v846
      %v848 = vpop.f32.mrf.mxu0
      %v849 = vadd.f32 0.0, %v848
      %850 = vdwg.mxu0
      %851 = vmatpush.bf16.msra.mxu0 %v675
      %852 = vmatpush.bf16.msra.mxu0 %v674
      %853 = vmatpush.bf16.msra.mxu0 %v673
      %854 = vmatpush.bf16.msra.mxu0 %v672
      %855 = vmatpush.bf16.msra.mxu0 %v671
      %856 = vmatpush.bf16.msra.mxu0 %v670
      %857 = vmatpush.bf16.msra.mxu0 %v669
      %858 = vmatpush.bf16.msra.mxu0 %v668
      %859 = vmatmul.bf16.gmra.mxu0 %v451
      %v860 = vpop.f32.mrf.mxu0
      %v861 = vadd.f32 %v772, %v860
      %v862 = vpop.f32.mrf.mxu0
      %v863 = vadd.f32 %v774, %v862
      %864 = vmatmul.bf16.gmra.mxu0 %v455
      %v865 = vpop.f32.mrf.mxu0
      %v866 = vadd.f32 %v777, %v865
      %v867 = vpop.f32.mrf.mxu0
      %v868 = vadd.f32 %v779, %v867
      %869 = vmatmul.bf16.gmra.mxu0 %v459
      %v870 = vpop.f32.mrf.mxu0
      %v871 = vadd.f32 %v782, %v870
      %v872 = vpop.f32.mrf.mxu0
      %v873 = vadd.f32 %v784, %v872
      %874 = vmatmul.bf16.gmra.mxu0 %v463
      %v875 = vpop.f32.mrf.mxu0
      %v876 = vadd.f32 %v787, %v875
      %v877 = vpop.f32.mrf.mxu0
      %v878 = vadd.f32 %v789, %v877
      %879 = vmatmul.bf16.gmra.mxu0 %v467
      %v880 = vpop.f32.mrf.mxu0
      %v881 = vadd.f32 %v792, %v880
      %v882 = vpop.f32.mrf.mxu0
      %v883 = vadd.f32 %v794, %v882
      %884 = vmatmul.bf16.gmra.mxu0 %v471
      %v885 = vpop.f32.mrf.mxu0
      %v886 = vadd.f32 %v797, %v885
      %v887 = vpop.f32.mrf.mxu0
      %v888 = vadd.f32 %v799, %v887
      %889 = vmatmul.bf16.gmra.mxu0 %v475
      %v890 = vpop.f32.mrf.mxu0
      %v891 = vadd.f32 %v802, %v890
      %v892 = vpop.f32.mrf.mxu0
      %v893 = vadd.f32 %v804, %v892
      %894 = vmatmul.bf16.gmra.mxu0 %v479
      %v895 = vpop.f32.mrf.mxu0
      %v896 = vadd.f32 %v807, %v895
      %v897 = vpop.f32.mrf.mxu0
      %v898 = vadd.f32 %v809, %v897
      %899 = vmatmul.bf16.gmra.mxu0 %v483
      %v900 = vpop.f32.mrf.mxu0
      %v901 = vadd.f32 %v812, %v900
      %v902 = vpop.f32.mrf.mxu0
      %v903 = vadd.f32 %v814, %v902
      %904 = vmatmul.bf16.gmra.mxu0 %v487
      %v905 = vpop.f32.mrf.mxu0
      %v906 = vadd.f32 %v817, %v905
      %v907 = vpop.f32.mrf.mxu0
      %v908 = vadd.f32 %v819, %v907
      %909 = vmatmul.bf16.gmra.mxu0 %v491
      %v910 = vpop.f32.mrf.mxu0
      %v911 = vadd.f32 %v822, %v910
      %v912 = vpop.f32.mrf.mxu0
      %v913 = vadd.f32 %v824, %v912
      %914 = vmatmul.bf16.gmra.mxu0 %v495
      %v915 = vpop.f32.mrf.mxu0
      %v916 = vadd.f32 %v827, %v915
      %v917 = vpop.f32.mrf.mxu0
      %v918 = vadd.f32 %v829, %v917
      %919 = vmatmul.bf16.gmra.mxu0 %v499
      %v920 = vpop.f32.mrf.mxu0
      %v921 = vadd.f32 %v832, %v920
      %v922 = vpop.f32.mrf.mxu0
      %v923 = vadd.f32 %v834, %v922
      %924 = vmatmul.bf16.gmra.mxu0 %v503
      %v925 = vpop.f32.mrf.mxu0
      %v926 = vadd.f32 %v837, %v925
      %v927 = vpop.f32.mrf.mxu0
      %v928 = vadd.f32 %v839, %v927
      %929 = vmatmul.bf16.gmra.mxu0 %v507
      %v930 = vpop.f32.mrf.mxu0
      %v931 = vadd.f32 %v842, %v930
      %v932 = vpop.f32.mrf.mxu0
      %v933 = vadd.f32 %v844, %v932
      %934 = vmatmul.bf16.gmra.mxu0 %v511
      %v935 = vpop.f32.mrf.mxu0
      %v936 = vadd.f32 %v847, %v935
      %v937 = vpop.f32.mrf.mxu0
      %v938 = vadd.f32 %v849, %v937
      %939 = vdwg.mxu0
      %940 = vmatpush.bf16.msra.mxu0 %v683
      %941 = vmatpush.bf16.msra.mxu0 %v682
      %942 = vmatpush.bf16.msra.mxu0 %v681
      %943 = vmatpush.bf16.msra.mxu0 %v680
      %944 = vmatpush.bf16.msra.mxu0 %v679
      %945 = vmatpush.bf16.msra.mxu0 %v678
      %946 = vmatpush.bf16.msra.mxu0 %v677
      %947 = vmatpush.bf16.msra.mxu0 %v676
      %948 = vmatmul.bf16.gmra.mxu0 %v452
      %v949 = vpop.f32.mrf.mxu0
      %v950 = vadd.f32 %v861, %v949
      %v951 = vpop.f32.mrf.mxu0
      %v952 = vadd.f32 %v863, %v951
      %953 = vmatmul.bf16.gmra.mxu0 %v456
      %v954 = vpop.f32.mrf.mxu0
      %v955 = vadd.f32 %v866, %v954
      %v956 = vpop.f32.mrf.mxu0
      %v957 = vadd.f32 %v868, %v956
      %958 = vmatmul.bf16.gmra.mxu0 %v460
      %v959 = vpop.f32.mrf.mxu0
      %v960 = vadd.f32 %v871, %v959
      %v961 = vpop.f32.mrf.mxu0
      %v962 = vadd.f32 %v873, %v961
      %963 = vmatmul.bf16.gmra.mxu0 %v464
      %v964 = vpop.f32.mrf.mxu0
      %v965 = vadd.f32 %v876, %v964
      %v966 = vpop.f32.mrf.mxu0
      %v967 = vadd.f32 %v878, %v966
      %968 = vmatmul.bf16.gmra.mxu0 %v468
      %v969 = vpop.f32.mrf.mxu0
      %v970 = vadd.f32 %v881, %v969
      %v971 = vpop.f32.mrf.mxu0
      %v972 = vadd.f32 %v883, %v971
      %973 = vmatmul.bf16.gmra.mxu0 %v472
      %v974 = vpop.f32.mrf.mxu0
      %v975 = vadd.f32 %v886, %v974
      %v976 = vpop.f32.mrf.mxu0
      %v977 = vadd.f32 %v888, %v976
      %978 = vmatmul.bf16.gmra.mxu0 %v476
      %v979 = vpop.f32.mrf.mxu0
      %v980 = vadd.f32 %v891, %v979
      %v981 = vpop.f32.mrf.mxu0
      %v982 = vadd.f32 %v893, %v981
      %983 = vmatmul.bf16.gmra.mxu0 %v480
      %v984 = vpop.f32.mrf.mxu0
      %v985 = vadd.f32 %v896, %v984
      %v986 = vpop.f32.mrf.mxu0
      %v987 = vadd.f32 %v898, %v986
      %988 = vmatmul.bf16.gmra.mxu0 %v484
      %v989 = vpop.f32.mrf.mxu0
      %v990 = vadd.f32 %v901, %v989
      %v991 = vpop.f32.mrf.mxu0
      %v992 = vadd.f32 %v903, %v991
      %993 = vmatmul.bf16.gmra.mxu0 %v488
      %v994 = vpop.f32.mrf.mxu0
      %v995 = vadd.f32 %v906, %v994
      %v996 = vpop.f32.mrf.mxu0
      %v997 = vadd.f32 %v908, %v996
      %998 = vmatmul.bf16.gmra.mxu0 %v492
      %v999 = vpop.f32.mrf.mxu0
      %v1000 = vadd.f32 %v911, %v999
      %v1001 = vpop.f32.mrf.mxu0
      %v1002 = vadd.f32 %v913, %v1001
      %1003 = vmatmul.bf16.gmra.mxu0 %v496
      %v1004 = vpop.f32.mrf.mxu0
      %v1005 = vadd.f32 %v916, %v1004
      %v1006 = vpop.f32.mrf.mxu0
      %v1007 = vadd.f32 %v918, %v1006
      %1008 = vmatmul.bf16.gmra.mxu0 %v500
      %v1009 = vpop.f32.mrf.mxu0
      %v1010 = vadd.f32 %v921, %v1009
      %v1011 = vpop.f32.mrf.mxu0
      %v1012 = vadd.f32 %v923, %v1011
      %1013 = vmatmul.bf16.gmra.mxu0 %v504
      %v1014 = vpop.f32.mrf.mxu0
      %v1015 = vadd.f32 %v926, %v1014
      %v1016 = vpop.f32.mrf.mxu0
      %v1017 = vadd.f32 %v928, %v1016
      %1018 = vmatmul.bf16.gmra.mxu0 %v508
      %v1019 = vpop.f32.mrf.mxu0
      %v1020 = vadd.f32 %v931, %v1019
      %v1021 = vpop.f32.mrf.mxu0
      %v1022 = vadd.f32 %v933, %v1021
      %1023 = vmatmul.bf16.gmra.mxu0 %v512
      %v1024 = vpop.f32.mrf.mxu0
      %v1025 = vadd.f32 %v936, %v1024
      %v1026 = vpop.f32.mrf.mxu0
      %v1027 = vadd.f32 %v938, %v1026
      %1028 = vdwg.mxu0
      %1029 = vmatpush.bf16.msra.mxu0 0
      %1030 = vmatpush.bf16.msra.mxu0 0
      %1031 = vmatpush.bf16.msra.mxu0 0
      %1032 = vmatpush.bf16.msra.mxu0 0
      %1033 = vmatpush.bf16.msra.mxu0 0
      %1034 = vmatpush.bf16.msra.mxu0 0
      %1035 = vmatpush.bf16.msra.mxu0 0
      %1036 = vmatpush.bf16.msra.mxu0 %v760
      %1037 = vmatmul.bf16.gmra.mxu0 %v711
      %v1038 = vpop.f32.mrf.mxu0
      %v1039 = vadd.f32 %v950, %v1038
      %v1040 = vpop.f32.mrf.mxu0
      %v1041 = vadd.f32 %v952, %v1040
      %1042 = vmatmul.bf16.gmra.mxu0 %v714
      %v1043 = vpop.f32.mrf.mxu0
      %v1044 = vadd.f32 %v955, %v1043
      %v1045 = vpop.f32.mrf.mxu0
      %v1046 = vadd.f32 %v957, %v1045
      %1047 = vmatmul.bf16.gmra.mxu0 %v717
      %v1048 = vpop.f32.mrf.mxu0
      %v1049 = vadd.f32 %v960, %v1048
      %v1050 = vpop.f32.mrf.mxu0
      %v1051 = vadd.f32 %v962, %v1050
      %1052 = vmatmul.bf16.gmra.mxu0 %v720
      %v1053 = vpop.f32.mrf.mxu0
      %v1054 = vadd.f32 %v965, %v1053
      %v1055 = vpop.f32.mrf.mxu0
      %v1056 = vadd.f32 %v967, %v1055
      %1057 = vmatmul.bf16.gmra.mxu0 %v723
      %v1058 = vpop.f32.mrf.mxu0
      %v1059 = vadd.f32 %v970, %v1058
      %v1060 = vpop.f32.mrf.mxu0
      %v1061 = vadd.f32 %v972, %v1060
      %1062 = vmatmul.bf16.gmra.mxu0 %v726
      %v1063 = vpop.f32.mrf.mxu0
      %v1064 = vadd.f32 %v975, %v1063
      %v1065 = vpop.f32.mrf.mxu0
      %v1066 = vadd.f32 %v977, %v1065
      %1067 = vmatmul.bf16.gmra.mxu0 %v729
      %v1068 = vpop.f32.mrf.mxu0
      %v1069 = vadd.f32 %v980, %v1068
      %v1070 = vpop.f32.mrf.mxu0
      %v1071 = vadd.f32 %v982, %v1070
      %1072 = vmatmul.bf16.gmra.mxu0 %v732
      %v1073 = vpop.f32.mrf.mxu0
      %v1074 = vadd.f32 %v985, %v1073
      %v1075 = vpop.f32.mrf.mxu0
      %v1076 = vadd.f32 %v987, %v1075
      %1077 = vmatmul.bf16.gmra.mxu0 %v735
      %v1078 = vpop.f32.mrf.mxu0
      %v1079 = vadd.f32 %v990, %v1078
      %v1080 = vpop.f32.mrf.mxu0
      %v1081 = vadd.f32 %v992, %v1080
      %1082 = vmatmul.bf16.gmra.mxu0 %v738
      %v1083 = vpop.f32.mrf.mxu0
      %v1084 = vadd.f32 %v995, %v1083
      %v1085 = vpop.f32.mrf.mxu0
      %v1086 = vadd.f32 %v997, %v1085
      %1087 = vmatmul.bf16.gmra.mxu0 %v741
      %v1088 = vpop.f32.mrf.mxu0
      %v1089 = vadd.f32 %v1000, %v1088
      %v1090 = vpop.f32.mrf.mxu0
      %v1091 = vadd.f32 %v1002, %v1090
      %1092 = vmatmul.bf16.gmra.mxu0 %v744
      %v1093 = vpop.f32.mrf.mxu0
      %v1094 = vadd.f32 %v1005, %v1093
      %v1095 = vpop.f32.mrf.mxu0
      %v1096 = vadd.f32 %v1007, %v1095
      %1097 = vmatmul.bf16.gmra.mxu0 %v747
      %v1098 = vpop.f32.mrf.mxu0
      %v1099 = vadd.f32 %v1010, %v1098
      %v1100 = vpop.f32.mrf.mxu0
      %v1101 = vadd.f32 %v1012, %v1100
      %1102 = vmatmul.bf16.gmra.mxu0 %v750
      %v1103 = vpop.f32.mrf.mxu0
      %v1104 = vadd.f32 %v1015, %v1103
      %v1105 = vpop.f32.mrf.mxu0
      %v1106 = vadd.f32 %v1017, %v1105
      %1107 = vmatmul.bf16.gmra.mxu0 %v753
      %v1108 = vpop.f32.mrf.mxu0
      %v1109 = vadd.f32 %v1020, %v1108
      %v1110 = vpop.f32.mrf.mxu0
      %v1111 = vadd.f32 %v1022, %v1110
      %1112 = vmatmul.bf16.gmra.mxu0 %v756
      %v1113 = vpop.f32.mrf.mxu0
      %v1114 = vadd.f32 %v1025, %v1113
      %v1115 = vpop.f32.mrf.mxu0
      %v1116 = vadd.f32 %v1027, %v1115
      %1117 = vdwg.mxu0
      %v1118 = vtanh.pop %v1039
      %v1119 = vtanh.pop %v1041
      %v1120 = vtanh.pop %v1044
      %v1121 = vtanh.pop %v1046
      %v1122 = vtanh.pop %v1049
      %v1123 = vtanh.pop %v1051
      %v1124 = vtanh.pop %v1054
      %v1125 = vtanh.pop %v1056
      %v1126 = vtanh.pop %v1059
      %v1127 = vtanh.pop %v1061
      %v1128 = vtanh.pop %v1064
      %v1129 = vtanh.pop %v1066
      %v1130 = vtanh.pop %v1069
      %v1131 = vtanh.pop %v1071
      %v1132 = vtanh.pop %v1074
      %v1133 = vtanh.pop %v1076
      %v1134 = vtanh.pop %v1079
      %v1135 = vtanh.pop %v1081
      %v1136 = vtanh.pop %v1084
      %v1137 = vtanh.pop %v1086
      %v1138 = vtanh.pop %v1089
      %v1139 = vtanh.pop %v1091
      %v1140 = vtanh.pop %v1094
      %v1141 = vtanh.pop %v1096
      %v1142 = vtanh.pop %v1099
      %v1143 = vtanh.pop %v1101
      %v1144 = vtanh.pop %v1104
      %v1145 = vtanh.pop %v1106
      %v1146 = vtanh.pop %v1109
      %v1147 = vtanh.pop %v1111
      %v1148 = vtanh.pop %v1114
      %v1149 = vtanh.pop %v1116
      %vm1150 = vcmask 23552
      %1151 = vst.msk [vmem:[%s143] sm:$0xff] %vm1150, %v1118
      %1152 = vst.msk [vmem:[%s143 + $0x8] sm:$0xff] %vm1150, %v1119
      %1153 = vst.msk [vmem:[%s143 + $0x10] sm:$0xff] %vm1150, %v1120
      %1154 = vst.msk [vmem:[%s143 + $0x18] sm:$0xff] %vm1150, %v1121
      %1155 = vst.msk [vmem:[%s143 + $0x20] sm:$0xff] %vm1150, %v1122
      %1156 = vst.msk [vmem:[%s143 + $0x28] sm:$0xff] %vm1150, %v1123
      %1157 = vst.msk [vmem:[%s143 + $0x30] sm:$0xff] %vm1150, %v1124
      %1158 = vst.msk [vmem:[%s143 + $0x38] sm:$0xff] %vm1150, %v1125
      %1159 = vst.msk [vmem:[%s143 + $0x40] sm:$0xff] %vm1150, %v1126
      %1160 = vst.msk [vmem:[%s143 + $0x48] sm:$0xff] %vm1150, %v1127
      %1161 = vst.msk [vmem:[%s143 + $0x50] sm:$0xff] %vm1150, %v1128
      %1162 = vst.msk [vmem:[%s143 + $0x58] sm:$0xff] %vm1150, %v1129
      %1163 = vst.msk [vmem:[%s143 + $0x60] sm:$0xff] %vm1150, %v1130
      %1164 = vst.msk [vmem:[%s143 + $0x68] sm:$0xff] %vm1150, %v1131
      %1165 = vst.msk [vmem:[%s143 + $0x70] sm:$0xff] %vm1150, %v1132
      %1166 = vst.msk [vmem:[%s143 + $0x78] sm:$0xff] %vm1150, %v1133
      %1167 = vst.msk [vmem:[%s143 + $0x80] sm:$0xff] %vm1150, %v1134
      %1168 = vst.msk [vmem:[%s143 + $0x88] sm:$0xff] %vm1150, %v1135
      %1169 = vst.msk [vmem:[%s143 + $0x90] sm:$0xff] %vm1150, %v1136
      %1170 = vst.msk [vmem:[%s143 + $0x98] sm:$0xff] %vm1150, %v1137
      %1171 = vst.msk [vmem:[%s143 + $0xa0] sm:$0xff] %vm1150, %v1138
      %1172 = vst.msk [vmem:[%s143 + $0xa8] sm:$0xff] %vm1150, %v1139
      %1173 = vst.msk [vmem:[%s143 + $0xb0] sm:$0xff] %vm1150, %v1140
      %1174 = vst.msk [vmem:[%s143 + $0xb8] sm:$0xff] %vm1150, %v1141
      %1175 = vst.msk [vmem:[%s143 + $0xc0] sm:$0xff] %vm1150, %v1142
      %1176 = vst.msk [vmem:[%s143 + $0xc8] sm:$0xff] %vm1150, %v1143
      %1177 = vst.msk [vmem:[%s143 + $0xd0] sm:$0xff] %vm1150, %v1144
      %1178 = vst.msk [vmem:[%s143 + $0xd8] sm:$0xff] %vm1150, %v1145
      %1179 = vst.msk [vmem:[%s143 + $0xe0] sm:$0xff] %vm1150, %v1146
      %1180 = vst.msk [vmem:[%s143 + $0xe8] sm:$0xff] %vm1150, %v1147
      %1181 = vst.msk [vmem:[%s143 + $0xf0] sm:$0xff] %vm1150, %v1148
      %1182 = vst.msk [vmem:[%s143 + $0xf8] sm:$0xff] %vm1150, %v1149
      %p1183 = scmp.lt.s32.totalorder %s13, 1
      %s1184 = scalar_select %p1183, %s13, 1
      %s1185 = smul.addr %s1184, 32
      %s1186 = smul.addr %s1185, 8
      %s1187 = scalar_lea.vmem %s2, %s1186
      // Predicated region
      $region29: #{generator_forward.19} parent=27 // pred_check
        %p1188 = pneg %p78
      $region30: #{generator_forward.19} parent=27 // pred_check_branch
        %1190 = sbr.rel (%p1188) target = $region32
      $region31: #{generator_forward.19} parent=27 // pred_region
        _
      $region32: #{generator_forward.19} parent=27 // pred_fallthru
        _
    $region28: #{generator_forward.19} parent=5 // pred_fallthru
      _
    %p1191 = scmp.le.s32.totalorder 2, %s8
    // Predicated region
    $region33: #{generator_forward.19} parent=5 // pred_check
      %p1192 = pneg %p1191
    $region34: #{generator_forward.19} parent=5 // pred_check_branch
      %1194 = sbr.rel (%p1192) target = $region36
    $region35: #{generator_forward.19} parent=5 // pred_region
      %s1195 = ssub.s32 %s8, 2
      // Predicated region
      $region37: #{generator_forward.19} parent=35 // pred_check
        %p1196 = pneg %p84
      $region38: #{generator_forward.19} parent=35 // pred_check_branch
        %1198 = sbr.rel (%p1196) target = $region40
      $region39: #{generator_forward.19} parent=35 // pred_region
        %p1199 = scmp.lt.s32.totalorder %s14, 1
        %s1200 = scalar_select %p1199, %s14, 1
        %s1201 = smul.addr %s1200, 32
        %s1202 = smul.addr %s1201, 8
        %s1203 = scalar_lea.vmem %s2, %s1202
      $region40: #{generator_forward.19} parent=35 // pred_fallthru
        _
    $region36: #{generator_forward.19} parent=5 // pred_fallthru
      _
  $region6: #{generator_forward.19} parent=0 // loop_footer
    %s12 = sadd.s32 1, %s8
  $region7: #{generator_forward.19} parent=0 // loop_footer_branch
    %7 = sbr.rel target = $region3
  $region8: #{generator_forward.19} parent=0 // loop_exit
    _

</llo_original>
